<compile_context>
chip_gen: v5e
topology: v5e:2x2
jax: 0.10.0
libtpu: 0.0.40
codegen_flags: <defaults>
</compile_context>

<pallas_src>
import functools
from math import ceil

import jax
import jax.numpy as jnp
from jax.experimental import pallas as pl
from jax.experimental.pallas import tpu as pltpu

BN_EPS = 1e-5                    # nn.BatchNorm2d default eps
LEAKY_ALPHA = 0.1                # nn.LeakyReLU(0.1)
LANE = 128                       # TPU lane width; channels are zero-padded to a multiple of this


def _round_up(v, m):
    return ((v + m - 1) // m) * m


@functools.lru_cache(maxsize=None)
def _vmem_params():
    """(scoped vmem_limit_bytes, max per-image f32 tile elements) -- generation aware."""
    try:
        cap = pltpu.get_tpu_info().vmem_capacity_bytes
    except Exception:
        cap = None
    if cap is not None and cap >= 100 * 1024 * 1024:
        return 64 * 1024 * 1024, 8192      # v5e / v6e: 128 MiB physical VMEM
    if cap is not None:
        return 40 * 1024 * 1024, 4096      # v7x-class: 64 MiB physical VMEM
    return 32 * 1024 * 1024, 4096          # unknown backend: stay conservative


# ---------------------------------------------------------------------------
# In-kernel helpers
# ---------------------------------------------------------------------------
def _pool_kxk(z, ph, pw, s):
    """s x s max pool (stride s) over the leading ph*s rows / pw*s cols of z (nb, H, W, C).

    Width is pooled with one sublane reshape (single relayout instead of s strided slices);
    height is pooled with cheap major-dim strided slices.
    """
    nb, hh, _, c = z.shape
    zr = z[:, :, : pw * s, :].reshape(nb * hh, pw, s, c)
    zw = zr[:, :, 0, :]
    for p in range(1, s):
        zw = jnp.maximum(zw, zr[:, :, p, :])
    zw = zw.reshape(nb, hh, pw, c)
    acc = None
    for d in range(s):
        v = jax.lax.slice(zw, (0, d, 0, 0), (nb, d + (ph - 1) * s + 1, pw, c), (1, s, 1, 1))
        acc = v if acc is None else jnp.maximum(acc, v)
    return acc


# ---------------------------------------------------------------------------
# Kernels
# ---------------------------------------------------------------------------
def _conv_stats_kernel(x_ref, w_ref, y_ref, stats_ref, *pad_scratch,
                       k, stride, pad, th, wo):
    """Phase 1: direct conv (k accumulated MXU matmuls, width taps folded into K) + BN stats.

    x_ref:     (nb, H, W, Cp)     bf16 unpadded image block (resident across the row-block axis)
    w_ref:     (k, k*Cp, Cop)     bf16 weights, width taps folded into the contraction dim
    y_ref:     (nb, th, wo, Cop)  bf16 conv output tile (pre-BN)
    stats_ref: (1, 1, 2, Cop)     f32 [sum, sum_sq] over this tile (from the f32 accumulator)
    pad_scratch (only when pad > 0): (nb, Hp, Wp, Cp) bf16 VMEM scratch for the padded image
    """
    nb, h, w, cp = x_ref.shape
    cop = w_ref.shape[-1]
    j = pl.program_id(1)
    ext = (th - 1) * stride + k
    row0 = j * (th * stride)

    if pad > 0:
        # Spatial zero-padding happens here in VMEM: no HBM round trip for a padded copy.
        xp_ref = pad_scratch[0]
        xp_ref[...] = jnp.zeros_like(xp_ref)
        xp_ref[:, pad:pad + h, pad:pad + w, :] = x_ref[...]
        slab = xp_ref[:, pl.ds(row0, ext), :, :]
    else:
        slab = x_ref[:, pl.ds(row0, ext), :, :]
    if stride > 1:
        # Sublane-strided slicing of packed bf16 is the riskiest relayout; a single f32 copy of
        # the slab is cheaper than k*k per-tap casts when k > stride.
        slab = slab.astype(jnp.float32)

    m = nb * th * wo
    acc = jnp.zeros((m, cop), jnp.float32)
    for di in range(k):
        parts = []
        for dj in range(k):
            parts.append(jax.lax.slice(
                slab,
                (0, di, dj, 0),
                (nb, di + (th - 1) * stride + 1, dj + (wo - 1) * stride + 1, cp),
                (1, stride, stride, 1)))                       # (nb, th, wo, Cp)
        op = jnp.concatenate(parts, axis=-1) if k > 1 else parts[0]   # (nb, th, wo, k*Cp)
        op = op.reshape(m, k * cp).astype(jnp.bfloat16)
        acc = acc + jnp.dot(op, w_ref[di], preferred_element_type=jnp.float32)

    y_ref[...] = acc.reshape(nb, th, wo, cop).astype(y_ref.dtype)
    s1 = jnp.sum(acc, axis=0, keepdims=True)                   # (1, Cop)
    s2 = jnp.sum(acc * acc, axis=0, keepdims=True)             # (1, Cop)
    stats_ref[...] = jnp.concatenate([s1, s2], axis=0).reshape(1, 1, 2, cop)


def _bn_act_pool_kernel(y_ref, scale_ref, bias_ref, o_ref, *, pool_s, alpha):
    """Phase 2: z = y*scale + bias (BN folded to one FMA), LeakyReLU, optional fused s x s MaxPool."""
    _, _, _, c = y_ref.shape
    z = (y_ref[...].astype(jnp.float32) * scale_ref[...].reshape(1, 1, 1, c)
         + bias_ref[...].reshape(1, 1, 1, c))
    z = jnp.where(z > 0, z, alpha * z)
    if pool_s == 1:
        o_ref[...] = z.astype(o_ref.dtype)
        return
    tho, ow2 = o_ref.shape[1], o_ref.shape[2]
    o_ref[...] = _pool_kxk(z, tho, ow2, pool_s).astype(o_ref.dtype)


def _maxpool_tiled_kernel(x_ref, o_ref, *, s):
    """Row-tiled MaxPool2d with k == s: pools directly in bf16 (no f32 upcast)."""
    _, tr, ow, _ = o_ref.shape
    o_ref[...] = _pool_kxk(x_ref[...], tr, ow, s).astype(o_ref.dtype)


def _maxpool_general_kernel(x_ref, o_ref, *, k, s):
    """Fallback MaxPool2d (k != s, overlapping windows): f32 strided taps on a whole-image block."""
    x = x_ref[...].astype(jnp.float32)
    nb, oh, ow, c = o_ref.shape
    acc = None
    for di in range(k):
        for dj in range(k):
            v = jax.lax.slice(
                x, (0, di, dj, 0),
                (nb, di + (oh - 1) * s + 1, dj + (ow - 1) * s + 1, c),
                (1, s, s, 1))
            acc = v if acc is None else jnp.maximum(acc, v)
    o_ref[...] = acc.astype(o_ref.dtype)


# ---------------------------------------------------------------------------
# Layer wrappers (pallas_call plumbing)
# ---------------------------------------------------------------------------
def _pick_row_tile(ho, wo, multiple, cap_elems):
    """Largest divisor of ho that is a multiple of `multiple`, with th*wo capped for VMEM."""
    cap = max(multiple, min(ho, max(8, cap_elems // max(wo, 1))))
    for t in range(cap, 0, -1):
        if ho % t == 0 and t % multiple == 0:
            return t
    # TODO(synk): no divisor of ho is a multiple of the pool stride -> whole-image row tile;
    #             a remainder-block path would avoid the VMEM blow-up for very large images.
    return ho


def _pick_batch_block(n, m_per_image, bytes_per_image, vmem_limit, target_m=2048):
    """Largest divisor of n that folds small feature maps into the matmul M dim, VMEM-bounded."""
    byte_cap = max(1, (vmem_limit // 8) // max(bytes_per_image, 1))
    cap = max(1, min(n, byte_cap, max(1, target_m // max(m_per_image, 1))))
    nb = 1
    for d in range(1, cap + 1):
        if n % d == 0:
            nb = d
    return nb


def _conv_layer(x, p, pool):
    """x: (N, H, W, Cp) bf16 -> (N, Ho', Wo', Cop) bf16 (MaxPool fused when `pool` is not None)."""
    n, h, w, cp = x.shape
    k, s, pad = p['k'], p['stride'], p['pad']
    cop = p['w_fold'].shape[-1]
    hp, wp = h + 2 * pad, w + 2 * pad
    ho = (hp - k) // s + 1
    wo = (wp - k) // s + 1
    ps = pool[1] if pool is not None else 1

    vmem_limit, tile_cap = _vmem_params()
    th = _pick_row_tile(ho, wo, ps, tile_cap)
    g = ho // th
    img_bytes = (h * w + hp * wp) * cp * 2 + th * wo * cop * 6     # rough per-image VMEM footprint
    nb = _pick_batch_block(n, th * wo, img_bytes, vmem_limit)
    gb = n // nb
    # TODO(synk): images too large to keep VMEM-resident per block still need a manual row-slab
    #             DMA pipeline (memory_space=pl.ANY + pltpu.make_async_copy); matters most on v7x.

    scratch = [pltpu.VMEM((nb, hp, wp, cp), jnp.bfloat16)] if pad > 0 else []

    # ---- phase 1: conv + per-block BN partial stats (fully parallel grid) ----
    y, stats = pl.pallas_call(
        functools.partial(_conv_stats_kernel, k=k, stride=s, pad=pad, th=th, wo=wo),
        grid=(gb, g),
        in_specs=[
            pl.BlockSpec((nb, h, w, cp), lambda i, j: (i, 0, 0, 0)),     # image block, row-resident
            pl.BlockSpec((k, k * cp, cop), lambda i, j: (0, 0, 0)),      # folded weights resident
        ],
        out_specs=[
            pl.BlockSpec((nb, th, wo, cop), lambda i, j: (i, j, 0, 0)),
            pl.BlockSpec((1, 1, 2, cop), lambda i, j: (i, j, 0, 0)),
        ],
        out_shape=[
            jax.ShapeDtypeStruct((n, ho, wo, cop), jnp.bfloat16),        # bf16 halves the HBM y traffic
            jax.ShapeDtypeStruct((gb, g, 2, cop), jnp.float32),
        ],
        scratch_shapes=scratch,
        compiler_params=pltpu.CompilerParams(
            dimension_semantics=("parallel", "parallel"),
            vmem_limit_bytes=vmem_limit),
        cost_estimate=pl.CostEstimate(
            flops=2 * n * ho * wo * k * k * cp * cop,
            transcendentals=0,
            bytes_accessed=(n * h * w * cp * 2 + k * k * cp * cop * 2
                            + n * ho * wo * cop * 2 + gb * g * 2 * cop * 4)),
    )(x, p['w_fold'])

    # ---- finalize global BN statistics (tiny per-channel vectors, plain JAX) ----
    m = n * ho * wo
    tot = jnp.sum(stats, axis=(0, 1))                          # (2, Cop)
    mean = tot[0] / m
    # TODO(synk): E[x^2]-E[x]^2 in f32 can lose precision if |mean| >> std after training; a
    #             shifted/Welford-style combine of the per-block stats would be safer.
    var = jnp.maximum(tot[1] / m - mean * mean, 0.0)
    scale = p['gamma_pad'] * jax.lax.rsqrt(var + BN_EPS)
    bias = p['beta_pad'] - mean * scale

    # ---- phase 2: BN epilogue + LeakyReLU (+ fused MaxPool) ----
    if pool is None:
        oh2, ow2, tho = ho, wo, th
    else:
        oh2 = (ho - ps) // ps + 1
        ow2 = (wo - ps) // ps + 1
        tho = th // ps

    out = pl.pallas_call(
        functools.partial(_bn_act_pool_kernel, pool_s=ps, alpha=LEAKY_ALPHA),
        grid=(gb, g),
        in_specs=[
            pl.BlockSpec((nb, th, wo, cop), lambda i, j: (i, j, 0, 0)),
            pl.BlockSpec((1, cop), lambda i, j: (0, 0)),               # scale resident
            pl.BlockSpec((1, cop), lambda i, j: (0, 0)),               # bias resident
        ],
        out_specs=pl.BlockSpec((nb, tho, ow2, cop), lambda i, j: (i, j, 0, 0)),
        out_shape=jax.ShapeDtypeStruct((n, oh2, ow2, cop), jnp.bfloat16),
        compiler_params=pltpu.CompilerParams(
            dimension_semantics=("parallel", "parallel"),
            vmem_limit_bytes=vmem_limit),
        cost_estimate=pl.CostEstimate(
            flops=n * ho * wo * cop * (3 + ps * ps),
            transcendentals=0,
            bytes_accessed=(n * ho * wo * cop * 2 + n * oh2 * ow2 * cop * 2 + 2 * cop * 4)),
    )(y, scale.reshape(1, cop), bias.reshape(1, cop))
    return out


def _pool_layer(x, k, s):
    n, h, w, c = x.shape
    oh = (h - k) // s + 1
    ow = (w - k) // s + 1
    vmem_limit, tile_cap = _vmem_params()
    bytes_accessed = n * (h * w + oh * ow) * c * 2
    if k == s:
        tr = _pick_row_tile(oh, ow, 1, tile_cap)
        nb = _pick_batch_block(n, tr * ow, tr * s * w * c * 2 * 3, vmem_limit)
        return pl.pallas_call(
            functools.partial(_maxpool_tiled_kernel, s=s),
            grid=(n // nb, oh // tr),
            in_specs=[pl.BlockSpec((nb, tr * s, w, c), lambda i, j: (i, j, 0, 0))],
            out_specs=pl.BlockSpec((nb, tr, ow, c), lambda i, j: (i, j, 0, 0)),
            out_shape=jax.ShapeDtypeStruct((n, oh, ow, c), x.dtype),
            compiler_params=pltpu.CompilerParams(
                dimension_semantics=("parallel", "parallel"),
                vmem_limit_bytes=vmem_limit),
            cost_estimate=pl.CostEstimate(flops=n * oh * ow * c * k * k, transcendentals=0,
                                          bytes_accessed=bytes_accessed),
        )(x)
    nb = _pick_batch_block(n, oh * ow, h * w * c * 6, vmem_limit)
    return pl.pallas_call(
        functools.partial(_maxpool_general_kernel, k=k, s=s),
        grid=(n // nb,),
        in_specs=[pl.BlockSpec((nb, h, w, c), lambda i: (i, 0, 0, 0))],
        out_specs=pl.BlockSpec((nb, oh, ow, c), lambda i: (i, 0, 0, 0)),
        out_shape=jax.ShapeDtypeStruct((n, oh, ow, c), x.dtype),
        compiler_params=pltpu.CompilerParams(
            dimension_semantics=("parallel",),
            vmem_limit_bytes=vmem_limit),
        cost_estimate=pl.CostEstimate(flops=n * oh * ow * c * k * k, transcendentals=0,
                                      bytes_accessed=bytes_accessed),
    )(x)


# ---------------------------------------------------------------------------
# Module construction / forward (mirrors the PyTorch ConvModule)
# ---------------------------------------------------------------------------
def build_conv_module(in_channels, module_config, key):
    """Mirrors ConvModule.__init__: returns (layers, out_channels)."""
    layers = []

    def add_layer(in_ch, cfg, k_rng):
        if cfg[0] == 'c':
            ksize, out_ch = cfg[1:3]
            stride = 1 if len(cfg) == 3 else cfg[3]
            pad = ceil((ksize - stride) / 2)
            # kaiming_normal_(a=0.1, mode='fan_out', nonlinearity='leaky_relu'), bias=False
            fan_out = out_ch * ksize * ksize
            gain = (2.0 / (1.0 + LEAKY_ALPHA ** 2)) ** 0.5
            std = gain / (fan_out ** 0.5)
            w_oihw = jax.random.normal(k_rng, (out_ch, in_ch, ksize, ksize), jnp.float32) * std
            cin_p, cout_p = _round_up(in_ch, LANE), _round_up(out_ch, LANE)
            # OIHW -> (kh, kw, cin, cout), zero-pad channels to the lane width, fold the kw taps
            # into the contraction dim -> (kh, kw*cin_p, cout_p), bf16 for the MXU.
            w_hwio = jnp.transpose(w_oihw, (2, 3, 1, 0))
            w_pad = jnp.zeros((ksize, ksize, cin_p, cout_p), jnp.float32)
            w_pad = w_pad.at[:, :, :in_ch, :out_ch].set(w_hwio)
            w_fold = w_pad.reshape(ksize, ksize * cin_p, cout_p).astype(jnp.bfloat16)
            gamma_pad = jnp.zeros((cout_p,), jnp.float32).at[:out_ch].set(1.0)  # BN weight init
            beta_pad = jnp.zeros((cout_p,), jnp.float32)                        # BN bias init
            layers.append(('c', dict(w_fold=w_fold, gamma_pad=gamma_pad, beta_pad=beta_pad,
                                     w_oihw=w_oihw, k=ksize, stride=stride, pad=pad)))
            return out_ch
        elif cfg[0] == 'p':
            ksize, stride = cfg[1:]
            layers.append(('p', dict(k=ksize, stride=stride)))
            return in_ch
        raise ValueError(f"bad layer config {cfg}")

    for sm_config in module_config:
        if isinstance(sm_config, tuple):
            key, sub = jax.random.split(key)
            in_channels = add_layer(in_channels, sm_config, sub)
        elif isinstance(sm_config, list):
            sm_layers, r = sm_config
            for _ in range(r):
                for layer_config in sm_layers:
                    key, sub = jax.random.split(key)
                    in_channels = add_layer(in_channels, layer_config, sub)
        else:
            raise ValueError(f"bad module config {sm_config}")
    return layers, in_channels


def conv_module_forward(x_nchw, layers, out_channels):
    n, c, h, w = x_nchw.shape
    cp = _round_up(c, LANE)
    x = jnp.transpose(x_nchw, (0, 2, 3, 1))                        # NCHW -> NHWC
    x = jnp.pad(x, ((0, 0), (0, 0), (0, 0), (0, cp - c))).astype(jnp.bfloat16)
    i = 0
    while i < len(layers):
        kind, p = layers[i]
        if kind == 'c':
            pool = None
            if i + 1 < len(layers) and layers[i + 1][0] == 'p':
                pq = layers[i + 1][1]
                ho = (x.shape[1] + 2 * p['pad'] - p['k']) // p['stride'] + 1
                if pq['k'] == pq['stride'] and ho % pq['stride'] == 0:
                    pool = (pq['k'], pq['stride'])                 # fuse MaxPool into conv epilogue
            x = _conv_layer(x, p, pool)
            i += 2 if pool is not None else 1
        else:
            x = _pool_layer(x, p['k'], p['stride'])
            i += 1
    x = x[:, :, :, :out_channels]                                  # drop padded channels
    return jnp.transpose(x, (0, 3, 1, 2)).astype(jnp.float32)      # NHWC -> NCHW


# Pure-JAX/XLA reference (f32) used only to sanity-check numerics in __main__.
def reference_forward(x_nchw, layers):
    x = x_nchw
    for kind, p in layers:
        if kind == 'c':
            y = jax.lax.conv_general_dilated(
                x, p['w_oihw'], (p['stride'], p['stride']),
                [(p['pad'], p['pad']), (p['pad'], p['pad'])],
                dimension_numbers=('NCHW', 'OIHW', 'NCHW'))
            mean = jnp.mean(y, axis=(0, 2, 3), keepdims=True)
            var = jnp.mean((y - mean) ** 2, axis=(0, 2, 3), keepdims=True)
            z = (y - mean) * jax.lax.rsqrt(var + BN_EPS)           # gamma=1, beta=0 at init
            x = jnp.where(z > 0, z, LEAKY_ALPHA * z)
        else:
            x = jax.lax.reduce_window(
                x, -jnp.inf, jax.lax.max,
                (1, 1, p['k'], p['k']), (1, 1, p['stride'], p['stride']), 'VALID')
    return x


# ---------------------------------------------------------------------------
if __name__ == "__main__":
    key = jax.random.PRNGKey(0)
    key, xkey, wkey = jax.random.split(key, 3)

    # conv3->8, fused maxpool 2/2, standalone maxpool 2/2, then [conv3 s2 ->16, conv1 ->8] x1
    module_config = [('c', 3, 8), ('p', 2, 2), ('p', 2, 2),
                     [[('c', 3, 16, 2), ('c', 1, 8)], 1]]
    in_channels = 4

    layers, out_channels = build_conv_module(in_channels, module_config, wkey)
    x = jax.random.normal(xkey, (2, in_channels, 16, 16), jnp.float32)   # NCHW input

    out = jax.block_until_ready(conv_module_forward(x, layers, out_channels))
    assert out.shape == (2, out_channels, 2, 2), out.shape
    assert bool(jnp.all(jnp.isfinite(out)))

    ref = jax.block_until_ready(reference_forward(x, layers))
    err = float(jnp.max(jnp.abs(out - ref)))
    assert err < 0.2, f"max abs err vs reference: {err}"

    print("KERNEL_OK")
</pallas_src>

<mosaic_0001>
module attributes {stable_mosaic.version = 11 : i64} {
  func.func @_conv_stats_kernel(%arg0: i32, %arg1: i32, %arg2: memref<2x16x16x128xbf16, #tpu.memory_space<vmem>>, %arg3: memref<3x384x128xbf16, #tpu.memory_space<vmem>>, %arg4: memref<2x16x16x128xbf16, #tpu.memory_space<vmem>>, %arg5: memref<1x1x2x128xf32, #tpu.memory_space<vmem>>, %arg6: memref<2x18x18x128xbf16, #tpu.memory_space<vmem>>) attributes {dimension_semantics = [#tpu.dimension_semantics<parallel>, #tpu.dimension_semantics<parallel>], iteration_bounds = array<i64: 1, 1>, scalar_prefetch = 0 : i64, scratch_operands = 1 : i64, tpu.core_type = #tpu.core_type<tc>, window_params = [{transform_indices = @transform_0, window_bounds = array<i64: 2, 16, 16, 128>}, {pipeline_mode = #tpu.pipeline_mode<synchronous>, transform_indices = @transform_1, window_bounds = array<i64: 3, 384, 128>}, {transform_indices = @transform_2, window_bounds = array<i64: 2, 16, 16, 128>}, {transform_indices = @transform_3, window_bounds = array<i64: 1, 1, 2, 128>}]} {
    %c16_i32 = arith.constant 16 : i32
    %0 = arith.muli %arg1, %c16_i32 : i32
    %cst = arith.constant 0.000000e+00 : bf16
    %1 = vector.broadcast %cst : bf16 to vector<2x18x18x128xbf16>
    %c0 = arith.constant 0 : index
    %c0_0 = arith.constant 0 : index
    %c0_1 = arith.constant 0 : index
    %c0_2 = arith.constant 0 : index
    %2 = vector.load %arg6[%c0, %c0_0, %c0_1, %c0_2] : memref<2x18x18x128xbf16, #tpu.memory_space<vmem>>, vector<2x18x18x128xbf16>
    tpu.vector_store %arg6[%c0, %c0_0, %c0_1, %c0_2], %1 {strides = array<i32>} : memref<2x18x18x128xbf16, #tpu.memory_space<vmem>>, vector<2x18x18x128xbf16>,
    %c0_3 = arith.constant 0 : index
    %c0_4 = arith.constant 0 : index
    %c0_5 = arith.constant 0 : index
    %c0_6 = arith.constant 0 : index
    %3 = vector.load %arg2[%c0_3, %c0_4, %c0_5, %c0_6] : memref<2x16x16x128xbf16, #tpu.memory_space<vmem>>, vector<2x16x16x128xbf16>
    %c0_7 = arith.constant 0 : index
    %c1 = arith.constant 1 : index
    %c1_8 = arith.constant 1 : index
    %c0_9 = arith.constant 0 : index
    %4 = vector.load %arg6[%c0_7, %c1, %c1_8, %c0_9] : memref<2x18x18x128xbf16, #tpu.memory_space<vmem>>, vector<2x16x16x128xbf16>
    tpu.vector_store %arg6[%c0_7, %c1, %c1_8, %c0_9], %3 {strides = array<i32>} : memref<2x18x18x128xbf16, #tpu.memory_space<vmem>>, vector<2x16x16x128xbf16>,
    %c0_10 = arith.constant 0 : index
    %5 = arith.index_cast %0 : i32 to index
    %c0_11 = arith.constant 0 : index
    %c0_12 = arith.constant 0 : index
    %6 = vector.load %arg6[%c0_10, %5, %c0_11, %c0_12] : memref<2x18x18x128xbf16, #tpu.memory_space<vmem>>, vector<2x18x18x128xbf16>
    %cst_13 = arith.constant 0.000000e+00 : f32
    %7 = vector.broadcast %cst_13 : f32 to vector<512x128xf32>
    %8 = vector.extract_strided_slice %6 {offsets = [0, 0, 0, 0], sizes = [2, 16, 16, 128], strides = [1, 1, 1, 1]} : vector<2x18x18x128xbf16> to vector<2x16x16x128xbf16>
    %9 = vector.extract_strided_slice %6 {offsets = [0, 0, 1, 0], sizes = [2, 16, 16, 128], strides = [1, 1, 1, 1]} : vector<2x18x18x128xbf16> to vector<2x16x16x128xbf16>
    %10 = vector.extract_strided_slice %6 {offsets = [0, 0, 2, 0], sizes = [2, 16, 16, 128], strides = [1, 1, 1, 1]} : vector<2x18x18x128xbf16> to vector<2x16x16x128xbf16>
    %11 = tpu.concatenate %8, %9, %10 in 3 : vector<2x16x16x128xbf16>, vector<2x16x16x128xbf16>, vector<2x16x16x128xbf16> -> vector<2x16x16x384xbf16>
    %12 = vector.shape_cast %11 : vector<2x16x16x384xbf16> to vector<512x384xbf16>
    %c0_14 = arith.constant 0 : index
    %c0_15 = arith.constant 0 : index
    %c0_16 = arith.constant 0 : index
    %13 = vector.load %arg3[%c0_14, %c0_15, %c0_16] : memref<3x384x128xbf16, #tpu.memory_space<vmem>>, vector<1x384x128xbf16>
    %14 = vector.shape_cast %13 : vector<1x384x128xbf16> to vector<384x128xbf16>
    %cst_17 = arith.constant dense<0.000000e+00> : vector<512x128xf32>
    %15 = tpu.matmul %12, %14, %cst_17 {dimension_numbers = #tpu.dot_dimension_numbers<[1], [0], [0], [1], [0, 0, 1, 1], [], []>} : vector<512x384xbf16>, vector<384x128xbf16>, vector<512x128xf32> -> vector<512x128xf32>
    %16 = arith.addf %7, %15 : vector<512x128xf32>
    %17 = vector.extract_strided_slice %6 {offsets = [0, 1, 0, 0], sizes = [2, 16, 16, 128], strides = [1, 1, 1, 1]} : vector<2x18x18x128xbf16> to vector<2x16x16x128xbf16>
    %18 = vector.extract_strided_slice %6 {offsets = [0, 1, 1, 0], sizes = [2, 16, 16, 128], strides = [1, 1, 1, 1]} : vector<2x18x18x128xbf16> to vector<2x16x16x128xbf16>
    %19 = vector.extract_strided_slice %6 {offsets = [0, 1, 2, 0], sizes = [2, 16, 16, 128], strides = [1, 1, 1, 1]} : vector<2x18x18x128xbf16> to vector<2x16x16x128xbf16>
    %20 = tpu.concatenate %17, %18, %19 in 3 : vector<2x16x16x128xbf16>, vector<2x16x16x128xbf16>, vector<2x16x16x128xbf16> -> vector<2x16x16x384xbf16>
    %21 = vector.shape_cast %20 : vector<2x16x16x384xbf16> to vector<512x384xbf16>
    %c1_18 = arith.constant 1 : index
    %c0_19 = arith.constant 0 : index
    %c0_20 = arith.constant 0 : index
    %22 = vector.load %arg3[%c1_18, %c0_19, %c0_20] : memref<3x384x128xbf16, #tpu.memory_space<vmem>>, vector<1x384x128xbf16>
    %23 = vector.shape_cast %22 : vector<1x384x128xbf16> to vector<384x128xbf16>
    %cst_21 = arith.constant dense<0.000000e+00> : vector<512x128xf32>
    %24 = tpu.matmul %21, %23, %cst_21 {dimension_numbers = #tpu.dot_dimension_numbers<[1], [0], [0], [1], [0, 0, 1, 1], [], []>} : vector<512x384xbf16>, vector<384x128xbf16>, vector<512x128xf32> -> vector<512x128xf32>
    %25 = arith.addf %16, %24 : vector<512x128xf32>
    %26 = vector.extract_strided_slice %6 {offsets = [0, 2, 0, 0], sizes = [2, 16, 16, 128], strides = [1, 1, 1, 1]} : vector<2x18x18x128xbf16> to vector<2x16x16x128xbf16>
    %27 = vector.extract_strided_slice %6 {offsets = [0, 2, 1, 0], sizes = [2, 16, 16, 128], strides = [1, 1, 1, 1]} : vector<2x18x18x128xbf16> to vector<2x16x16x128xbf16>
    %28 = vector.extract_strided_slice %6 {offsets = [0, 2, 2, 0], sizes = [2, 16, 16, 128], strides = [1, 1, 1, 1]} : vector<2x18x18x128xbf16> to vector<2x16x16x128xbf16>
    %29 = tpu.concatenate %26, %27, %28 in 3 : vector<2x16x16x128xbf16>, vector<2x16x16x128xbf16>, vector<2x16x16x128xbf16> -> vector<2x16x16x384xbf16>
    %30 = vector.shape_cast %29 : vector<2x16x16x384xbf16> to vector<512x384xbf16>
    %c2 = arith.constant 2 : index
    %c0_22 = arith.constant 0 : index
    %c0_23 = arith.constant 0 : index
    %31 = vector.load %arg3[%c2, %c0_22, %c0_23] : memref<3x384x128xbf16, #tpu.memory_space<vmem>>, vector<1x384x128xbf16>
    %32 = vector.shape_cast %31 : vector<1x384x128xbf16> to vector<384x128xbf16>
    %cst_24 = arith.constant dense<0.000000e+00> : vector<512x128xf32>
    %33 = tpu.matmul %30, %32, %cst_24 {dimension_numbers = #tpu.dot_dimension_numbers<[1], [0], [0], [1], [0, 0, 1, 1], [], []>} : vector<512x384xbf16>, vector<384x128xbf16>, vector<512x128xf32> -> vector<512x128xf32>
    %34 = arith.addf %25, %33 : vector<512x128xf32>
    %35 = vector.shape_cast %34 : vector<512x128xf32> to vector<2x16x16x128xf32>
    %36 = arith.truncf %35 : vector<2x16x16x128xf32> to vector<2x16x16x128xbf16>
    %c0_25 = arith.constant 0 : index
    %c0_26 = arith.constant 0 : index
    %c0_27 = arith.constant 0 : index
    %c0_28 = arith.constant 0 : index
    %37 = vector.load %arg4[%c0_25, %c0_26, %c0_27, %c0_28] : memref<2x16x16x128xbf16, #tpu.memory_space<vmem>>, vector<2x16x16x128xbf16>
    tpu.vector_store %arg4[%c0_25, %c0_26, %c0_27, %c0_28], %36 {strides = array<i32>} : memref<2x16x16x128xbf16, #tpu.memory_space<vmem>>, vector<2x16x16x128xbf16>,
    %cst_29 = arith.constant dense<0.000000e+00> : vector<128xf32>
    %38 = vector.multi_reduction <add>, %34, %cst_29 [0] : vector<512x128xf32> to vector<128xf32>
    %39 = vector.shape_cast %38 : vector<128xf32> to vector<1x128xf32>
    %40 = arith.mulf %34, %34 : vector<512x128xf32>
    %cst_30 = arith.constant dense<0.000000e+00> : vector<128xf32>
    %41 = vector.multi_reduction <add>, %40, %cst_30 [0] : vector<512x128xf32> to vector<128xf32>
    %42 = vector.shape_cast %41 : vector<128xf32> to vector<1x128xf32>
    %43 = tpu.concatenate %39, %42 in 0 : vector<1x128xf32>, vector<1x128xf32> -> vector<2x128xf32>
    %44 = vector.shape_cast %43 : vector<2x128xf32> to vector<1x1x2x128xf32>
    %c0_31 = arith.constant 0 : index
    %c0_32 = arith.constant 0 : index
    %c0_33 = arith.constant 0 : index
    %c0_34 = arith.constant 0 : index
    %45 = vector.load %arg5[%c0_31, %c0_32, %c0_33, %c0_34] : memref<1x1x2x128xf32, #tpu.memory_space<vmem>>, vector<1x1x2x128xf32>
    tpu.vector_store %arg5[%c0_31, %c0_32, %c0_33, %c0_34], %44 {strides = array<i32>} : memref<1x1x2x128xf32, #tpu.memory_space<vmem>>, vector<1x1x2x128xf32>,
    return
  }
  func.func @transform_0(%arg0: i32, %arg1: i32) -> (i32, i32, i32, i32) {
    %c0_i32 = arith.constant 0 : i32
    %c0_i32_0 = arith.constant 0 : i32
    %c0_i32_1 = arith.constant 0 : i32
    %c0_i32_2 = arith.constant 0 : i32
    return %arg0, %c0_i32, %c0_i32_0, %c0_i32_1 : i32, i32, i32, i32
  }
  func.func @transform_1(%arg0: i32, %arg1: i32) -> (i32, i32, i32) {
    %c0_i32 = arith.constant 0 : i32
    %c0_i32_0 = arith.constant 0 : i32
    %c0_i32_1 = arith.constant 0 : i32
    %c0_i32_2 = arith.constant 0 : i32
    return %c0_i32, %c0_i32_0, %c0_i32_1 : i32, i32, i32
  }
  func.func @transform_2(%arg0: i32, %arg1: i32) -> (i32, i32, i32, i32) {
    %c0_i32 = arith.constant 0 : i32
    %c0_i32_0 = arith.constant 0 : i32
    %c0_i32_1 = arith.constant 0 : i32
    return %arg0, %arg1, %c0_i32, %c0_i32_0 : i32, i32, i32, i32
  }
  func.func @transform_3(%arg0: i32, %arg1: i32) -> (i32, i32, i32, i32) {
    %c0_i32 = arith.constant 0 : i32
    %c0_i32_0 = arith.constant 0 : i32
    %c0_i32_1 = arith.constant 0 : i32
    return %arg0, %arg1, %c0_i32, %c0_i32_0 : i32, i32, i32, i32
  }
}

</mosaic_0001>

<llo_original>
// kernel: tpu_custom_call.1
$region0: #{tpu_custom_call.1}
  #allocation0 [shape = 'u32[]', space=smem, size = 0x4, offset = 0x4, fixed_abs, tag = 'smem constant byte address 0x4 - core index']
  #allocation1 [shape = 'u32[72,128]{1,0:T(1,128)}', space=vmem, size = 0x9000, scoped, tag = 'internal scratch']
  #allocation2 [shape = 'bf16[2,18,18,128]{3,2,1,0:T(8,128)(2,1)}', space=vmem, size = 0x36000, scoped, tag = 'scratch operand']
  %s0 = inlined_call_operand.hbm [shape: bf16[2,16,16,128], index: 0, kind: input, shape index: {}]
  %s1 = inlined_call_operand.hbm [shape: bf16[3,384,128], index: 1, kind: input, shape index: {}]
  %s2 = inlined_call_operand.hbm [shape: bf16[2,16,16,128], index: 2, kind: output, shape index: {0}]
  %s3 = inlined_call_operand.hbm [shape: f32[1,1,2,128], index: 3, kind: output, shape index: {1}]
  %4 = xla_tuple %s2, %s3
  %s5 = sld [smem:[#allocation0]]
  $region34: #{tpu_custom_call.1} parent=0
    _
  %s7 = ssub.s32 1, %s5
  %s8 = scalar_select 0, %s7, %s5
  $region1: #{tpu_custom_call.1} parent=0
    #allocation3 [shape = 'u8[131072]{0}', space=vmem, size = 0x20000, scoped, tag = 'input window, operand 0, single buffered']
    #allocation4 [shape = 's32[1]{0}', space=sflag, size = 0x4, scoped, tag = 'scoped memory for tpu_custom_call.1']
    #allocation5 [shape = 's32[1]{0}', space=sflag, size = 0x4, scoped, tag = 'scoped memory for tpu_custom_call.1']
    #allocation6 [shape = 'u8[294912]{0}', space=vmem, size = 0x48000, scoped, tag = 'input window, operand 1, single buffered']
    #allocation7 [shape = 's32[1]{0}', space=sflag, size = 0x4, scoped, tag = 'scoped memory for tpu_custom_call.1']
    #allocation8 [shape = 'u8[131072]{0}', space=vmem, size = 0x20000, scoped, tag = 'output window, operand 0, single buffered']
    #allocation9 [shape = 'u8[1024]{0}', space=vmem, size = 0x400, scoped, tag = 'output window, operand 1, single buffered']
    #allocation10 [shape = 's32[1]{0}', space=sflag, size = 0x4, scoped, tag = 'scoped memory for tpu_custom_call.1']
    %9 = vsyncpa [#allocation4], 0
    %10 = vsyncpa [#allocation7], 0
    %11 = vsyncpa [#allocation5], 0
    %12 = vsyncpa [#allocation10], 0
    // Predicated region
    $region2: #{tpu_custom_call.1} parent=1 // pred_check
      _
    $region3: #{tpu_custom_call.1} parent=1 // pred_check_branch
      %14 = sbr.rel (0) target = $region5
    $region4: #{tpu_custom_call.1} parent=1 // pred_region
      %16 = vsyncadd [#allocation4], 0
      %s17 = sshll.u32 %s0, 4
      %s18 = int_to_ptr.hbm [resolvable:$true] %s17
      %s19 = sshll.u32 [#allocation3], 4
      %s20 = int_to_ptr.vmem [resolvable:$true] %s19
      %25 = dma.hbm_to_vmem [thread:$0]  %s18, 4096, %s20, [#allocation4], 64, 64, 4
    $region5: #{tpu_custom_call.1} parent=1 // pred_fallthru
      _
    // Predicated region
    $region6: #{tpu_custom_call.1} parent=1 // pred_check
      _
    $region7: #{tpu_custom_call.1} parent=1 // pred_check_branch
      %27 = sbr.rel (0) target = $region9
    $region8: #{tpu_custom_call.1} parent=1 // pred_region
      %29 = vsyncadd [#allocation7], 0
      %s30 = sshll.u32 %s1, 4
      %s31 = int_to_ptr.hbm [resolvable:$true] %s30
      %s32 = sshll.u32 [#allocation6], 4
      %s33 = int_to_ptr.vmem [resolvable:$true] %s32
      %38 = dma.hbm_to_vmem [thread:$0]  %s31, 9216, %s33, [#allocation7], 64, 64, 4
    $region9: #{tpu_custom_call.1} parent=1 // pred_fallthru
      _
    // Predicated region
    $region10: #{tpu_custom_call.1} parent=1 // pred_check
      _
    $region11: #{tpu_custom_call.1} parent=1 // pred_check_branch
      %40 = sbr.rel (0) target = $region13
    $region12: #{tpu_custom_call.1} parent=1 // pred_region
      %42 = dma.done [#allocation4], 4096
    $region13: #{tpu_custom_call.1} parent=1 // pred_fallthru
      _
    // Predicated region
    $region14: #{tpu_custom_call.1} parent=1 // pred_check
      _
    $region15: #{tpu_custom_call.1} parent=1 // pred_check_branch
      %44 = sbr.rel (0) target = $region17
    $region16: #{tpu_custom_call.1} parent=1 // pred_region
      %46 = dma.done [#allocation7], 9216
    $region17: #{tpu_custom_call.1} parent=1 // pred_fallthru
      _
    %s48 = smul.u32 0, 16
    %49 = vst [vmem:[#allocation2] sm:$0xf] 0
    %50 = vst [vmem:[#allocation2 + $0x4] sm:$0xf] 0
    %51 = vst [vmem:[#allocation2 + $0x8] sm:$0x1] 0
    %52 = vst [vmem:[#allocation2 + $0xc] sm:$0xf] 0
    %53 = vst [vmem:[#allocation2 + $0x10] sm:$0xf] 0
    %54 = vst [vmem:[#allocation2 + $0x14] sm:$0x1] 0
    %55 = vst [vmem:[#allocation2 + $0x18] sm:$0xf] 0
    %56 = vst [vmem:[#allocation2 + $0x1c] sm:$0xf] 0
    %57 = vst [vmem:[#allocation2 + $0x20] sm:$0x1] 0
    %58 = vst [vmem:[#allocation2 + $0x24] sm:$0xf] 0
    %59 = vst [vmem:[#allocation2 + $0x28] sm:$0xf] 0
    %60 = vst [vmem:[#allocation2 + $0x2c] sm:$0x1] 0
    %61 = vst [vmem:[#allocation2 + $0x30] sm:$0xf] 0
    %62 = vst [vmem:[#allocation2 + $0x34] sm:$0xf] 0
    %63 = vst [vmem:[#allocation2 + $0x38] sm:$0x1] 0
    %64 = vst [vmem:[#allocation2 + $0x3c] sm:$0xf] 0
    %65 = vst [vmem:[#allocation2 + $0x40] sm:$0xf] 0
    %66 = vst [vmem:[#allocation2 + $0x44] sm:$0x1] 0
    %67 = vst [vmem:[#allocation2 + $0x48] sm:$0xf] 0
    %68 = vst [vmem:[#allocation2 + $0x4c] sm:$0xf] 0
    %69 = vst [vmem:[#allocation2 + $0x50] sm:$0x1] 0
    %70 = vst [vmem:[#allocation2 + $0x54] sm:$0xf] 0
    %71 = vst [vmem:[#allocation2 + $0x58] sm:$0xf] 0
    %72 = vst [vmem:[#allocation2 + $0x5c] sm:$0x1] 0
    %73 = vst [vmem:[#allocation2 + $0x60] sm:$0xf] 0
    %74 = vst [vmem:[#allocation2 + $0x64] sm:$0xf] 0
    %75 = vst [vmem:[#allocation2 + $0x68] sm:$0x1] 0
    %76 = vst [vmem:[#allocation2 + $0x6c] sm:$0xf] 0
    %77 = vst [vmem:[#allocation2 + $0x70] sm:$0xf] 0
    %78 = vst [vmem:[#allocation2 + $0x74] sm:$0x1] 0
    %79 = vst [vmem:[#allocation2 + $0x78] sm:$0xf] 0
    %80 = vst [vmem:[#allocation2 + $0x7c] sm:$0xf] 0
    %81 = vst [vmem:[#allocation2 + $0x80] sm:$0x1] 0
    %82 = vst [vmem:[#allocation2 + $0x84] sm:$0xf] 0
    %83 = vst [vmem:[#allocation2 + $0x88] sm:$0xf] 0
    %84 = vst [vmem:[#allocation2 + $0x8c] sm:$0x1] 0
    %85 = vst [vmem:[#allocation2 + $0x90] sm:$0xf] 0
    %86 = vst [vmem:[#allocation2 + $0x94] sm:$0xf] 0
    %87 = vst [vmem:[#allocation2 + $0x98] sm:$0x1] 0
    %88 = vst [vmem:[#allocation2 + $0x9c] sm:$0xf] 0
    %89 = vst [vmem:[#allocation2 + $0xa0] sm:$0xf] 0
    %90 = vst [vmem:[#allocation2 + $0xa4] sm:$0x1] 0
    %91 = vst [vmem:[#allocation2 + $0xa8] sm:$0xf] 0
    %92 = vst [vmem:[#allocation2 + $0xac] sm:$0xf] 0
    %93 = vst [vmem:[#allocation2 + $0xb0] sm:$0x1] 0
    %94 = vst [vmem:[#allocation2 + $0xb4] sm:$0xf] 0
    %95 = vst [vmem:[#allocation2 + $0xb8] sm:$0xf] 0
    %96 = vst [vmem:[#allocation2 + $0xbc] sm:$0x1] 0
    %97 = vst [vmem:[#allocation2 + $0xc0] sm:$0xf] 0
    %98 = vst [vmem:[#allocation2 + $0xc4] sm:$0xf] 0
    %99 = vst [vmem:[#allocation2 + $0xc8] sm:$0x1] 0
    %100 = vst [vmem:[#allocation2 + $0xcc] sm:$0xf] 0
    %101 = vst [vmem:[#allocation2 + $0xd0] sm:$0xf] 0
    %102 = vst [vmem:[#allocation2 + $0xd4] sm:$0x1] 0
    %103 = vst [vmem:[#allocation2 + $0xd8] sm:$0xf] 0
    %104 = vst [vmem:[#allocation2 + $0xdc] sm:$0xf] 0
    %105 = vst [vmem:[#allocation2 + $0xe0] sm:$0x1] 0
    %106 = vst [vmem:[#allocation2 + $0xe4] sm:$0xf] 0
    %107 = vst [vmem:[#allocation2 + $0xe8] sm:$0xf] 0
    %108 = vst [vmem:[#allocation2 + $0xec] sm:$0x1] 0
    %109 = vst [vmem:[#allocation2 + $0xf0] sm:$0xf] 0
    %110 = vst [vmem:[#allocation2 + $0xf4] sm:$0xf] 0
    %111 = vst [vmem:[#allocation2 + $0xf8] sm:$0x1] 0
    %112 = vst [vmem:[#allocation2 + $0xfc] sm:$0xf] 0
    %113 = vst [vmem:[#allocation2 + $0x100] sm:$0xf] 0
    %114 = vst [vmem:[#allocation2 + $0x104] sm:$0x1] 0
    %115 = vst [vmem:[#allocation2 + $0x108] sm:$0xf] 0
    %116 = vst [vmem:[#allocation2 + $0x10c] sm:$0xf] 0
    %117 = vst [vmem:[#allocation2 + $0x110] sm:$0x1] 0
    %118 = vst [vmem:[#allocation2 + $0x114] sm:$0xf] 0
    %119 = vst [vmem:[#allocation2 + $0x118] sm:$0xf] 0
    %120 = vst [vmem:[#allocation2 + $0x11c] sm:$0x1] 0
    %121 = vst [vmem:[#allocation2 + $0x120] sm:$0xf] 0
    %122 = vst [vmem:[#allocation2 + $0x124] sm:$0xf] 0
    %123 = vst [vmem:[#allocation2 + $0x128] sm:$0x1] 0
    %124 = vst [vmem:[#allocation2 + $0x12c] sm:$0xf] 0
    %125 = vst [vmem:[#allocation2 + $0x130] sm:$0xf] 0
    %126 = vst [vmem:[#allocation2 + $0x134] sm:$0x1] 0
    %127 = vst [vmem:[#allocation2 + $0x138] sm:$0xf] 0
    %128 = vst [vmem:[#allocation2 + $0x13c] sm:$0xf] 0
    %129 = vst [vmem:[#allocation2 + $0x140] sm:$0x1] 0
    %130 = vst [vmem:[#allocation2 + $0x144] sm:$0xf] 0
    %131 = vst [vmem:[#allocation2 + $0x148] sm:$0xf] 0
    %132 = vst [vmem:[#allocation2 + $0x14c] sm:$0x1] 0
    %133 = vst [vmem:[#allocation2 + $0x150] sm:$0xf] 0
    %134 = vst [vmem:[#allocation2 + $0x154] sm:$0xf] 0
    %135 = vst [vmem:[#allocation2 + $0x158] sm:$0x1] 0
    %136 = vst [vmem:[#allocation2 + $0x15c] sm:$0xf] 0
    %137 = vst [vmem:[#allocation2 + $0x160] sm:$0xf] 0
    %138 = vst [vmem:[#allocation2 + $0x164] sm:$0x1] 0
    %139 = vst [vmem:[#allocation2 + $0x168] sm:$0xf] 0
    %140 = vst [vmem:[#allocation2 + $0x16c] sm:$0xf] 0
    %141 = vst [vmem:[#allocation2 + $0x170] sm:$0x1] 0
    %142 = vst [vmem:[#allocation2 + $0x174] sm:$0xf] 0
    %143 = vst [vmem:[#allocation2 + $0x178] sm:$0xf] 0
    %144 = vst [vmem:[#allocation2 + $0x17c] sm:$0x1] 0
    %145 = vst [vmem:[#allocation2 + $0x180] sm:$0xf] 0
    %146 = vst [vmem:[#allocation2 + $0x184] sm:$0xf] 0
    %147 = vst [vmem:[#allocation2 + $0x188] sm:$0x1] 0
    %148 = vst [vmem:[#allocation2 + $0x18c] sm:$0xf] 0
    %149 = vst [vmem:[#allocation2 + $0x190] sm:$0xf] 0
    %150 = vst [vmem:[#allocation2 + $0x194] sm:$0x1] 0
    %151 = vst [vmem:[#allocation2 + $0x198] sm:$0xf] 0
    %152 = vst [vmem:[#allocation2 + $0x19c] sm:$0xf] 0
    %153 = vst [vmem:[#allocation2 + $0x1a0] sm:$0x1] 0
    %154 = vst [vmem:[#allocation2 + $0x1a4] sm:$0xf] 0
    %155 = vst [vmem:[#allocation2 + $0x1a8] sm:$0xf] 0
    %156 = vst [vmem:[#allocation2 + $0x1ac] sm:$0x1] 0
    %v157 = vld [vmem:[#allocation3] sm:$0xf]
    %v158 = vld [vmem:[#allocation3 + $0x4] sm:$0xf]
    %v159 = vld [vmem:[#allocation3 + $0x8] sm:$0xf]
    %v160 = vld [vmem:[#allocation3 + $0xc] sm:$0xf]
    %v161 = vld [vmem:[#allocation3 + $0x10] sm:$0xf]
    %v162 = vld [vmem:[#allocation3 + $0x14] sm:$0xf]
    %v163 = vld [vmem:[#allocation3 + $0x18] sm:$0xf]
    %v164 = vld [vmem:[#allocation3 + $0x1c] sm:$0xf]
    %v165 = vld [vmem:[#allocation3 + $0x20] sm:$0xf]
    %v166 = vld [vmem:[#allocation3 + $0x24] sm:$0xf]
    %v167 = vld [vmem:[#allocation3 + $0x28] sm:$0xf]
    %v168 = vld [vmem:[#allocation3 + $0x2c] sm:$0xf]
    %v169 = vld [vmem:[#allocation3 + $0x30] sm:$0xf]
    %v170 = vld [vmem:[#allocation3 + $0x34] sm:$0xf]
    %v171 = vld [vmem:[#allocation3 + $0x38] sm:$0xf]
    %v172 = vld [vmem:[#allocation3 + $0x3c] sm:$0xf]
    %v173 = vld [vmem:[#allocation3 + $0x40] sm:$0xf]
    %v174 = vld [vmem:[#allocation3 + $0x44] sm:$0xf]
    %v175 = vld [vmem:[#allocation3 + $0x48] sm:$0xf]
    %v176 = vld [vmem:[#allocation3 + $0x4c] sm:$0xf]
    %v177 = vld [vmem:[#allocation3 + $0x50] sm:$0xf]
    %v178 = vld [vmem:[#allocation3 + $0x54] sm:$0xf]
    %v179 = vld [vmem:[#allocation3 + $0x58] sm:$0xf]
    %v180 = vld [vmem:[#allocation3 + $0x5c] sm:$0xf]
    %v181 = vld [vmem:[#allocation3 + $0x60] sm:$0xf]
    %v182 = vld [vmem:[#allocation3 + $0x64] sm:$0xf]
    %v183 = vld [vmem:[#allocation3 + $0x68] sm:$0xf]
    %v184 = vld [vmem:[#allocation3 + $0x6c] sm:$0xf]
    %v185 = vld [vmem:[#allocation3 + $0x70] sm:$0xf]
    %v186 = vld [vmem:[#allocation3 + $0x74] sm:$0xf]
    %v187 = vld [vmem:[#allocation3 + $0x78] sm:$0xf]
    %v188 = vld [vmem:[#allocation3 + $0x7c] sm:$0xf]
    %v189 = vld [vmem:[#allocation3 + $0x80] sm:$0xf]
    %v190 = vld [vmem:[#allocation3 + $0x84] sm:$0xf]
    %v191 = vld [vmem:[#allocation3 + $0x88] sm:$0xf]
    %v192 = vld [vmem:[#allocation3 + $0x8c] sm:$0xf]
    %v193 = vld [vmem:[#allocation3 + $0x90] sm:$0xf]
    %v194 = vld [vmem:[#allocation3 + $0x94] sm:$0xf]
    %v195 = vld [vmem:[#allocation3 + $0x98] sm:$0xf]
    %v196 = vld [vmem:[#allocation3 + $0x9c] sm:$0xf]
    %v197 = vld [vmem:[#allocation3 + $0xa0] sm:$0xf]
    %v198 = vld [vmem:[#allocation3 + $0xa4] sm:$0xf]
    %v199 = vld [vmem:[#allocation3 + $0xa8] sm:$0xf]
    %v200 = vld [vmem:[#allocation3 + $0xac] sm:$0xf]
    %v201 = vld [vmem:[#allocation3 + $0xb0] sm:$0xf]
    %v202 = vld [vmem:[#allocation3 + $0xb4] sm:$0xf]
    %v203 = vld [vmem:[#allocation3 + $0xb8] sm:$0xf]
    %v204 = vld [vmem:[#allocation3 + $0xbc] sm:$0xf]
    %v205 = vld [vmem:[#allocation3 + $0xc0] sm:$0xf]
    %v206 = vld [vmem:[#allocation3 + $0xc4] sm:$0xf]
    %v207 = vld [vmem:[#allocation3 + $0xc8] sm:$0xf]
    %v208 = vld [vmem:[#allocation3 + $0xcc] sm:$0xf]
    %v209 = vld [vmem:[#allocation3 + $0xd0] sm:$0xf]
    %v210 = vld [vmem:[#allocation3 + $0xd4] sm:$0xf]
    %v211 = vld [vmem:[#allocation3 + $0xd8] sm:$0xf]
    %v212 = vld [vmem:[#allocation3 + $0xdc] sm:$0xf]
    %v213 = vld [vmem:[#allocation3 + $0xe0] sm:$0xf]
    %v214 = vld [vmem:[#allocation3 + $0xe4] sm:$0xf]
    %v215 = vld [vmem:[#allocation3 + $0xe8] sm:$0xf]
    %v216 = vld [vmem:[#allocation3 + $0xec] sm:$0xf]
    %v217 = vld [vmem:[#allocation3 + $0xf0] sm:$0xf]
    %v218 = vld [vmem:[#allocation3 + $0xf4] sm:$0xf]
    %v219 = vld [vmem:[#allocation3 + $0xf8] sm:$0xf]
    %v220 = vld [vmem:[#allocation3 + $0xfc] sm:$0xf]
    %vm221 = vsmask.f32 256
    %vm222 = vsmask.f32 4368
    %vm223 = vmor %vm221, %vm222
    %v225 = vshrl.u32 %v157, 16
    %v227 = vrot.slane %v225, 7
    %v228 = vshll.u32 %v157, 16
    %v230 = vor.u32 %v227, %v228
    %v231 = vrot.slane %v227, 4
    %v233 = vshrl.u32 %v158, 16
    %v235 = vrot.slane %v233, 7
    %v236 = vshll.u32 %v158, 16
    %v238 = vor.u32 %v235, %v236
    %v239 = vsel %vm223, %v231, %v238
    %v240 = vrot.slane %v235, 4
    %v242 = vshrl.u32 %v159, 16
    %v244 = vrot.slane %v242, 7
    %v245 = vshll.u32 %v159, 16
    %v247 = vor.u32 %v244, %v245
    %v248 = vrot.slane %v244, 4
    %v250 = vshrl.u32 %v160, 16
    %v252 = vrot.slane %v250, 7
    %v253 = vshll.u32 %v160, 16
    %v255 = vor.u32 %v252, %v253
    %v256 = vsel %vm223, %v248, %v255
    %v257 = vrot.slane %v252, 4
    %v259 = vshrl.u32 %v161, 16
    %v261 = vrot.slane %v259, 7
    %v262 = vshll.u32 %v161, 16
    %v264 = vor.u32 %v261, %v262
    %v265 = vrot.slane %v261, 4
    %v267 = vshrl.u32 %v162, 16
    %v269 = vrot.slane %v267, 7
    %v270 = vshll.u32 %v162, 16
    %v272 = vor.u32 %v269, %v270
    %v273 = vsel %vm223, %v265, %v272
    %v274 = vrot.slane %v269, 4
    %v276 = vshrl.u32 %v163, 16
    %v278 = vrot.slane %v276, 7
    %v279 = vshll.u32 %v163, 16
    %v281 = vor.u32 %v278, %v279
    %v282 = vrot.slane %v278, 4
    %v284 = vshrl.u32 %v164, 16
    %v286 = vrot.slane %v284, 7
    %v287 = vshll.u32 %v164, 16
    %v289 = vor.u32 %v286, %v287
    %v290 = vsel %vm223, %v282, %v289
    %v291 = vrot.slane %v286, 4
    %v293 = vshrl.u32 %v165, 16
    %v295 = vrot.slane %v293, 7
    %v296 = vshll.u32 %v165, 16
    %v298 = vor.u32 %v295, %v296
    %v299 = vrot.slane %v295, 4
    %v301 = vshrl.u32 %v166, 16
    %v303 = vrot.slane %v301, 7
    %v304 = vshll.u32 %v166, 16
    %v306 = vor.u32 %v303, %v304
    %v307 = vsel %vm223, %v299, %v306
    %v308 = vrot.slane %v303, 4
    %v310 = vshrl.u32 %v167, 16
    %v312 = vrot.slane %v310, 7
    %v313 = vshll.u32 %v167, 16
    %v315 = vor.u32 %v312, %v313
    %v316 = vrot.slane %v312, 4
    %v318 = vshrl.u32 %v168, 16
    %v320 = vrot.slane %v318, 7
    %v321 = vshll.u32 %v168, 16
    %v323 = vor.u32 %v320, %v321
    %v324 = vsel %vm223, %v316, %v323
    %v325 = vrot.slane %v320, 4
    %v327 = vshrl.u32 %v169, 16
    %v329 = vrot.slane %v327, 7
    %v330 = vshll.u32 %v169, 16
    %v332 = vor.u32 %v329, %v330
    %v333 = vrot.slane %v329, 4
    %v335 = vshrl.u32 %v170, 16
    %v337 = vrot.slane %v335, 7
    %v338 = vshll.u32 %v170, 16
    %v340 = vor.u32 %v337, %v338
    %v341 = vsel %vm223, %v333, %v340
    %v342 = vrot.slane %v337, 4
    %v344 = vshrl.u32 %v171, 16
    %v346 = vrot.slane %v344, 7
    %v347 = vshll.u32 %v171, 16
    %v349 = vor.u32 %v346, %v347
    %v350 = vrot.slane %v346, 4
    %v352 = vshrl.u32 %v172, 16
    %v354 = vrot.slane %v352, 7
    %v355 = vshll.u32 %v172, 16
    %v357 = vor.u32 %v354, %v355
    %v358 = vsel %vm223, %v350, %v357
    %v359 = vrot.slane %v354, 4
    %v361 = vshrl.u32 %v173, 16
    %v363 = vrot.slane %v361, 7
    %v364 = vshll.u32 %v173, 16
    %v366 = vor.u32 %v363, %v364
    %v367 = vrot.slane %v363, 4
    %v369 = vshrl.u32 %v174, 16
    %v371 = vrot.slane %v369, 7
    %v372 = vshll.u32 %v174, 16
    %v374 = vor.u32 %v371, %v372
    %v375 = vsel %vm223, %v367, %v374
    %v376 = vrot.slane %v371, 4
    %v378 = vshrl.u32 %v175, 16
    %v380 = vrot.slane %v378, 7
    %v381 = vshll.u32 %v175, 16
    %v383 = vor.u32 %v380, %v381
    %v384 = vrot.slane %v380, 4
    %v386 = vshrl.u32 %v176, 16
    %v388 = vrot.slane %v386, 7
    %v389 = vshll.u32 %v176, 16
    %v391 = vor.u32 %v388, %v389
    %v392 = vsel %vm223, %v384, %v391
    %v393 = vrot.slane %v388, 4
    %v395 = vshrl.u32 %v177, 16
    %v397 = vrot.slane %v395, 7
    %v398 = vshll.u32 %v177, 16
    %v400 = vor.u32 %v397, %v398
    %v401 = vrot.slane %v397, 4
    %v403 = vshrl.u32 %v178, 16
    %v405 = vrot.slane %v403, 7
    %v406 = vshll.u32 %v178, 16
    %v408 = vor.u32 %v405, %v406
    %v409 = vsel %vm223, %v401, %v408
    %v410 = vrot.slane %v405, 4
    %v412 = vshrl.u32 %v179, 16
    %v414 = vrot.slane %v412, 7
    %v415 = vshll.u32 %v179, 16
    %v417 = vor.u32 %v414, %v415
    %v418 = vrot.slane %v414, 4
    %v420 = vshrl.u32 %v180, 16
    %v422 = vrot.slane %v420, 7
    %v423 = vshll.u32 %v180, 16
    %v425 = vor.u32 %v422, %v423
    %v426 = vsel %vm223, %v418, %v425
    %v427 = vrot.slane %v422, 4
    %v429 = vshrl.u32 %v181, 16
    %v431 = vrot.slane %v429, 7
    %v432 = vshll.u32 %v181, 16
    %v434 = vor.u32 %v431, %v432
    %v435 = vrot.slane %v431, 4
    %v437 = vshrl.u32 %v182, 16
    %v439 = vrot.slane %v437, 7
    %v440 = vshll.u32 %v182, 16
    %v442 = vor.u32 %v439, %v440
    %v443 = vsel %vm223, %v435, %v442
    %v444 = vrot.slane %v439, 4
    %v446 = vshrl.u32 %v183, 16
    %v448 = vrot.slane %v446, 7
    %v449 = vshll.u32 %v183, 16
    %v451 = vor.u32 %v448, %v449
    %v452 = vrot.slane %v448, 4
    %v454 = vshrl.u32 %v184, 16
    %v456 = vrot.slane %v454, 7
    %v457 = vshll.u32 %v184, 16
    %v459 = vor.u32 %v456, %v457
    %v460 = vsel %vm223, %v452, %v459
    %v461 = vrot.slane %v456, 4
    %v463 = vshrl.u32 %v185, 16
    %v465 = vrot.slane %v463, 7
    %v466 = vshll.u32 %v185, 16
    %v468 = vor.u32 %v465, %v466
    %v469 = vrot.slane %v465, 4
    %v471 = vshrl.u32 %v186, 16
    %v473 = vrot.slane %v471, 7
    %v474 = vshll.u32 %v186, 16
    %v476 = vor.u32 %v473, %v474
    %v477 = vsel %vm223, %v469, %v476
    %v478 = vrot.slane %v473, 4
    %v480 = vshrl.u32 %v187, 16
    %v482 = vrot.slane %v480, 7
    %v483 = vshll.u32 %v187, 16
    %v485 = vor.u32 %v482, %v483
    %v486 = vrot.slane %v482, 4
    %v488 = vshrl.u32 %v188, 16
    %v490 = vrot.slane %v488, 7
    %v491 = vshll.u32 %v188, 16
    %v493 = vor.u32 %v490, %v491
    %v494 = vsel %vm223, %v486, %v493
    %v495 = vrot.slane %v490, 4
    %v497 = vshrl.u32 %v189, 16
    %v499 = vrot.slane %v497, 7
    %v500 = vshll.u32 %v189, 16
    %v502 = vor.u32 %v499, %v500
    %v503 = vrot.slane %v499, 4
    %v505 = vshrl.u32 %v190, 16
    %v507 = vrot.slane %v505, 7
    %v508 = vshll.u32 %v190, 16
    %v510 = vor.u32 %v507, %v508
    %v511 = vsel %vm223, %v503, %v510
    %v512 = vrot.slane %v507, 4
    %v514 = vshrl.u32 %v191, 16
    %v516 = vrot.slane %v514, 7
    %v517 = vshll.u32 %v191, 16
    %v519 = vor.u32 %v516, %v517
    %v520 = vrot.slane %v516, 4
    %v522 = vshrl.u32 %v192, 16
    %v524 = vrot.slane %v522, 7
    %v525 = vshll.u32 %v192, 16
    %v527 = vor.u32 %v524, %v525
    %v528 = vsel %vm223, %v520, %v527
    %v529 = vrot.slane %v524, 4
    %v531 = vshrl.u32 %v193, 16
    %v533 = vrot.slane %v531, 7
    %v534 = vshll.u32 %v193, 16
    %v536 = vor.u32 %v533, %v534
    %v537 = vrot.slane %v533, 4
    %v539 = vshrl.u32 %v194, 16
    %v541 = vrot.slane %v539, 7
    %v542 = vshll.u32 %v194, 16
    %v544 = vor.u32 %v541, %v542
    %v545 = vsel %vm223, %v537, %v544
    %v546 = vrot.slane %v541, 4
    %v548 = vshrl.u32 %v195, 16
    %v550 = vrot.slane %v548, 7
    %v551 = vshll.u32 %v195, 16
    %v553 = vor.u32 %v550, %v551
    %v554 = vrot.slane %v550, 4
    %v556 = vshrl.u32 %v196, 16
    %v558 = vrot.slane %v556, 7
    %v559 = vshll.u32 %v196, 16
    %v561 = vor.u32 %v558, %v559
    %v562 = vsel %vm223, %v554, %v561
    %v563 = vrot.slane %v558, 4
    %v565 = vshrl.u32 %v197, 16
    %v567 = vrot.slane %v565, 7
    %v568 = vshll.u32 %v197, 16
    %v570 = vor.u32 %v567, %v568
    %v571 = vrot.slane %v567, 4
    %v573 = vshrl.u32 %v198, 16
    %v575 = vrot.slane %v573, 7
    %v576 = vshll.u32 %v198, 16
    %v578 = vor.u32 %v575, %v576
    %v579 = vsel %vm223, %v571, %v578
    %v580 = vrot.slane %v575, 4
    %v582 = vshrl.u32 %v199, 16
    %v584 = vrot.slane %v582, 7
    %v585 = vshll.u32 %v199, 16
    %v587 = vor.u32 %v584, %v585
    %v588 = vrot.slane %v584, 4
    %v590 = vshrl.u32 %v200, 16
    %v592 = vrot.slane %v590, 7
    %v593 = vshll.u32 %v200, 16
    %v595 = vor.u32 %v592, %v593
    %v596 = vsel %vm223, %v588, %v595
    %v597 = vrot.slane %v592, 4
    %v599 = vshrl.u32 %v201, 16
    %v601 = vrot.slane %v599, 7
    %v602 = vshll.u32 %v201, 16
    %v604 = vor.u32 %v601, %v602
    %v605 = vrot.slane %v601, 4
    %v607 = vshrl.u32 %v202, 16
    %v609 = vrot.slane %v607, 7
    %v610 = vshll.u32 %v202, 16
    %v612 = vor.u32 %v609, %v610
    %v613 = vsel %vm223, %v605, %v612
    %v614 = vrot.slane %v609, 4
    %v616 = vshrl.u32 %v203, 16
    %v618 = vrot.slane %v616, 7
    %v619 = vshll.u32 %v203, 16
    %v621 = vor.u32 %v618, %v619
    %v622 = vrot.slane %v618, 4
    %v624 = vshrl.u32 %v204, 16
    %v626 = vrot.slane %v624, 7
    %v627 = vshll.u32 %v204, 16
    %v629 = vor.u32 %v626, %v627
    %v630 = vsel %vm223, %v622, %v629
    %v631 = vrot.slane %v626, 4
    %v633 = vshrl.u32 %v205, 16
    %v635 = vrot.slane %v633, 7
    %v636 = vshll.u32 %v205, 16
    %v638 = vor.u32 %v635, %v636
    %v639 = vrot.slane %v635, 4
    %v641 = vshrl.u32 %v206, 16
    %v643 = vrot.slane %v641, 7
    %v644 = vshll.u32 %v206, 16
    %v646 = vor.u32 %v643, %v644
    %v647 = vsel %vm223, %v639, %v646
    %v648 = vrot.slane %v643, 4
    %v650 = vshrl.u32 %v207, 16
    %v652 = vrot.slane %v650, 7
    %v653 = vshll.u32 %v207, 16
    %v655 = vor.u32 %v652, %v653
    %v656 = vrot.slane %v652, 4
    %v658 = vshrl.u32 %v208, 16
    %v660 = vrot.slane %v658, 7
    %v661 = vshll.u32 %v208, 16
    %v663 = vor.u32 %v660, %v661
    %v664 = vsel %vm223, %v656, %v663
    %v665 = vrot.slane %v660, 4
    %v667 = vshrl.u32 %v209, 16
    %v669 = vrot.slane %v667, 7
    %v670 = vshll.u32 %v209, 16
    %v672 = vor.u32 %v669, %v670
    %v673 = vrot.slane %v669, 4
    %v675 = vshrl.u32 %v210, 16
    %v677 = vrot.slane %v675, 7
    %v678 = vshll.u32 %v210, 16
    %v680 = vor.u32 %v677, %v678
    %v681 = vsel %vm223, %v673, %v680
    %v682 = vrot.slane %v677, 4
    %v684 = vshrl.u32 %v211, 16
    %v686 = vrot.slane %v684, 7
    %v687 = vshll.u32 %v211, 16
    %v689 = vor.u32 %v686, %v687
    %v690 = vrot.slane %v686, 4
    %v692 = vshrl.u32 %v212, 16
    %v694 = vrot.slane %v692, 7
    %v695 = vshll.u32 %v212, 16
    %v697 = vor.u32 %v694, %v695
    %v698 = vsel %vm223, %v690, %v697
    %v699 = vrot.slane %v694, 4
    %v701 = vshrl.u32 %v213, 16
    %v703 = vrot.slane %v701, 7
    %v704 = vshll.u32 %v213, 16
    %v706 = vor.u32 %v703, %v704
    %v707 = vrot.slane %v703, 4
    %v709 = vshrl.u32 %v214, 16
    %v711 = vrot.slane %v709, 7
    %v712 = vshll.u32 %v214, 16
    %v714 = vor.u32 %v711, %v712
    %v715 = vsel %vm223, %v707, %v714
    %v716 = vrot.slane %v711, 4
    %v718 = vshrl.u32 %v215, 16
    %v720 = vrot.slane %v718, 7
    %v721 = vshll.u32 %v215, 16
    %v723 = vor.u32 %v720, %v721
    %v724 = vrot.slane %v720, 4
    %v726 = vshrl.u32 %v216, 16
    %v728 = vrot.slane %v726, 7
    %v729 = vshll.u32 %v216, 16
    %v731 = vor.u32 %v728, %v729
    %v732 = vsel %vm223, %v724, %v731
    %v733 = vrot.slane %v728, 4
    %v735 = vshrl.u32 %v217, 16
    %v737 = vrot.slane %v735, 7
    %v738 = vshll.u32 %v217, 16
    %v740 = vor.u32 %v737, %v738
    %v741 = vrot.slane %v737, 4
    %v743 = vshrl.u32 %v218, 16
    %v745 = vrot.slane %v743, 7
    %v746 = vshll.u32 %v218, 16
    %v748 = vor.u32 %v745, %v746
    %v749 = vsel %vm223, %v741, %v748
    %v750 = vrot.slane %v745, 4
    %v752 = vshrl.u32 %v219, 16
    %v754 = vrot.slane %v752, 7
    %v755 = vshll.u32 %v219, 16
    %v757 = vor.u32 %v754, %v755
    %v758 = vrot.slane %v754, 4
    %v760 = vshrl.u32 %v220, 16
    %v762 = vrot.slane %v760, 7
    %v763 = vshll.u32 %v220, 16
    %v765 = vor.u32 %v762, %v763
    %v766 = vsel %vm223, %v758, %v765
    %v767 = vrot.slane %v762, 4
    %s864 = scalar_lea.vmem [#allocation2], 12
    %vm865 = vcmask 1043456
    %vm866 = vsmask.f32 7938
    %vm867 = vmand %vm865, %vm866
    %v868 = vld [vmem:[%s864] sm:$0xf]
    %v869 = vsel %vm867, %v230, %v868
    %870 = vst [vmem:[%s864] sm:$0xf] %v869
    %871 = vst [vmem:[%s864 + $0x4] sm:$0xf] %v239
    %vm872 = vcmask 1040384
    %vm873 = vmand %vm872, %vm221
    %v874 = vld [vmem:[%s864 + $0x8] sm:$0x1]
    %v875 = vsel %vm873, %v240, %v874
    %876 = vst [vmem:[%s864 + $0x8] sm:$0x1] %v875
    %v877 = vld [vmem:[%s864 + $0xc] sm:$0xf]
    %v878 = vsel %vm867, %v247, %v877
    %879 = vst [vmem:[%s864 + $0xc] sm:$0xf] %v878
    %880 = vst [vmem:[%s864 + $0x10] sm:$0xf] %v256
    %v881 = vld [vmem:[%s864 + $0x14] sm:$0x1]
    %v882 = vsel %vm873, %v257, %v881
    %883 = vst [vmem:[%s864 + $0x14] sm:$0x1] %v882
    %v884 = vld [vmem:[%s864 + $0x18] sm:$0xf]
    %v885 = vsel %vm867, %v264, %v884
    %886 = vst [vmem:[%s864 + $0x18] sm:$0xf] %v885
    %887 = vst [vmem:[%s864 + $0x1c] sm:$0xf] %v273
    %v888 = vld [vmem:[%s864 + $0x20] sm:$0x1]
    %v889 = vsel %vm873, %v274, %v888
    %890 = vst [vmem:[%s864 + $0x20] sm:$0x1] %v889
    %v891 = vld [vmem:[%s864 + $0x24] sm:$0xf]
    %v892 = vsel %vm867, %v281, %v891
    %893 = vst [vmem:[%s864 + $0x24] sm:$0xf] %v892
    %894 = vst [vmem:[%s864 + $0x28] sm:$0xf] %v290
    %v895 = vld [vmem:[%s864 + $0x2c] sm:$0x1]
    %v896 = vsel %vm873, %v291, %v895
    %897 = vst [vmem:[%s864 + $0x2c] sm:$0x1] %v896
    %v898 = vld [vmem:[%s864 + $0x30] sm:$0xf]
    %v899 = vsel %vm867, %v298, %v898
    %900 = vst [vmem:[%s864 + $0x30] sm:$0xf] %v899
    %901 = vst [vmem:[%s864 + $0x34] sm:$0xf] %v307
    %v902 = vld [vmem:[%s864 + $0x38] sm:$0x1]
    %v903 = vsel %vm873, %v308, %v902
    %904 = vst [vmem:[%s864 + $0x38] sm:$0x1] %v903
    %v905 = vld [vmem:[%s864 + $0x3c] sm:$0xf]
    %v906 = vsel %vm867, %v315, %v905
    %907 = vst [vmem:[%s864 + $0x3c] sm:$0xf] %v906
    %908 = vst [vmem:[%s864 + $0x40] sm:$0xf] %v324
    %v909 = vld [vmem:[%s864 + $0x44] sm:$0x1]
    %v910 = vsel %vm873, %v325, %v909
    %911 = vst [vmem:[%s864 + $0x44] sm:$0x1] %v910
    %v912 = vld [vmem:[%s864 + $0x48] sm:$0xf]
    %v913 = vsel %vm867, %v332, %v912
    %914 = vst [vmem:[%s864 + $0x48] sm:$0xf] %v913
    %915 = vst [vmem:[%s864 + $0x4c] sm:$0xf] %v341
    %v916 = vld [vmem:[%s864 + $0x50] sm:$0x1]
    %v917 = vsel %vm873, %v342, %v916
    %918 = vst [vmem:[%s864 + $0x50] sm:$0x1] %v917
    %v919 = vld [vmem:[%s864 + $0x54] sm:$0xf]
    %v920 = vsel %vm867, %v349, %v919
    %921 = vst [vmem:[%s864 + $0x54] sm:$0xf] %v920
    %922 = vst [vmem:[%s864 + $0x58] sm:$0xf] %v358
    %v923 = vld [vmem:[%s864 + $0x5c] sm:$0x1]
    %v924 = vsel %vm873, %v359, %v923
    %925 = vst [vmem:[%s864 + $0x5c] sm:$0x1] %v924
    %v926 = vld [vmem:[%s864 + $0x60] sm:$0xf]
    %v927 = vsel %vm867, %v366, %v926
    %928 = vst [vmem:[%s864 + $0x60] sm:$0xf] %v927
    %929 = vst [vmem:[%s864 + $0x64] sm:$0xf] %v375
    %v930 = vld [vmem:[%s864 + $0x68] sm:$0x1]
    %v931 = vsel %vm873, %v376, %v930
    %932 = vst [vmem:[%s864 + $0x68] sm:$0x1] %v931
    %v933 = vld [vmem:[%s864 + $0x6c] sm:$0xf]
    %v934 = vsel %vm867, %v383, %v933
    %935 = vst [vmem:[%s864 + $0x6c] sm:$0xf] %v934
    %936 = vst [vmem:[%s864 + $0x70] sm:$0xf] %v392
    %v937 = vld [vmem:[%s864 + $0x74] sm:$0x1]
    %v938 = vsel %vm873, %v393, %v937
    %939 = vst [vmem:[%s864 + $0x74] sm:$0x1] %v938
    %v940 = vld [vmem:[%s864 + $0x78] sm:$0xf]
    %v941 = vsel %vm867, %v400, %v940
    %942 = vst [vmem:[%s864 + $0x78] sm:$0xf] %v941
    %943 = vst [vmem:[%s864 + $0x7c] sm:$0xf] %v409
    %v944 = vld [vmem:[%s864 + $0x80] sm:$0x1]
    %v945 = vsel %vm873, %v410, %v944
    %946 = vst [vmem:[%s864 + $0x80] sm:$0x1] %v945
    %v947 = vld [vmem:[%s864 + $0x84] sm:$0xf]
    %v948 = vsel %vm867, %v417, %v947
    %949 = vst [vmem:[%s864 + $0x84] sm:$0xf] %v948
    %950 = vst [vmem:[%s864 + $0x88] sm:$0xf] %v426
    %v951 = vld [vmem:[%s864 + $0x8c] sm:$0x1]
    %v952 = vsel %vm873, %v427, %v951
    %953 = vst [vmem:[%s864 + $0x8c] sm:$0x1] %v952
    %v954 = vld [vmem:[%s864 + $0x90] sm:$0xf]
    %v955 = vsel %vm867, %v434, %v954
    %956 = vst [vmem:[%s864 + $0x90] sm:$0xf] %v955
    %957 = vst [vmem:[%s864 + $0x94] sm:$0xf] %v443
    %v958 = vld [vmem:[%s864 + $0x98] sm:$0x1]
    %v959 = vsel %vm873, %v444, %v958
    %960 = vst [vmem:[%s864 + $0x98] sm:$0x1] %v959
    %v961 = vld [vmem:[%s864 + $0x9c] sm:$0xf]
    %v962 = vsel %vm867, %v451, %v961
    %963 = vst [vmem:[%s864 + $0x9c] sm:$0xf] %v962
    %964 = vst [vmem:[%s864 + $0xa0] sm:$0xf] %v460
    %v965 = vld [vmem:[%s864 + $0xa4] sm:$0x1]
    %v966 = vsel %vm873, %v461, %v965
    %967 = vst [vmem:[%s864 + $0xa4] sm:$0x1] %v966
    %v968 = vld [vmem:[%s864 + $0xa8] sm:$0xf]
    %v969 = vsel %vm867, %v468, %v968
    %970 = vst [vmem:[%s864 + $0xa8] sm:$0xf] %v969
    %971 = vst [vmem:[%s864 + $0xac] sm:$0xf] %v477
    %v972 = vld [vmem:[%s864 + $0xb0] sm:$0x1]
    %v973 = vsel %vm873, %v478, %v972
    %974 = vst [vmem:[%s864 + $0xb0] sm:$0x1] %v973
    %v975 = vld [vmem:[%s864 + $0xb4] sm:$0xf]
    %v976 = vsel %vm867, %v485, %v975
    %977 = vst [vmem:[%s864 + $0xb4] sm:$0xf] %v976
    %978 = vst [vmem:[%s864 + $0xb8] sm:$0xf] %v494
    %v979 = vld [vmem:[%s864 + $0xbc] sm:$0x1]
    %v980 = vsel %vm873, %v495, %v979
    %981 = vst [vmem:[%s864 + $0xbc] sm:$0x1] %v980
    %v982 = vld [vmem:[%s864 + $0xd8] sm:$0xf]
    %v983 = vsel %vm867, %v502, %v982
    %984 = vst [vmem:[%s864 + $0xd8] sm:$0xf] %v983
    %985 = vst [vmem:[%s864 + $0xdc] sm:$0xf] %v511
    %v986 = vld [vmem:[%s864 + $0xe0] sm:$0x1]
    %v987 = vsel %vm873, %v512, %v986
    %988 = vst [vmem:[%s864 + $0xe0] sm:$0x1] %v987
    %v989 = vld [vmem:[%s864 + $0xe4] sm:$0xf]
    %v990 = vsel %vm867, %v519, %v989
    %991 = vst [vmem:[%s864 + $0xe4] sm:$0xf] %v990
    %992 = vst [vmem:[%s864 + $0xe8] sm:$0xf] %v528
    %v993 = vld [vmem:[%s864 + $0xec] sm:$0x1]
    %v994 = vsel %vm873, %v529, %v993
    %995 = vst [vmem:[%s864 + $0xec] sm:$0x1] %v994
    %v996 = vld [vmem:[%s864 + $0xf0] sm:$0xf]
    %v997 = vsel %vm867, %v536, %v996
    %998 = vst [vmem:[%s864 + $0xf0] sm:$0xf] %v997
    %999 = vst [vmem:[%s864 + $0xf4] sm:$0xf] %v545
    %v1000 = vld [vmem:[%s864 + $0xf8] sm:$0x1]
    %v1001 = vsel %vm873, %v546, %v1000
    %1002 = vst [vmem:[%s864 + $0xf8] sm:$0x1] %v1001
    %v1003 = vld [vmem:[%s864 + $0xfc] sm:$0xf]
    %v1004 = vsel %vm867, %v553, %v1003
    %1005 = vst [vmem:[%s864 + $0xfc] sm:$0xf] %v1004
    %1006 = vst [vmem:[%s864 + $0x100] sm:$0xf] %v562
    %v1007 = vld [vmem:[%s864 + $0x104] sm:$0x1]
    %v1008 = vsel %vm873, %v563, %v1007
    %1009 = vst [vmem:[%s864 + $0x104] sm:$0x1] %v1008
    %v1010 = vld [vmem:[%s864 + $0x108] sm:$0xf]
    %v1011 = vsel %vm867, %v570, %v1010
    %1012 = vst [vmem:[%s864 + $0x108] sm:$0xf] %v1011
    %1013 = vst [vmem:[%s864 + $0x10c] sm:$0xf] %v579
    %v1014 = vld [vmem:[%s864 + $0x110] sm:$0x1]
    %v1015 = vsel %vm873, %v580, %v1014
    %1016 = vst [vmem:[%s864 + $0x110] sm:$0x1] %v1015
    %v1017 = vld [vmem:[%s864 + $0x114] sm:$0xf]
    %v1018 = vsel %vm867, %v587, %v1017
    %1019 = vst [vmem:[%s864 + $0x114] sm:$0xf] %v1018
    %1020 = vst [vmem:[%s864 + $0x118] sm:$0xf] %v596
    %v1021 = vld [vmem:[%s864 + $0x11c] sm:$0x1]
    %v1022 = vsel %vm873, %v597, %v1021
    %1023 = vst [vmem:[%s864 + $0x11c] sm:$0x1] %v1022
    %v1024 = vld [vmem:[%s864 + $0x120] sm:$0xf]
    %v1025 = vsel %vm867, %v604, %v1024
    %1026 = vst [vmem:[%s864 + $0x120] sm:$0xf] %v1025
    %1027 = vst [vmem:[%s864 + $0x124] sm:$0xf] %v613
    %v1028 = vld [vmem:[%s864 + $0x128] sm:$0x1]
    %v1029 = vsel %vm873, %v614, %v1028
    %1030 = vst [vmem:[%s864 + $0x128] sm:$0x1] %v1029
    %v1031 = vld [vmem:[%s864 + $0x12c] sm:$0xf]
    %v1032 = vsel %vm867, %v621, %v1031
    %1033 = vst [vmem:[%s864 + $0x12c] sm:$0xf] %v1032
    %1034 = vst [vmem:[%s864 + $0x130] sm:$0xf] %v630
    %v1035 = vld [vmem:[%s864 + $0x134] sm:$0x1]
    %v1036 = vsel %vm873, %v631, %v1035
    %1037 = vst [vmem:[%s864 + $0x134] sm:$0x1] %v1036
    %v1038 = vld [vmem:[%s864 + $0x138] sm:$0xf]
    %v1039 = vsel %vm867, %v638, %v1038
    %1040 = vst [vmem:[%s864 + $0x138] sm:$0xf] %v1039
    %1041 = vst [vmem:[%s864 + $0x13c] sm:$0xf] %v647
    %v1042 = vld [vmem:[%s864 + $0x140] sm:$0x1]
    %v1043 = vsel %vm873, %v648, %v1042
    %1044 = vst [vmem:[%s864 + $0x140] sm:$0x1] %v1043
    %v1045 = vld [vmem:[%s864 + $0x144] sm:$0xf]
    %v1046 = vsel %vm867, %v655, %v1045
    %1047 = vst [vmem:[%s864 + $0x144] sm:$0xf] %v1046
    %1048 = vst [vmem:[%s864 + $0x148] sm:$0xf] %v664
    %v1049 = vld [vmem:[%s864 + $0x14c] sm:$0x1]
    %v1050 = vsel %vm873, %v665, %v1049
    %1051 = vst [vmem:[%s864 + $0x14c] sm:$0x1] %v1050
    %v1052 = vld [vmem:[%s864 + $0x150] sm:$0xf]
    %v1053 = vsel %vm867, %v672, %v1052
    %1054 = vst [vmem:[%s864 + $0x150] sm:$0xf] %v1053
    %1055 = vst [vmem:[%s864 + $0x154] sm:$0xf] %v681
    %v1056 = vld [vmem:[%s864 + $0x158] sm:$0x1]
    %v1057 = vsel %vm873, %v682, %v1056
    %1058 = vst [vmem:[%s864 + $0x158] sm:$0x1] %v1057
    %v1059 = vld [vmem:[%s864 + $0x15c] sm:$0xf]
    %v1060 = vsel %vm867, %v689, %v1059
    %1061 = vst [vmem:[%s864 + $0x15c] sm:$0xf] %v1060
    %1062 = vst [vmem:[%s864 + $0x160] sm:$0xf] %v698
    %v1063 = vld [vmem:[%s864 + $0x164] sm:$0x1]
    %v1064 = vsel %vm873, %v699, %v1063
    %1065 = vst [vmem:[%s864 + $0x164] sm:$0x1] %v1064
    %v1066 = vld [vmem:[%s864 + $0x168] sm:$0xf]
    %v1067 = vsel %vm867, %v706, %v1066
    %1068 = vst [vmem:[%s864 + $0x168] sm:$0xf] %v1067
    %1069 = vst [vmem:[%s864 + $0x16c] sm:$0xf] %v715
    %v1070 = vld [vmem:[%s864 + $0x170] sm:$0x1]
    %v1071 = vsel %vm873, %v716, %v1070
    %1072 = vst [vmem:[%s864 + $0x170] sm:$0x1] %v1071
    %v1073 = vld [vmem:[%s864 + $0x174] sm:$0xf]
    %v1074 = vsel %vm867, %v723, %v1073
    %1075 = vst [vmem:[%s864 + $0x174] sm:$0xf] %v1074
    %1076 = vst [vmem:[%s864 + $0x178] sm:$0xf] %v732
    %v1077 = vld [vmem:[%s864 + $0x17c] sm:$0x1]
    %v1078 = vsel %vm873, %v733, %v1077
    %1079 = vst [vmem:[%s864 + $0x17c] sm:$0x1] %v1078
    %v1080 = vld [vmem:[%s864 + $0x180] sm:$0xf]
    %v1081 = vsel %vm867, %v740, %v1080
    %1082 = vst [vmem:[%s864 + $0x180] sm:$0xf] %v1081
    %1083 = vst [vmem:[%s864 + $0x184] sm:$0xf] %v749
    %v1084 = vld [vmem:[%s864 + $0x188] sm:$0x1]
    %v1085 = vsel %vm873, %v750, %v1084
    %1086 = vst [vmem:[%s864 + $0x188] sm:$0x1] %v1085
    %v1087 = vld [vmem:[%s864 + $0x18c] sm:$0xf]
    %v1088 = vsel %vm867, %v757, %v1087
    %1089 = vst [vmem:[%s864 + $0x18c] sm:$0xf] %v1088
    %1090 = vst [vmem:[%s864 + $0x190] sm:$0xf] %v766
    %v1091 = vld [vmem:[%s864 + $0x194] sm:$0x1]
    %v1092 = vsel %vm873, %v767, %v1091
    %1093 = vst [vmem:[%s864 + $0x194] sm:$0x1] %v1092
    %s1094 = smul.u32 %s48, 3
    %s1095 = smul.addr %s1094, 4
    %s1096 = scalar_lea.vmem [#allocation2], %s1095
    %v1097 = vld [vmem:[%s1096] sm:$0xf]
    %v1098 = vld [vmem:[%s1096 + $0x4] sm:$0xf]
    %v1099 = vld [vmem:[%s1096 + $0x8] sm:$0x1]
    %v1100 = vld [vmem:[%s1096 + $0xc] sm:$0xf]
    %v1101 = vld [vmem:[%s1096 + $0x10] sm:$0xf]
    %v1102 = vld [vmem:[%s1096 + $0x14] sm:$0x1]
    %v1103 = vld [vmem:[%s1096 + $0x18] sm:$0xf]
    %v1104 = vld [vmem:[%s1096 + $0x1c] sm:$0xf]
    %v1105 = vld [vmem:[%s1096 + $0x20] sm:$0x1]
    %v1106 = vld [vmem:[%s1096 + $0x24] sm:$0xf]
    %v1107 = vld [vmem:[%s1096 + $0x28] sm:$0xf]
    %v1108 = vld [vmem:[%s1096 + $0x2c] sm:$0x1]
    %v1109 = vld [vmem:[%s1096 + $0x30] sm:$0xf]
    %v1110 = vld [vmem:[%s1096 + $0x34] sm:$0xf]
    %v1111 = vld [vmem:[%s1096 + $0x38] sm:$0x1]
    %v1112 = vld [vmem:[%s1096 + $0x3c] sm:$0xf]
    %v1113 = vld [vmem:[%s1096 + $0x40] sm:$0xf]
    %v1114 = vld [vmem:[%s1096 + $0x44] sm:$0x1]
    %v1115 = vld [vmem:[%s1096 + $0x48] sm:$0xf]
    %v1116 = vld [vmem:[%s1096 + $0x4c] sm:$0xf]
    %v1117 = vld [vmem:[%s1096 + $0x50] sm:$0x1]
    %v1118 = vld [vmem:[%s1096 + $0x54] sm:$0xf]
    %v1119 = vld [vmem:[%s1096 + $0x58] sm:$0xf]
    %v1120 = vld [vmem:[%s1096 + $0x5c] sm:$0x1]
    %v1121 = vld [vmem:[%s1096 + $0x60] sm:$0xf]
    %v1122 = vld [vmem:[%s1096 + $0x64] sm:$0xf]
    %v1123 = vld [vmem:[%s1096 + $0x68] sm:$0x1]
    %v1124 = vld [vmem:[%s1096 + $0x6c] sm:$0xf]
    %v1125 = vld [vmem:[%s1096 + $0x70] sm:$0xf]
    %v1126 = vld [vmem:[%s1096 + $0x74] sm:$0x1]
    %v1127 = vld [vmem:[%s1096 + $0x78] sm:$0xf]
    %v1128 = vld [vmem:[%s1096 + $0x7c] sm:$0xf]
    %v1129 = vld [vmem:[%s1096 + $0x80] sm:$0x1]
    %v1130 = vld [vmem:[%s1096 + $0x84] sm:$0xf]
    %v1131 = vld [vmem:[%s1096 + $0x88] sm:$0xf]
    %v1132 = vld [vmem:[%s1096 + $0x8c] sm:$0x1]
    %v1133 = vld [vmem:[%s1096 + $0x90] sm:$0xf]
    %v1134 = vld [vmem:[%s1096 + $0x94] sm:$0xf]
    %v1135 = vld [vmem:[%s1096 + $0x98] sm:$0x1]
    %v1136 = vld [vmem:[%s1096 + $0x9c] sm:$0xf]
    %v1137 = vld [vmem:[%s1096 + $0xa0] sm:$0xf]
    %v1138 = vld [vmem:[%s1096 + $0xa4] sm:$0x1]
    %v1139 = vld [vmem:[%s1096 + $0xa8] sm:$0xf]
    %v1140 = vld [vmem:[%s1096 + $0xac] sm:$0xf]
    %v1141 = vld [vmem:[%s1096 + $0xb0] sm:$0x1]
    %v1142 = vld [vmem:[%s1096 + $0xb4] sm:$0xf]
    %v1143 = vld [vmem:[%s1096 + $0xb8] sm:$0xf]
    %v1144 = vld [vmem:[%s1096 + $0xbc] sm:$0x1]
    %v1145 = vld [vmem:[%s1096 + $0xc0] sm:$0xf]
    %v1146 = vld [vmem:[%s1096 + $0xc4] sm:$0xf]
    %v1147 = vld [vmem:[%s1096 + $0xc8] sm:$0x1]
    %v1148 = vld [vmem:[%s1096 + $0xcc] sm:$0xf]
    %v1149 = vld [vmem:[%s1096 + $0xd0] sm:$0xf]
    %v1150 = vld [vmem:[%s1096 + $0xd4] sm:$0x1]
    %v1151 = vld [vmem:[%s1096 + $0xd8] sm:$0xf]
    %v1152 = vld [vmem:[%s1096 + $0xdc] sm:$0xf]
    %v1153 = vld [vmem:[%s1096 + $0xe0] sm:$0x1]
    %v1154 = vld [vmem:[%s1096 + $0xe4] sm:$0xf]
    %v1155 = vld [vmem:[%s1096 + $0xe8] sm:$0xf]
    %v1156 = vld [vmem:[%s1096 + $0xec] sm:$0x1]
    %v1157 = vld [vmem:[%s1096 + $0xf0] sm:$0xf]
    %v1158 = vld [vmem:[%s1096 + $0xf4] sm:$0xf]
    %v1159 = vld [vmem:[%s1096 + $0xf8] sm:$0x1]
    %v1160 = vld [vmem:[%s1096 + $0xfc] sm:$0xf]
    %v1161 = vld [vmem:[%s1096 + $0x100] sm:$0xf]
    %v1162 = vld [vmem:[%s1096 + $0x104] sm:$0x1]
    %v1163 = vld [vmem:[%s1096 + $0x108] sm:$0xf]
    %v1164 = vld [vmem:[%s1096 + $0x10c] sm:$0xf]
    %v1165 = vld [vmem:[%s1096 + $0x110] sm:$0x1]
    %v1166 = vld [vmem:[%s1096 + $0x114] sm:$0xf]
    %v1167 = vld [vmem:[%s1096 + $0x118] sm:$0xf]
    %v1168 = vld [vmem:[%s1096 + $0x11c] sm:$0x1]
    %v1169 = vld [vmem:[%s1096 + $0x120] sm:$0xf]
    %v1170 = vld [vmem:[%s1096 + $0x124] sm:$0xf]
    %v1171 = vld [vmem:[%s1096 + $0x128] sm:$0x1]
    %v1172 = vld [vmem:[%s1096 + $0x12c] sm:$0xf]
    %v1173 = vld [vmem:[%s1096 + $0x130] sm:$0xf]
    %v1174 = vld [vmem:[%s1096 + $0x134] sm:$0x1]
    %v1175 = vld [vmem:[%s1096 + $0x138] sm:$0xf]
    %v1176 = vld [vmem:[%s1096 + $0x13c] sm:$0xf]
    %v1177 = vld [vmem:[%s1096 + $0x140] sm:$0x1]
    %v1178 = vld [vmem:[%s1096 + $0x144] sm:$0xf]
    %v1179 = vld [vmem:[%s1096 + $0x148] sm:$0xf]
    %v1180 = vld [vmem:[%s1096 + $0x14c] sm:$0x1]
    %v1181 = vld [vmem:[%s1096 + $0x150] sm:$0xf]
    %v1182 = vld [vmem:[%s1096 + $0x154] sm:$0xf]
    %v1183 = vld [vmem:[%s1096 + $0x158] sm:$0x1]
    %v1184 = vld [vmem:[%s1096 + $0x15c] sm:$0xf]
    %v1185 = vld [vmem:[%s1096 + $0x160] sm:$0xf]
    %v1186 = vld [vmem:[%s1096 + $0x164] sm:$0x1]
    %v1187 = vld [vmem:[%s1096 + $0x168] sm:$0xf]
    %v1188 = vld [vmem:[%s1096 + $0x16c] sm:$0xf]
    %v1189 = vld [vmem:[%s1096 + $0x170] sm:$0x1]
    %v1190 = vld [vmem:[%s1096 + $0x174] sm:$0xf]
    %v1191 = vld [vmem:[%s1096 + $0x178] sm:$0xf]
    %v1192 = vld [vmem:[%s1096 + $0x17c] sm:$0x1]
    %v1193 = vld [vmem:[%s1096 + $0x180] sm:$0xf]
    %v1194 = vld [vmem:[%s1096 + $0x184] sm:$0xf]
    %v1195 = vld [vmem:[%s1096 + $0x188] sm:$0x1]
    %v1196 = vld [vmem:[%s1096 + $0x18c] sm:$0xf]
    %v1197 = vld [vmem:[%s1096 + $0x190] sm:$0xf]
    %v1198 = vld [vmem:[%s1096 + $0x194] sm:$0x1]
    %v1199 = vld [vmem:[%s1096 + $0x198] sm:$0xf]
    %v1200 = vld [vmem:[%s1096 + $0x19c] sm:$0xf]
    %v1201 = vld [vmem:[%s1096 + $0x1a0] sm:$0x1]
    %v1202 = vld [vmem:[%s1096 + $0x1a4] sm:$0xf]
    %v1203 = vld [vmem:[%s1096 + $0x1a8] sm:$0xf]
    %v1204 = vld [vmem:[%s1096 + $0x1ac] sm:$0x1]
    %v1269 = vunpack.c.l.b16 %v1097
    %v1270 = vunpack.c.l.b16 %v1098
    %v1271 = vunpack.c.l.b16 %v1100
    %v1272 = vunpack.c.l.b16 %v1101
    %v1273 = vunpack.c.l.b16 %v1103
    %v1274 = vunpack.c.l.b16 %v1104
    %v1275 = vunpack.c.l.b16 %v1106
    %v1276 = vunpack.c.l.b16 %v1107
    %v1277 = vunpack.c.l.b16 %v1109
    %v1278 = vunpack.c.l.b16 %v1110
    %v1279 = vunpack.c.l.b16 %v1112
    %v1280 = vunpack.c.l.b16 %v1113
    %v1281 = vunpack.c.l.b16 %v1115
    %v1282 = vunpack.c.l.b16 %v1116
    %v1283 = vunpack.c.l.b16 %v1118
    %v1284 = vunpack.c.l.b16 %v1119
    %v1285 = vunpack.c.l.b16 %v1121
    %v1286 = vunpack.c.l.b16 %v1122
    %v1287 = vunpack.c.l.b16 %v1124
    %v1288 = vunpack.c.l.b16 %v1125
    %v1289 = vunpack.c.l.b16 %v1127
    %v1290 = vunpack.c.l.b16 %v1128
    %v1291 = vunpack.c.l.b16 %v1130
    %v1292 = vunpack.c.l.b16 %v1131
    %v1293 = vunpack.c.l.b16 %v1133
    %v1294 = vunpack.c.l.b16 %v1134
    %v1295 = vunpack.c.l.b16 %v1136
    %v1296 = vunpack.c.l.b16 %v1137
    %v1297 = vunpack.c.l.b16 %v1139
    %v1298 = vunpack.c.l.b16 %v1140
    %v1299 = vunpack.c.l.b16 %v1142
    %v1300 = vunpack.c.l.b16 %v1143
    %v1301 = vunpack.c.l.b16 %v1151
    %v1302 = vunpack.c.l.b16 %v1152
    %v1303 = vunpack.c.l.b16 %v1154
    %v1304 = vunpack.c.l.b16 %v1155
    %v1305 = vunpack.c.l.b16 %v1157
    %v1306 = vunpack.c.l.b16 %v1158
    %v1307 = vunpack.c.l.b16 %v1160
    %v1308 = vunpack.c.l.b16 %v1161
    %v1309 = vunpack.c.l.b16 %v1163
    %v1310 = vunpack.c.l.b16 %v1164
    %v1311 = vunpack.c.l.b16 %v1166
    %v1312 = vunpack.c.l.b16 %v1167
    %v1313 = vunpack.c.l.b16 %v1169
    %v1314 = vunpack.c.l.b16 %v1170
    %v1315 = vunpack.c.l.b16 %v1172
    %v1316 = vunpack.c.l.b16 %v1173
    %v1317 = vunpack.c.l.b16 %v1175
    %v1318 = vunpack.c.l.b16 %v1176
    %v1319 = vunpack.c.l.b16 %v1178
    %v1320 = vunpack.c.l.b16 %v1179
    %v1321 = vunpack.c.l.b16 %v1181
    %v1322 = vunpack.c.l.b16 %v1182
    %v1323 = vunpack.c.l.b16 %v1184
    %v1324 = vunpack.c.l.b16 %v1185
    %v1325 = vunpack.c.l.b16 %v1187
    %v1326 = vunpack.c.l.b16 %v1188
    %v1327 = vunpack.c.l.b16 %v1190
    %v1328 = vunpack.c.l.b16 %v1191
    %v1329 = vunpack.c.l.b16 %v1193
    %v1330 = vunpack.c.l.b16 %v1194
    %v1331 = vunpack.c.l.b16 %v1196
    %v1332 = vunpack.c.l.b16 %v1197
    %v1333 = vpack.c.b16 %v1270, %v1269
    %v1334 = vpack.c.b16 %v1272, %v1271
    %v1335 = vpack.c.b16 %v1274, %v1273
    %v1336 = vpack.c.b16 %v1276, %v1275
    %v1337 = vpack.c.b16 %v1278, %v1277
    %v1338 = vpack.c.b16 %v1280, %v1279
    %v1339 = vpack.c.b16 %v1282, %v1281
    %v1340 = vpack.c.b16 %v1284, %v1283
    %v1341 = vpack.c.b16 %v1286, %v1285
    %v1342 = vpack.c.b16 %v1288, %v1287
    %v1343 = vpack.c.b16 %v1290, %v1289
    %v1344 = vpack.c.b16 %v1292, %v1291
    %v1345 = vpack.c.b16 %v1294, %v1293
    %v1346 = vpack.c.b16 %v1296, %v1295
    %v1347 = vpack.c.b16 %v1298, %v1297
    %v1348 = vpack.c.b16 %v1300, %v1299
    %v1349 = vpack.c.b16 %v1302, %v1301
    %v1350 = vpack.c.b16 %v1304, %v1303
    %v1351 = vpack.c.b16 %v1306, %v1305
    %v1352 = vpack.c.b16 %v1308, %v1307
    %v1353 = vpack.c.b16 %v1310, %v1309
    %v1354 = vpack.c.b16 %v1312, %v1311
    %v1355 = vpack.c.b16 %v1314, %v1313
    %v1356 = vpack.c.b16 %v1316, %v1315
    %v1357 = vpack.c.b16 %v1318, %v1317
    %v1358 = vpack.c.b16 %v1320, %v1319
    %v1359 = vpack.c.b16 %v1322, %v1321
    %v1360 = vpack.c.b16 %v1324, %v1323
    %v1361 = vpack.c.b16 %v1326, %v1325
    %v1362 = vpack.c.b16 %v1328, %v1327
    %v1363 = vpack.c.b16 %v1330, %v1329
    %v1364 = vpack.c.b16 %v1332, %v1331
    %v1429 = vunpack.c.l.b16 %v1099
    %v1430 = vunpack.c.l.b16 %v1102
    %v1431 = vunpack.c.l.b16 %v1105
    %v1432 = vunpack.c.l.b16 %v1108
    %v1433 = vunpack.c.l.b16 %v1111
    %v1434 = vunpack.c.l.b16 %v1114
    %v1435 = vunpack.c.l.b16 %v1117
    %v1436 = vunpack.c.l.b16 %v1120
    %v1437 = vunpack.c.l.b16 %v1123
    %v1438 = vunpack.c.l.b16 %v1126
    %v1439 = vunpack.c.l.b16 %v1129
    %v1440 = vunpack.c.l.b16 %v1132
    %v1441 = vunpack.c.l.b16 %v1135
    %v1442 = vunpack.c.l.b16 %v1138
    %v1443 = vunpack.c.l.b16 %v1141
    %v1444 = vunpack.c.l.b16 %v1144
    %v1445 = vunpack.c.l.b16 %v1153
    %v1446 = vunpack.c.l.b16 %v1156
    %v1447 = vunpack.c.l.b16 %v1159
    %v1448 = vunpack.c.l.b16 %v1162
    %v1449 = vunpack.c.l.b16 %v1165
    %v1450 = vunpack.c.l.b16 %v1168
    %v1451 = vunpack.c.l.b16 %v1171
    %v1452 = vunpack.c.l.b16 %v1174
    %v1453 = vunpack.c.l.b16 %v1177
    %v1454 = vunpack.c.l.b16 %v1180
    %v1455 = vunpack.c.l.b16 %v1183
    %v1456 = vunpack.c.l.b16 %v1186
    %v1457 = vunpack.c.l.b16 %v1189
    %v1458 = vunpack.c.l.b16 %v1192
    %v1459 = vunpack.c.l.b16 %v1195
    %v1460 = vunpack.c.l.b16 %v1198
    %v1461 = vpack.c.b16 %v1429, %v1429
    %v1462 = vpack.c.b16 %v1430, %v1430
    %v1463 = vpack.c.b16 %v1431, %v1431
    %v1464 = vpack.c.b16 %v1432, %v1432
    %v1465 = vpack.c.b16 %v1433, %v1433
    %v1466 = vpack.c.b16 %v1434, %v1434
    %v1467 = vpack.c.b16 %v1435, %v1435
    %v1468 = vpack.c.b16 %v1436, %v1436
    %v1469 = vpack.c.b16 %v1437, %v1437
    %v1470 = vpack.c.b16 %v1438, %v1438
    %v1471 = vpack.c.b16 %v1439, %v1439
    %v1472 = vpack.c.b16 %v1440, %v1440
    %v1473 = vpack.c.b16 %v1441, %v1441
    %v1474 = vpack.c.b16 %v1442, %v1442
    %v1475 = vpack.c.b16 %v1443, %v1443
    %v1476 = vpack.c.b16 %v1444, %v1444
    %v1477 = vpack.c.b16 %v1445, %v1445
    %v1478 = vpack.c.b16 %v1446, %v1446
    %v1479 = vpack.c.b16 %v1447, %v1447
    %v1480 = vpack.c.b16 %v1448, %v1448
    %v1481 = vpack.c.b16 %v1449, %v1449
    %v1482 = vpack.c.b16 %v1450, %v1450
    %v1483 = vpack.c.b16 %v1451, %v1451
    %v1484 = vpack.c.b16 %v1452, %v1452
    %v1485 = vpack.c.b16 %v1453, %v1453
    %v1486 = vpack.c.b16 %v1454, %v1454
    %v1487 = vpack.c.b16 %v1455, %v1455
    %v1488 = vpack.c.b16 %v1456, %v1456
    %v1489 = vpack.c.b16 %v1457, %v1457
    %v1490 = vpack.c.b16 %v1458, %v1458
    %v1491 = vpack.c.b16 %v1459, %v1459
    %v1492 = vpack.c.b16 %v1460, %v1460
    %vm1493 = vsmask.f32 7424
    %v1495 = vshrl.u32 %v1333, 16
    %v1497 = vshll.u32 %v1333, 16
    %v1499 = vrot.slane %v1497, 1
    %v1500 = vor.u32 %v1495, %v1499
    %v1502 = vshll.u32 %v1461, 16
    %v1504 = vrot.slane %v1502, 1
    %v1505 = vsel %vm1493, %v1500, %v1504
    %v1507 = vshrl.u32 %v1334, 16
    %v1509 = vshll.u32 %v1334, 16
    %v1511 = vrot.slane %v1509, 1
    %v1512 = vor.u32 %v1507, %v1511
    %v1514 = vshll.u32 %v1462, 16
    %v1516 = vrot.slane %v1514, 1
    %v1517 = vsel %vm1493, %v1512, %v1516
    %v1519 = vshrl.u32 %v1335, 16
    %v1521 = vshll.u32 %v1335, 16
    %v1523 = vrot.slane %v1521, 1
    %v1524 = vor.u32 %v1519, %v1523
    %v1526 = vshll.u32 %v1463, 16
    %v1528 = vrot.slane %v1526, 1
    %v1529 = vsel %vm1493, %v1524, %v1528
    %v1531 = vshrl.u32 %v1336, 16
    %v1533 = vshll.u32 %v1336, 16
    %v1535 = vrot.slane %v1533, 1
    %v1536 = vor.u32 %v1531, %v1535
    %v1538 = vshll.u32 %v1464, 16
    %v1540 = vrot.slane %v1538, 1
    %v1541 = vsel %vm1493, %v1536, %v1540
    %v1543 = vshrl.u32 %v1337, 16
    %v1545 = vshll.u32 %v1337, 16
    %v1547 = vrot.slane %v1545, 1
    %v1548 = vor.u32 %v1543, %v1547
    %v1550 = vshll.u32 %v1465, 16
    %v1552 = vrot.slane %v1550, 1
    %v1553 = vsel %vm1493, %v1548, %v1552
    %v1555 = vshrl.u32 %v1338, 16
    %v1557 = vshll.u32 %v1338, 16
    %v1559 = vrot.slane %v1557, 1
    %v1560 = vor.u32 %v1555, %v1559
    %v1562 = vshll.u32 %v1466, 16
    %v1564 = vrot.slane %v1562, 1
    %v1565 = vsel %vm1493, %v1560, %v1564
    %v1567 = vshrl.u32 %v1339, 16
    %v1569 = vshll.u32 %v1339, 16
    %v1571 = vrot.slane %v1569, 1
    %v1572 = vor.u32 %v1567, %v1571
    %v1574 = vshll.u32 %v1467, 16
    %v1576 = vrot.slane %v1574, 1
    %v1577 = vsel %vm1493, %v1572, %v1576
    %v1579 = vshrl.u32 %v1340, 16
    %v1581 = vshll.u32 %v1340, 16
    %v1583 = vrot.slane %v1581, 1
    %v1584 = vor.u32 %v1579, %v1583
    %v1586 = vshll.u32 %v1468, 16
    %v1588 = vrot.slane %v1586, 1
    %v1589 = vsel %vm1493, %v1584, %v1588
    %v1591 = vshrl.u32 %v1341, 16
    %v1593 = vshll.u32 %v1341, 16
    %v1595 = vrot.slane %v1593, 1
    %v1596 = vor.u32 %v1591, %v1595
    %v1598 = vshll.u32 %v1469, 16
    %v1600 = vrot.slane %v1598, 1
    %v1601 = vsel %vm1493, %v1596, %v1600
    %v1603 = vshrl.u32 %v1342, 16
    %v1605 = vshll.u32 %v1342, 16
    %v1607 = vrot.slane %v1605, 1
    %v1608 = vor.u32 %v1603, %v1607
    %v1610 = vshll.u32 %v1470, 16
    %v1612 = vrot.slane %v1610, 1
    %v1613 = vsel %vm1493, %v1608, %v1612
    %v1615 = vshrl.u32 %v1343, 16
    %v1617 = vshll.u32 %v1343, 16
    %v1619 = vrot.slane %v1617, 1
    %v1620 = vor.u32 %v1615, %v1619
    %v1622 = vshll.u32 %v1471, 16
    %v1624 = vrot.slane %v1622, 1
    %v1625 = vsel %vm1493, %v1620, %v1624
    %v1627 = vshrl.u32 %v1344, 16
    %v1629 = vshll.u32 %v1344, 16
    %v1631 = vrot.slane %v1629, 1
    %v1632 = vor.u32 %v1627, %v1631
    %v1634 = vshll.u32 %v1472, 16
    %v1636 = vrot.slane %v1634, 1
    %v1637 = vsel %vm1493, %v1632, %v1636
    %v1639 = vshrl.u32 %v1345, 16
    %v1641 = vshll.u32 %v1345, 16
    %v1643 = vrot.slane %v1641, 1
    %v1644 = vor.u32 %v1639, %v1643
    %v1646 = vshll.u32 %v1473, 16
    %v1648 = vrot.slane %v1646, 1
    %v1649 = vsel %vm1493, %v1644, %v1648
    %v1651 = vshrl.u32 %v1346, 16
    %v1653 = vshll.u32 %v1346, 16
    %v1655 = vrot.slane %v1653, 1
    %v1656 = vor.u32 %v1651, %v1655
    %v1658 = vshll.u32 %v1474, 16
    %v1660 = vrot.slane %v1658, 1
    %v1661 = vsel %vm1493, %v1656, %v1660
    %v1663 = vshrl.u32 %v1347, 16
    %v1665 = vshll.u32 %v1347, 16
    %v1667 = vrot.slane %v1665, 1
    %v1668 = vor.u32 %v1663, %v1667
    %v1670 = vshll.u32 %v1475, 16
    %v1672 = vrot.slane %v1670, 1
    %v1673 = vsel %vm1493, %v1668, %v1672
    %v1675 = vshrl.u32 %v1348, 16
    %v1677 = vshll.u32 %v1348, 16
    %v1679 = vrot.slane %v1677, 1
    %v1680 = vor.u32 %v1675, %v1679
    %v1682 = vshll.u32 %v1476, 16
    %v1684 = vrot.slane %v1682, 1
    %v1685 = vsel %vm1493, %v1680, %v1684
    %v1687 = vshrl.u32 %v1349, 16
    %v1689 = vshll.u32 %v1349, 16
    %v1691 = vrot.slane %v1689, 1
    %v1692 = vor.u32 %v1687, %v1691
    %v1694 = vshll.u32 %v1477, 16
    %v1696 = vrot.slane %v1694, 1
    %v1697 = vsel %vm1493, %v1692, %v1696
    %v1699 = vshrl.u32 %v1350, 16
    %v1701 = vshll.u32 %v1350, 16
    %v1703 = vrot.slane %v1701, 1
    %v1704 = vor.u32 %v1699, %v1703
    %v1706 = vshll.u32 %v1478, 16
    %v1708 = vrot.slane %v1706, 1
    %v1709 = vsel %vm1493, %v1704, %v1708
    %v1711 = vshrl.u32 %v1351, 16
    %v1713 = vshll.u32 %v1351, 16
    %v1715 = vrot.slane %v1713, 1
    %v1716 = vor.u32 %v1711, %v1715
    %v1718 = vshll.u32 %v1479, 16
    %v1720 = vrot.slane %v1718, 1
    %v1721 = vsel %vm1493, %v1716, %v1720
    %v1723 = vshrl.u32 %v1352, 16
    %v1725 = vshll.u32 %v1352, 16
    %v1727 = vrot.slane %v1725, 1
    %v1728 = vor.u32 %v1723, %v1727
    %v1730 = vshll.u32 %v1480, 16
    %v1732 = vrot.slane %v1730, 1
    %v1733 = vsel %vm1493, %v1728, %v1732
    %v1735 = vshrl.u32 %v1353, 16
    %v1737 = vshll.u32 %v1353, 16
    %v1739 = vrot.slane %v1737, 1
    %v1740 = vor.u32 %v1735, %v1739
    %v1742 = vshll.u32 %v1481, 16
    %v1744 = vrot.slane %v1742, 1
    %v1745 = vsel %vm1493, %v1740, %v1744
    %v1747 = vshrl.u32 %v1354, 16
    %v1749 = vshll.u32 %v1354, 16
    %v1751 = vrot.slane %v1749, 1
    %v1752 = vor.u32 %v1747, %v1751
    %v1754 = vshll.u32 %v1482, 16
    %v1756 = vrot.slane %v1754, 1
    %v1757 = vsel %vm1493, %v1752, %v1756
    %v1759 = vshrl.u32 %v1355, 16
    %v1761 = vshll.u32 %v1355, 16
    %v1763 = vrot.slane %v1761, 1
    %v1764 = vor.u32 %v1759, %v1763
    %v1766 = vshll.u32 %v1483, 16
    %v1768 = vrot.slane %v1766, 1
    %v1769 = vsel %vm1493, %v1764, %v1768
    %v1771 = vshrl.u32 %v1356, 16
    %v1773 = vshll.u32 %v1356, 16
    %v1775 = vrot.slane %v1773, 1
    %v1776 = vor.u32 %v1771, %v1775
    %v1778 = vshll.u32 %v1484, 16
    %v1780 = vrot.slane %v1778, 1
    %v1781 = vsel %vm1493, %v1776, %v1780
    %v1783 = vshrl.u32 %v1357, 16
    %v1785 = vshll.u32 %v1357, 16
    %v1787 = vrot.slane %v1785, 1
    %v1788 = vor.u32 %v1783, %v1787
    %v1790 = vshll.u32 %v1485, 16
    %v1792 = vrot.slane %v1790, 1
    %v1793 = vsel %vm1493, %v1788, %v1792
    %v1795 = vshrl.u32 %v1358, 16
    %v1797 = vshll.u32 %v1358, 16
    %v1799 = vrot.slane %v1797, 1
    %v1800 = vor.u32 %v1795, %v1799
    %v1802 = vshll.u32 %v1486, 16
    %v1804 = vrot.slane %v1802, 1
    %v1805 = vsel %vm1493, %v1800, %v1804
    %v1807 = vshrl.u32 %v1359, 16
    %v1809 = vshll.u32 %v1359, 16
    %v1811 = vrot.slane %v1809, 1
    %v1812 = vor.u32 %v1807, %v1811
    %v1814 = vshll.u32 %v1487, 16
    %v1816 = vrot.slane %v1814, 1
    %v1817 = vsel %vm1493, %v1812, %v1816
    %v1819 = vshrl.u32 %v1360, 16
    %v1821 = vshll.u32 %v1360, 16
    %v1823 = vrot.slane %v1821, 1
    %v1824 = vor.u32 %v1819, %v1823
    %v1826 = vshll.u32 %v1488, 16
    %v1828 = vrot.slane %v1826, 1
    %v1829 = vsel %vm1493, %v1824, %v1828
    %v1831 = vshrl.u32 %v1361, 16
    %v1833 = vshll.u32 %v1361, 16
    %v1835 = vrot.slane %v1833, 1
    %v1836 = vor.u32 %v1831, %v1835
    %v1838 = vshll.u32 %v1489, 16
    %v1840 = vrot.slane %v1838, 1
    %v1841 = vsel %vm1493, %v1836, %v1840
    %v1843 = vshrl.u32 %v1362, 16
    %v1845 = vshll.u32 %v1362, 16
    %v1847 = vrot.slane %v1845, 1
    %v1848 = vor.u32 %v1843, %v1847
    %v1850 = vshll.u32 %v1490, 16
    %v1852 = vrot.slane %v1850, 1
    %v1853 = vsel %vm1493, %v1848, %v1852
    %v1855 = vshrl.u32 %v1363, 16
    %v1857 = vshll.u32 %v1363, 16
    %v1859 = vrot.slane %v1857, 1
    %v1860 = vor.u32 %v1855, %v1859
    %v1862 = vshll.u32 %v1491, 16
    %v1864 = vrot.slane %v1862, 1
    %v1865 = vsel %vm1493, %v1860, %v1864
    %v1867 = vshrl.u32 %v1364, 16
    %v1869 = vshll.u32 %v1364, 16
    %v1871 = vrot.slane %v1869, 1
    %v1872 = vor.u32 %v1867, %v1871
    %v1874 = vshll.u32 %v1492, 16
    %v1876 = vrot.slane %v1874, 1
    %v1877 = vsel %vm1493, %v1872, %v1876
    %vm1910 = vcmask 1046528
    %v1911 = vrot.slane %v1333, 1
    %v1912 = vrot.slane %v1461, 1
    %v1913 = vsel %vm1910, %v1911, %v1912
    %v1914 = vrot.slane %v1334, 1
    %v1915 = vrot.slane %v1462, 1
    %v1916 = vsel %vm1910, %v1914, %v1915
    %v1917 = vrot.slane %v1335, 1
    %v1918 = vrot.slane %v1463, 1
    %v1919 = vsel %vm1910, %v1917, %v1918
    %v1920 = vrot.slane %v1336, 1
    %v1921 = vrot.slane %v1464, 1
    %v1922 = vsel %vm1910, %v1920, %v1921
    %v1923 = vrot.slane %v1337, 1
    %v1924 = vrot.slane %v1465, 1
    %v1925 = vsel %vm1910, %v1923, %v1924
    %v1926 = vrot.slane %v1338, 1
    %v1927 = vrot.slane %v1466, 1
    %v1928 = vsel %vm1910, %v1926, %v1927
    %v1929 = vrot.slane %v1339, 1
    %v1930 = vrot.slane %v1467, 1
    %v1931 = vsel %vm1910, %v1929, %v1930
    %v1932 = vrot.slane %v1340, 1
    %v1933 = vrot.slane %v1468, 1
    %v1934 = vsel %vm1910, %v1932, %v1933
    %v1935 = vrot.slane %v1341, 1
    %v1936 = vrot.slane %v1469, 1
    %v1937 = vsel %vm1910, %v1935, %v1936
    %v1938 = vrot.slane %v1342, 1
    %v1939 = vrot.slane %v1470, 1
    %v1940 = vsel %vm1910, %v1938, %v1939
    %v1941 = vrot.slane %v1343, 1
    %v1942 = vrot.slane %v1471, 1
    %v1943 = vsel %vm1910, %v1941, %v1942
    %v1944 = vrot.slane %v1344, 1
    %v1945 = vrot.slane %v1472, 1
    %v1946 = vsel %vm1910, %v1944, %v1945
    %v1947 = vrot.slane %v1345, 1
    %v1948 = vrot.slane %v1473, 1
    %v1949 = vsel %vm1910, %v1947, %v1948
    %v1950 = vrot.slane %v1346, 1
    %v1951 = vrot.slane %v1474, 1
    %v1952 = vsel %vm1910, %v1950, %v1951
    %v1953 = vrot.slane %v1347, 1
    %v1954 = vrot.slane %v1475, 1
    %v1955 = vsel %vm1910, %v1953, %v1954
    %v1956 = vrot.slane %v1348, 1
    %v1957 = vrot.slane %v1476, 1
    %v1958 = vsel %vm1910, %v1956, %v1957
    %v1959 = vrot.slane %v1349, 1
    %v1960 = vrot.slane %v1477, 1
    %v1961 = vsel %vm1910, %v1959, %v1960
    %v1962 = vrot.slane %v1350, 1
    %v1963 = vrot.slane %v1478, 1
    %v1964 = vsel %vm1910, %v1962, %v1963
    %v1965 = vrot.slane %v1351, 1
    %v1966 = vrot.slane %v1479, 1
    %v1967 = vsel %vm1910, %v1965, %v1966
    %v1968 = vrot.slane %v1352, 1
    %v1969 = vrot.slane %v1480, 1
    %v1970 = vsel %vm1910, %v1968, %v1969
    %v1971 = vrot.slane %v1353, 1
    %v1972 = vrot.slane %v1481, 1
    %v1973 = vsel %vm1910, %v1971, %v1972
    %v1974 = vrot.slane %v1354, 1
    %v1975 = vrot.slane %v1482, 1
    %v1976 = vsel %vm1910, %v1974, %v1975
    %v1977 = vrot.slane %v1355, 1
    %v1978 = vrot.slane %v1483, 1
    %v1979 = vsel %vm1910, %v1977, %v1978
    %v1980 = vrot.slane %v1356, 1
    %v1981 = vrot.slane %v1484, 1
    %v1982 = vsel %vm1910, %v1980, %v1981
    %v1983 = vrot.slane %v1357, 1
    %v1984 = vrot.slane %v1485, 1
    %v1985 = vsel %vm1910, %v1983, %v1984
    %v1986 = vrot.slane %v1358, 1
    %v1987 = vrot.slane %v1486, 1
    %v1988 = vsel %vm1910, %v1986, %v1987
    %v1989 = vrot.slane %v1359, 1
    %v1990 = vrot.slane %v1487, 1
    %v1991 = vsel %vm1910, %v1989, %v1990
    %v1992 = vrot.slane %v1360, 1
    %v1993 = vrot.slane %v1488, 1
    %v1994 = vsel %vm1910, %v1992, %v1993
    %v1995 = vrot.slane %v1361, 1
    %v1996 = vrot.slane %v1489, 1
    %v1997 = vsel %vm1910, %v1995, %v1996
    %v1998 = vrot.slane %v1362, 1
    %v1999 = vrot.slane %v1490, 1
    %v2000 = vsel %vm1910, %v1998, %v1999
    %v2001 = vrot.slane %v1363, 1
    %v2002 = vrot.slane %v1491, 1
    %v2003 = vsel %vm1910, %v2001, %v2002
    %v2004 = vrot.slane %v1364, 1
    %v2005 = vrot.slane %v1492, 1
    %v2006 = vsel %vm1910, %v2004, %v2005
    %v2039 = vld [vmem:[#allocation6] sm:$0xf]
    %v2040 = vld [vmem:[#allocation6 + $0x4] sm:$0xf]
    %v2041 = vld [vmem:[#allocation6 + $0x8] sm:$0xf]
    %v2042 = vld [vmem:[#allocation6 + $0xc] sm:$0xf]
    %v2043 = vld [vmem:[#allocation6 + $0x10] sm:$0xf]
    %v2044 = vld [vmem:[#allocation6 + $0x14] sm:$0xf]
    %v2045 = vld [vmem:[#allocation6 + $0x18] sm:$0xf]
    %v2046 = vld [vmem:[#allocation6 + $0x1c] sm:$0xf]
    %v2047 = vld [vmem:[#allocation6 + $0x20] sm:$0xf]
    %v2048 = vld [vmem:[#allocation6 + $0x24] sm:$0xf]
    %v2049 = vld [vmem:[#allocation6 + $0x28] sm:$0xf]
    %v2050 = vld [vmem:[#allocation6 + $0x2c] sm:$0xf]
    %v2051 = vld [vmem:[#allocation6 + $0x30] sm:$0xf]
    %v2052 = vld [vmem:[#allocation6 + $0x34] sm:$0xf]
    %v2053 = vld [vmem:[#allocation6 + $0x38] sm:$0xf]
    %v2054 = vld [vmem:[#allocation6 + $0x3c] sm:$0xf]
    %v2055 = vld [vmem:[#allocation6 + $0x40] sm:$0xf]
    %v2056 = vld [vmem:[#allocation6 + $0x44] sm:$0xf]
    %v2057 = vld [vmem:[#allocation6 + $0x48] sm:$0xf]
    %v2058 = vld [vmem:[#allocation6 + $0x4c] sm:$0xf]
    %v2059 = vld [vmem:[#allocation6 + $0x50] sm:$0xf]
    %v2060 = vld [vmem:[#allocation6 + $0x54] sm:$0xf]
    %v2061 = vld [vmem:[#allocation6 + $0x58] sm:$0xf]
    %v2062 = vld [vmem:[#allocation6 + $0x5c] sm:$0xf]
    %v2063 = vld [vmem:[#allocation6 + $0x60] sm:$0xf]
    %v2064 = vld [vmem:[#allocation6 + $0x64] sm:$0xf]
    %v2065 = vld [vmem:[#allocation6 + $0x68] sm:$0xf]
    %v2066 = vld [vmem:[#allocation6 + $0x6c] sm:$0xf]
    %v2067 = vld [vmem:[#allocation6 + $0x70] sm:$0xf]
    %v2068 = vld [vmem:[#allocation6 + $0x74] sm:$0xf]
    %v2069 = vld [vmem:[#allocation6 + $0x78] sm:$0xf]
    %v2070 = vld [vmem:[#allocation6 + $0x7c] sm:$0xf]
    %v2071 = vld [vmem:[#allocation6 + $0x80] sm:$0xf]
    %v2072 = vld [vmem:[#allocation6 + $0x84] sm:$0xf]
    %v2073 = vld [vmem:[#allocation6 + $0x88] sm:$0xf]
    %v2074 = vld [vmem:[#allocation6 + $0x8c] sm:$0xf]
    %v2075 = vld [vmem:[#allocation6 + $0x90] sm:$0xf]
    %v2076 = vld [vmem:[#allocation6 + $0x94] sm:$0xf]
    %v2077 = vld [vmem:[#allocation6 + $0x98] sm:$0xf]
    %v2078 = vld [vmem:[#allocation6 + $0x9c] sm:$0xf]
    %v2079 = vld [vmem:[#allocation6 + $0xa0] sm:$0xf]
    %v2080 = vld [vmem:[#allocation6 + $0xa4] sm:$0xf]
    %v2081 = vld [vmem:[#allocation6 + $0xa8] sm:$0xf]
    %v2082 = vld [vmem:[#allocation6 + $0xac] sm:$0xf]
    %v2083 = vld [vmem:[#allocation6 + $0xb0] sm:$0xf]
    %v2084 = vld [vmem:[#allocation6 + $0xb4] sm:$0xf]
    %v2085 = vld [vmem:[#allocation6 + $0xb8] sm:$0xf]
    %v2086 = vld [vmem:[#allocation6 + $0xbc] sm:$0xf]
    %v2091 = vunpack.c.l.b16 %v1145
    %v2092 = vunpack.c.l.b16 %v1146
    %v2093 = vunpack.c.l.b16 %v1199
    %v2094 = vunpack.c.l.b16 %v1200
    %v2095 = vpack.c.b16 %v2092, %v2091
    %v2096 = vpack.c.b16 %v2094, %v2093
    %v2101 = vunpack.c.l.b16 %v1147
    %v2102 = vunpack.c.l.b16 %v1201
    %v2103 = vpack.c.b16 %v2101, %v2101
    %v2104 = vpack.c.b16 %v2102, %v2102
    %v2106 = vshrl.u32 %v2095, 16
    %v2108 = vshll.u32 %v2095, 16
    %v2110 = vrot.slane %v2108, 1
    %v2111 = vor.u32 %v2106, %v2110
    %v2113 = vshll.u32 %v2103, 16
    %v2115 = vrot.slane %v2113, 1
    %v2116 = vsel %vm1493, %v2111, %v2115
    %v2118 = vshrl.u32 %v2096, 16
    %v2120 = vshll.u32 %v2096, 16
    %v2122 = vrot.slane %v2120, 1
    %v2123 = vor.u32 %v2118, %v2122
    %v2125 = vshll.u32 %v2104, 16
    %v2127 = vrot.slane %v2125, 1
    %v2128 = vsel %vm1493, %v2123, %v2127
    %v2131 = vrot.slane %v2095, 1
    %v2132 = vrot.slane %v2103, 1
    %v2133 = vsel %vm1910, %v2131, %v2132
    %v2134 = vrot.slane %v2096, 1
    %v2135 = vrot.slane %v2104, 1
    %v2136 = vsel %vm1910, %v2134, %v2135
    %s2139 = scalar_lea.vmem [#allocation6], 192
    %v2140 = vld [vmem:[%s2139] sm:$0xf]
    %v2141 = vld [vmem:[%s2139 + $0x4] sm:$0xf]
    %v2142 = vld [vmem:[%s2139 + $0x8] sm:$0xf]
    %v2143 = vld [vmem:[%s2139 + $0xc] sm:$0xf]
    %v2144 = vld [vmem:[%s2139 + $0x10] sm:$0xf]
    %v2145 = vld [vmem:[%s2139 + $0x14] sm:$0xf]
    %v2146 = vld [vmem:[%s2139 + $0x18] sm:$0xf]
    %v2147 = vld [vmem:[%s2139 + $0x1c] sm:$0xf]
    %v2148 = vld [vmem:[%s2139 + $0x20] sm:$0xf]
    %v2149 = vld [vmem:[%s2139 + $0x24] sm:$0xf]
    %v2150 = vld [vmem:[%s2139 + $0x28] sm:$0xf]
    %v2151 = vld [vmem:[%s2139 + $0x2c] sm:$0xf]
    %v2152 = vld [vmem:[%s2139 + $0x30] sm:$0xf]
    %v2153 = vld [vmem:[%s2139 + $0x34] sm:$0xf]
    %v2154 = vld [vmem:[%s2139 + $0x38] sm:$0xf]
    %v2155 = vld [vmem:[%s2139 + $0x3c] sm:$0xf]
    %v2156 = vld [vmem:[%s2139 + $0x40] sm:$0xf]
    %v2157 = vld [vmem:[%s2139 + $0x44] sm:$0xf]
    %v2158 = vld [vmem:[%s2139 + $0x48] sm:$0xf]
    %v2159 = vld [vmem:[%s2139 + $0x4c] sm:$0xf]
    %v2160 = vld [vmem:[%s2139 + $0x50] sm:$0xf]
    %v2161 = vld [vmem:[%s2139 + $0x54] sm:$0xf]
    %v2162 = vld [vmem:[%s2139 + $0x58] sm:$0xf]
    %v2163 = vld [vmem:[%s2139 + $0x5c] sm:$0xf]
    %v2164 = vld [vmem:[%s2139 + $0x60] sm:$0xf]
    %v2165 = vld [vmem:[%s2139 + $0x64] sm:$0xf]
    %v2166 = vld [vmem:[%s2139 + $0x68] sm:$0xf]
    %v2167 = vld [vmem:[%s2139 + $0x6c] sm:$0xf]
    %v2168 = vld [vmem:[%s2139 + $0x70] sm:$0xf]
    %v2169 = vld [vmem:[%s2139 + $0x74] sm:$0xf]
    %v2170 = vld [vmem:[%s2139 + $0x78] sm:$0xf]
    %v2171 = vld [vmem:[%s2139 + $0x7c] sm:$0xf]
    %v2172 = vld [vmem:[%s2139 + $0x80] sm:$0xf]
    %v2173 = vld [vmem:[%s2139 + $0x84] sm:$0xf]
    %v2174 = vld [vmem:[%s2139 + $0x88] sm:$0xf]
    %v2175 = vld [vmem:[%s2139 + $0x8c] sm:$0xf]
    %v2176 = vld [vmem:[%s2139 + $0x90] sm:$0xf]
    %v2177 = vld [vmem:[%s2139 + $0x94] sm:$0xf]
    %v2178 = vld [vmem:[%s2139 + $0x98] sm:$0xf]
    %v2179 = vld [vmem:[%s2139 + $0x9c] sm:$0xf]
    %v2180 = vld [vmem:[%s2139 + $0xa0] sm:$0xf]
    %v2181 = vld [vmem:[%s2139 + $0xa4] sm:$0xf]
    %v2182 = vld [vmem:[%s2139 + $0xa8] sm:$0xf]
    %v2183 = vld [vmem:[%s2139 + $0xac] sm:$0xf]
    %v2184 = vld [vmem:[%s2139 + $0xb0] sm:$0xf]
    %v2185 = vld [vmem:[%s2139 + $0xb4] sm:$0xf]
    %v2186 = vld [vmem:[%s2139 + $0xb8] sm:$0xf]
    %v2187 = vld [vmem:[%s2139 + $0xbc] sm:$0xf]
    %v2236 = vunpack.c.l.b16 %v2140
    %v2237 = vunpack.c.l.b16 %v2141
    %v2238 = vunpack.c.l.b16 %v2142
    %v2239 = vunpack.c.l.b16 %v2143
    %v2240 = vunpack.c.l.b16 %v2144
    %v2241 = vunpack.c.l.b16 %v2145
    %v2242 = vunpack.c.l.b16 %v2146
    %v2243 = vunpack.c.l.b16 %v2147
    %v2244 = vunpack.c.l.b16 %v2148
    %v2245 = vunpack.c.l.b16 %v2149
    %v2246 = vunpack.c.l.b16 %v2150
    %v2247 = vunpack.c.l.b16 %v2151
    %v2248 = vunpack.c.l.b16 %v2152
    %v2249 = vunpack.c.l.b16 %v2153
    %v2250 = vunpack.c.l.b16 %v2154
    %v2251 = vunpack.c.l.b16 %v2155
    %v2252 = vunpack.c.l.b16 %v2156
    %v2253 = vunpack.c.l.b16 %v2157
    %v2254 = vunpack.c.l.b16 %v2158
    %v2255 = vunpack.c.l.b16 %v2159
    %v2256 = vunpack.c.l.b16 %v2160
    %v2257 = vunpack.c.l.b16 %v2161
    %v2258 = vunpack.c.l.b16 %v2162
    %v2259 = vunpack.c.l.b16 %v2163
    %v2260 = vunpack.c.l.b16 %v2164
    %v2261 = vunpack.c.l.b16 %v2165
    %v2262 = vunpack.c.l.b16 %v2166
    %v2263 = vunpack.c.l.b16 %v2167
    %v2264 = vunpack.c.l.b16 %v2168
    %v2265 = vunpack.c.l.b16 %v2169
    %v2266 = vunpack.c.l.b16 %v2170
    %v2267 = vunpack.c.l.b16 %v2171
    %v2268 = vunpack.c.l.b16 %v2172
    %v2269 = vunpack.c.l.b16 %v2173
    %v2270 = vunpack.c.l.b16 %v2174
    %v2271 = vunpack.c.l.b16 %v2175
    %v2272 = vunpack.c.l.b16 %v2176
    %v2273 = vunpack.c.l.b16 %v2177
    %v2274 = vunpack.c.l.b16 %v2178
    %v2275 = vunpack.c.l.b16 %v2179
    %v2276 = vunpack.c.l.b16 %v2180
    %v2277 = vunpack.c.l.b16 %v2181
    %v2278 = vunpack.c.l.b16 %v2182
    %v2279 = vunpack.c.l.b16 %v2183
    %v2280 = vunpack.c.l.b16 %v2184
    %v2281 = vunpack.c.l.b16 %v2185
    %v2282 = vunpack.c.l.b16 %v2186
    %v2283 = vunpack.c.l.b16 %v2187
    %v2284 = vpack.c.b16 %v2237, %v2236
    %v2285 = vpack.c.b16 %v2239, %v2238
    %v2286 = vpack.c.b16 %v2241, %v2240
    %v2287 = vpack.c.b16 %v2243, %v2242
    %v2288 = vpack.c.b16 %v2245, %v2244
    %v2289 = vpack.c.b16 %v2247, %v2246
    %v2290 = vpack.c.b16 %v2249, %v2248
    %v2291 = vpack.c.b16 %v2251, %v2250
    %v2292 = vpack.c.b16 %v2253, %v2252
    %v2293 = vpack.c.b16 %v2255, %v2254
    %v2294 = vpack.c.b16 %v2257, %v2256
    %v2295 = vpack.c.b16 %v2259, %v2258
    %v2296 = vpack.c.b16 %v2261, %v2260
    %v2297 = vpack.c.b16 %v2263, %v2262
    %v2298 = vpack.c.b16 %v2265, %v2264
    %v2299 = vpack.c.b16 %v2267, %v2266
    %v2300 = vpack.c.b16 %v2269, %v2268
    %v2301 = vpack.c.b16 %v2271, %v2270
    %v2302 = vpack.c.b16 %v2273, %v2272
    %v2303 = vpack.c.b16 %v2275, %v2274
    %v2304 = vpack.c.b16 %v2277, %v2276
    %v2305 = vpack.c.b16 %v2279, %v2278
    %v2306 = vpack.c.b16 %v2281, %v2280
    %v2307 = vpack.c.b16 %v2283, %v2282
    %2332 = vmatpush.bf16.msra.mxu0 %v2291
    %2333 = vmatpush.bf16.msra.mxu0 %v2290
    %2334 = vmatpush.bf16.msra.mxu0 %v2289
    %2335 = vmatpush.bf16.msra.mxu0 %v2288
    %2336 = vmatpush.bf16.msra.mxu0 %v2287
    %2337 = vmatpush.bf16.msra.mxu0 %v2286
    %2338 = vmatpush.bf16.msra.mxu0 %v2285
    %2339 = vmatpush.bf16.msra.mxu0 %v2284
    %2340 = vmatmul.bf16.gmra.mxu0 %v1334
    %v2341 = vpop.f32.mrf.mxu0
    %v2342 = vadd.f32 0.0, %v2341
    %v2343 = vpop.f32.mrf.mxu0
    %v2344 = vadd.f32 0.0, %v2343
    %2345 = vmatmul.bf16.gmra.mxu0 %v1335
    %v2346 = vpop.f32.mrf.mxu0
    %v2347 = vadd.f32 0.0, %v2346
    %v2348 = vpop.f32.mrf.mxu0
    %v2349 = vadd.f32 0.0, %v2348
    %2350 = vmatmul.bf16.gmra.mxu0 %v1336
    %v2351 = vpop.f32.mrf.mxu0
    %v2352 = vadd.f32 0.0, %v2351
    %v2353 = vpop.f32.mrf.mxu0
    %v2354 = vadd.f32 0.0, %v2353
    %2355 = vmatmul.bf16.gmra.mxu0 %v1337
    %v2356 = vpop.f32.mrf.mxu0
    %v2357 = vadd.f32 0.0, %v2356
    %v2358 = vpop.f32.mrf.mxu0
    %v2359 = vadd.f32 0.0, %v2358
    %2360 = vmatmul.bf16.gmra.mxu0 %v1338
    %v2361 = vpop.f32.mrf.mxu0
    %v2362 = vadd.f32 0.0, %v2361
    %v2363 = vpop.f32.mrf.mxu0
    %v2364 = vadd.f32 0.0, %v2363
    %2365 = vmatmul.bf16.gmra.mxu0 %v1339
    %v2366 = vpop.f32.mrf.mxu0
    %v2367 = vadd.f32 0.0, %v2366
    %v2368 = vpop.f32.mrf.mxu0
    %v2369 = vadd.f32 0.0, %v2368
    %2370 = vmatmul.bf16.gmra.mxu0 %v1340
    %v2371 = vpop.f32.mrf.mxu0
    %v2372 = vadd.f32 0.0, %v2371
    %v2373 = vpop.f32.mrf.mxu0
    %v2374 = vadd.f32 0.0, %v2373
    %2375 = vmatmul.bf16.gmra.mxu0 %v1341
    %v2376 = vpop.f32.mrf.mxu0
    %v2377 = vadd.f32 0.0, %v2376
    %v2378 = vpop.f32.mrf.mxu0
    %v2379 = vadd.f32 0.0, %v2378
    %2380 = vmatmul.bf16.gmra.mxu0 %v1342
    %v2381 = vpop.f32.mrf.mxu0
    %v2382 = vadd.f32 0.0, %v2381
    %v2383 = vpop.f32.mrf.mxu0
    %v2384 = vadd.f32 0.0, %v2383
    %2385 = vmatmul.bf16.gmra.mxu0 %v1343
    %v2386 = vpop.f32.mrf.mxu0
    %v2387 = vadd.f32 0.0, %v2386
    %v2388 = vpop.f32.mrf.mxu0
    %v2389 = vadd.f32 0.0, %v2388
    %2390 = vmatmul.bf16.gmra.mxu0 %v1344
    %v2391 = vpop.f32.mrf.mxu0
    %v2392 = vadd.f32 0.0, %v2391
    %v2393 = vpop.f32.mrf.mxu0
    %v2394 = vadd.f32 0.0, %v2393
    %2395 = vmatmul.bf16.gmra.mxu0 %v1345
    %v2396 = vpop.f32.mrf.mxu0
    %v2397 = vadd.f32 0.0, %v2396
    %v2398 = vpop.f32.mrf.mxu0
    %v2399 = vadd.f32 0.0, %v2398
    %2400 = vmatmul.bf16.gmra.mxu0 %v1346
    %v2401 = vpop.f32.mrf.mxu0
    %v2402 = vadd.f32 0.0, %v2401
    %v2403 = vpop.f32.mrf.mxu0
    %v2404 = vadd.f32 0.0, %v2403
    %2405 = vmatmul.bf16.gmra.mxu0 %v1347
    %v2406 = vpop.f32.mrf.mxu0
    %v2407 = vadd.f32 0.0, %v2406
    %v2408 = vpop.f32.mrf.mxu0
    %v2409 = vadd.f32 0.0, %v2408
    %2410 = vmatmul.bf16.gmra.mxu0 %v1348
    %v2411 = vpop.f32.mrf.mxu0
    %v2412 = vadd.f32 0.0, %v2411
    %v2413 = vpop.f32.mrf.mxu0
    %v2414 = vadd.f32 0.0, %v2413
    %2415 = vmatmul.bf16.gmra.mxu0 %v2095
    %v2416 = vpop.f32.mrf.mxu0
    %v2417 = vadd.f32 0.0, %v2416
    %v2418 = vpop.f32.mrf.mxu0
    %v2419 = vadd.f32 0.0, %v2418
    %2420 = vmatmul.bf16.gmra.mxu0 %v1350
    %v2421 = vpop.f32.mrf.mxu0
    %v2422 = vadd.f32 0.0, %v2421
    %v2423 = vpop.f32.mrf.mxu0
    %v2424 = vadd.f32 0.0, %v2423
    %2425 = vmatmul.bf16.gmra.mxu0 %v1351
    %v2426 = vpop.f32.mrf.mxu0
    %v2427 = vadd.f32 0.0, %v2426
    %v2428 = vpop.f32.mrf.mxu0
    %v2429 = vadd.f32 0.0, %v2428
    %2430 = vmatmul.bf16.gmra.mxu0 %v1352
    %v2431 = vpop.f32.mrf.mxu0
    %v2432 = vadd.f32 0.0, %v2431
    %v2433 = vpop.f32.mrf.mxu0
    %v2434 = vadd.f32 0.0, %v2433
    %2435 = vmatmul.bf16.gmra.mxu0 %v1353
    %v2436 = vpop.f32.mrf.mxu0
    %v2437 = vadd.f32 0.0, %v2436
    %v2438 = vpop.f32.mrf.mxu0
    %v2439 = vadd.f32 0.0, %v2438
    %2440 = vmatmul.bf16.gmra.mxu0 %v1354
    %v2441 = vpop.f32.mrf.mxu0
    %v2442 = vadd.f32 0.0, %v2441
    %v2443 = vpop.f32.mrf.mxu0
    %v2444 = vadd.f32 0.0, %v2443
    %2445 = vmatmul.bf16.gmra.mxu0 %v1355
    %v2446 = vpop.f32.mrf.mxu0
    %v2447 = vadd.f32 0.0, %v2446
    %v2448 = vpop.f32.mrf.mxu0
    %v2449 = vadd.f32 0.0, %v2448
    %2450 = vmatmul.bf16.gmra.mxu0 %v1356
    %v2451 = vpop.f32.mrf.mxu0
    %v2452 = vadd.f32 0.0, %v2451
    %v2453 = vpop.f32.mrf.mxu0
    %v2454 = vadd.f32 0.0, %v2453
    %2455 = vmatmul.bf16.gmra.mxu0 %v1357
    %v2456 = vpop.f32.mrf.mxu0
    %v2457 = vadd.f32 0.0, %v2456
    %v2458 = vpop.f32.mrf.mxu0
    %v2459 = vadd.f32 0.0, %v2458
    %2460 = vmatmul.bf16.gmra.mxu0 %v1358
    %v2461 = vpop.f32.mrf.mxu0
    %v2462 = vadd.f32 0.0, %v2461
    %v2463 = vpop.f32.mrf.mxu0
    %v2464 = vadd.f32 0.0, %v2463
    %2465 = vmatmul.bf16.gmra.mxu0 %v1359
    %v2466 = vpop.f32.mrf.mxu0
    %v2467 = vadd.f32 0.0, %v2466
    %v2468 = vpop.f32.mrf.mxu0
    %v2469 = vadd.f32 0.0, %v2468
    %2470 = vmatmul.bf16.gmra.mxu0 %v1360
    %v2471 = vpop.f32.mrf.mxu0
    %v2472 = vadd.f32 0.0, %v2471
    %v2473 = vpop.f32.mrf.mxu0
    %v2474 = vadd.f32 0.0, %v2473
    %2475 = vmatmul.bf16.gmra.mxu0 %v1361
    %v2476 = vpop.f32.mrf.mxu0
    %v2477 = vadd.f32 0.0, %v2476
    %v2478 = vpop.f32.mrf.mxu0
    %v2479 = vadd.f32 0.0, %v2478
    %2480 = vmatmul.bf16.gmra.mxu0 %v1362
    %v2481 = vpop.f32.mrf.mxu0
    %v2482 = vadd.f32 0.0, %v2481
    %v2483 = vpop.f32.mrf.mxu0
    %v2484 = vadd.f32 0.0, %v2483
    %2485 = vmatmul.bf16.gmra.mxu0 %v1363
    %v2486 = vpop.f32.mrf.mxu0
    %v2487 = vadd.f32 0.0, %v2486
    %v2488 = vpop.f32.mrf.mxu0
    %v2489 = vadd.f32 0.0, %v2488
    %2490 = vmatmul.bf16.gmra.mxu0 %v1364
    %v2491 = vpop.f32.mrf.mxu0
    %v2492 = vadd.f32 0.0, %v2491
    %v2493 = vpop.f32.mrf.mxu0
    %v2494 = vadd.f32 0.0, %v2493
    %2495 = vmatmul.bf16.gmra.mxu0 %v2096
    %v2496 = vpop.f32.mrf.mxu0
    %v2497 = vadd.f32 0.0, %v2496
    %v2498 = vpop.f32.mrf.mxu0
    %v2499 = vadd.f32 0.0, %v2498
    %2500 = vdwg.mxu0
    %2501 = vmatpush.bf16.msra.mxu0 %v2299
    %2502 = vmatpush.bf16.msra.mxu0 %v2298
    %2503 = vmatpush.bf16.msra.mxu0 %v2297
    %2504 = vmatpush.bf16.msra.mxu0 %v2296
    %2505 = vmatpush.bf16.msra.mxu0 %v2295
    %2506 = vmatpush.bf16.msra.mxu0 %v2294
    %2507 = vmatpush.bf16.msra.mxu0 %v2293
    %2508 = vmatpush.bf16.msra.mxu0 %v2292
    %2509 = vmatmul.bf16.gmra.mxu0 %v1517
    %v2510 = vpop.f32.mrf.mxu0
    %v2511 = vadd.f32 %v2342, %v2510
    %v2512 = vpop.f32.mrf.mxu0
    %v2513 = vadd.f32 %v2344, %v2512
    %2514 = vmatmul.bf16.gmra.mxu0 %v1529
    %v2515 = vpop.f32.mrf.mxu0
    %v2516 = vadd.f32 %v2347, %v2515
    %v2517 = vpop.f32.mrf.mxu0
    %v2518 = vadd.f32 %v2349, %v2517
    %2519 = vmatmul.bf16.gmra.mxu0 %v1541
    %v2520 = vpop.f32.mrf.mxu0
    %v2521 = vadd.f32 %v2352, %v2520
    %v2522 = vpop.f32.mrf.mxu0
    %v2523 = vadd.f32 %v2354, %v2522
    %2524 = vmatmul.bf16.gmra.mxu0 %v1553
    %v2525 = vpop.f32.mrf.mxu0
    %v2526 = vadd.f32 %v2357, %v2525
    %v2527 = vpop.f32.mrf.mxu0
    %v2528 = vadd.f32 %v2359, %v2527
    %2529 = vmatmul.bf16.gmra.mxu0 %v1565
    %v2530 = vpop.f32.mrf.mxu0
    %v2531 = vadd.f32 %v2362, %v2530
    %v2532 = vpop.f32.mrf.mxu0
    %v2533 = vadd.f32 %v2364, %v2532
    %2534 = vmatmul.bf16.gmra.mxu0 %v1577
    %v2535 = vpop.f32.mrf.mxu0
    %v2536 = vadd.f32 %v2367, %v2535
    %v2537 = vpop.f32.mrf.mxu0
    %v2538 = vadd.f32 %v2369, %v2537
    %2539 = vmatmul.bf16.gmra.mxu0 %v1589
    %v2540 = vpop.f32.mrf.mxu0
    %v2541 = vadd.f32 %v2372, %v2540
    %v2542 = vpop.f32.mrf.mxu0
    %v2543 = vadd.f32 %v2374, %v2542
    %2544 = vmatmul.bf16.gmra.mxu0 %v1601
    %v2545 = vpop.f32.mrf.mxu0
    %v2546 = vadd.f32 %v2377, %v2545
    %v2547 = vpop.f32.mrf.mxu0
    %v2548 = vadd.f32 %v2379, %v2547
    %2549 = vmatmul.bf16.gmra.mxu0 %v1613
    %v2550 = vpop.f32.mrf.mxu0
    %v2551 = vadd.f32 %v2382, %v2550
    %v2552 = vpop.f32.mrf.mxu0
    %v2553 = vadd.f32 %v2384, %v2552
    %2554 = vmatmul.bf16.gmra.mxu0 %v1625
    %v2555 = vpop.f32.mrf.mxu0
    %v2556 = vadd.f32 %v2387, %v2555
    %v2557 = vpop.f32.mrf.mxu0
    %v2558 = vadd.f32 %v2389, %v2557
    %2559 = vmatmul.bf16.gmra.mxu0 %v1637
    %v2560 = vpop.f32.mrf.mxu0
    %v2561 = vadd.f32 %v2392, %v2560
    %v2562 = vpop.f32.mrf.mxu0
    %v2563 = vadd.f32 %v2394, %v2562
    %2564 = vmatmul.bf16.gmra.mxu0 %v1649
    %v2565 = vpop.f32.mrf.mxu0
    %v2566 = vadd.f32 %v2397, %v2565
    %v2567 = vpop.f32.mrf.mxu0
    %v2568 = vadd.f32 %v2399, %v2567
    %2569 = vmatmul.bf16.gmra.mxu0 %v1661
    %v2570 = vpop.f32.mrf.mxu0
    %v2571 = vadd.f32 %v2402, %v2570
    %v2572 = vpop.f32.mrf.mxu0
    %v2573 = vadd.f32 %v2404, %v2572
    %2574 = vmatmul.bf16.gmra.mxu0 %v1673
    %v2575 = vpop.f32.mrf.mxu0
    %v2576 = vadd.f32 %v2407, %v2575
    %v2577 = vpop.f32.mrf.mxu0
    %v2578 = vadd.f32 %v2409, %v2577
    %2579 = vmatmul.bf16.gmra.mxu0 %v1685
    %v2580 = vpop.f32.mrf.mxu0
    %v2581 = vadd.f32 %v2412, %v2580
    %v2582 = vpop.f32.mrf.mxu0
    %v2583 = vadd.f32 %v2414, %v2582
    %2584 = vmatmul.bf16.gmra.mxu0 %v2116
    %v2585 = vpop.f32.mrf.mxu0
    %v2586 = vadd.f32 %v2417, %v2585
    %v2587 = vpop.f32.mrf.mxu0
    %v2588 = vadd.f32 %v2419, %v2587
    %2589 = vmatmul.bf16.gmra.mxu0 %v1709
    %v2590 = vpop.f32.mrf.mxu0
    %v2591 = vadd.f32 %v2422, %v2590
    %v2592 = vpop.f32.mrf.mxu0
    %v2593 = vadd.f32 %v2424, %v2592
    %2594 = vmatmul.bf16.gmra.mxu0 %v1721
    %v2595 = vpop.f32.mrf.mxu0
    %v2596 = vadd.f32 %v2427, %v2595
    %v2597 = vpop.f32.mrf.mxu0
    %v2598 = vadd.f32 %v2429, %v2597
    %2599 = vmatmul.bf16.gmra.mxu0 %v1733
    %v2600 = vpop.f32.mrf.mxu0
    %v2601 = vadd.f32 %v2432, %v2600
    %v2602 = vpop.f32.mrf.mxu0
    %v2603 = vadd.f32 %v2434, %v2602
    %2604 = vmatmul.bf16.gmra.mxu0 %v1745
    %v2605 = vpop.f32.mrf.mxu0
    %v2606 = vadd.f32 %v2437, %v2605
    %v2607 = vpop.f32.mrf.mxu0
    %v2608 = vadd.f32 %v2439, %v2607
    %2609 = vmatmul.bf16.gmra.mxu0 %v1757
    %v2610 = vpop.f32.mrf.mxu0
    %v2611 = vadd.f32 %v2442, %v2610
    %v2612 = vpop.f32.mrf.mxu0
    %v2613 = vadd.f32 %v2444, %v2612
    %2614 = vmatmul.bf16.gmra.mxu0 %v1769
    %v2615 = vpop.f32.mrf.mxu0
    %v2616 = vadd.f32 %v2447, %v2615
    %v2617 = vpop.f32.mrf.mxu0
    %v2618 = vadd.f32 %v2449, %v2617
    %2619 = vmatmul.bf16.gmra.mxu0 %v1781
    %v2620 = vpop.f32.mrf.mxu0
    %v2621 = vadd.f32 %v2452, %v2620
    %v2622 = vpop.f32.mrf.mxu0
    %v2623 = vadd.f32 %v2454, %v2622
    %2624 = vmatmul.bf16.gmra.mxu0 %v1793
    %v2625 = vpop.f32.mrf.mxu0
    %v2626 = vadd.f32 %v2457, %v2625
    %v2627 = vpop.f32.mrf.mxu0
    %v2628 = vadd.f32 %v2459, %v2627
    %2629 = vmatmul.bf16.gmra.mxu0 %v1805
    %v2630 = vpop.f32.mrf.mxu0
    %v2631 = vadd.f32 %v2462, %v2630
    %v2632 = vpop.f32.mrf.mxu0
    %v2633 = vadd.f32 %v2464, %v2632
    %2634 = vmatmul.bf16.gmra.mxu0 %v1817
    %v2635 = vpop.f32.mrf.mxu0
    %v2636 = vadd.f32 %v2467, %v2635
    %v2637 = vpop.f32.mrf.mxu0
    %v2638 = vadd.f32 %v2469, %v2637
    %2639 = vmatmul.bf16.gmra.mxu0 %v1829
    %v2640 = vpop.f32.mrf.mxu0
    %v2641 = vadd.f32 %v2472, %v2640
    %v2642 = vpop.f32.mrf.mxu0
    %v2643 = vadd.f32 %v2474, %v2642
    %2644 = vmatmul.bf16.gmra.mxu0 %v1841
    %v2645 = vpop.f32.mrf.mxu0
    %v2646 = vadd.f32 %v2477, %v2645
    %v2647 = vpop.f32.mrf.mxu0
    %v2648 = vadd.f32 %v2479, %v2647
    %2649 = vmatmul.bf16.gmra.mxu0 %v1853
    %v2650 = vpop.f32.mrf.mxu0
    %v2651 = vadd.f32 %v2482, %v2650
    %v2652 = vpop.f32.mrf.mxu0
    %v2653 = vadd.f32 %v2484, %v2652
    %2654 = vmatmul.bf16.gmra.mxu0 %v1865
    %v2655 = vpop.f32.mrf.mxu0
    %v2656 = vadd.f32 %v2487, %v2655
    %v2657 = vpop.f32.mrf.mxu0
    %v2658 = vadd.f32 %v2489, %v2657
    %2659 = vmatmul.bf16.gmra.mxu0 %v1877
    %v2660 = vpop.f32.mrf.mxu0
    %v2661 = vadd.f32 %v2492, %v2660
    %v2662 = vpop.f32.mrf.mxu0
    %v2663 = vadd.f32 %v2494, %v2662
    %2664 = vmatmul.bf16.gmra.mxu0 %v2128
    %v2665 = vpop.f32.mrf.mxu0
    %v2666 = vadd.f32 %v2497, %v2665
    %v2667 = vpop.f32.mrf.mxu0
    %v2668 = vadd.f32 %v2499, %v2667
    %2669 = vdwg.mxu0
    %2670 = vmatpush.bf16.msra.mxu0 %v2307
    %2671 = vmatpush.bf16.msra.mxu0 %v2306
    %2672 = vmatpush.bf16.msra.mxu0 %v2305
    %2673 = vmatpush.bf16.msra.mxu0 %v2304
    %2674 = vmatpush.bf16.msra.mxu0 %v2303
    %2675 = vmatpush.bf16.msra.mxu0 %v2302
    %2676 = vmatpush.bf16.msra.mxu0 %v2301
    %2677 = vmatpush.bf16.msra.mxu0 %v2300
    %2678 = vmatmul.bf16.gmra.mxu0 %v1916
    %v2679 = vpop.f32.mrf.mxu0
    %v2680 = vadd.f32 %v2511, %v2679
    %v2681 = vpop.f32.mrf.mxu0
    %v2682 = vadd.f32 %v2513, %v2681
    %2683 = vmatmul.bf16.gmra.mxu0 %v1919
    %v2684 = vpop.f32.mrf.mxu0
    %v2685 = vadd.f32 %v2516, %v2684
    %v2686 = vpop.f32.mrf.mxu0
    %v2687 = vadd.f32 %v2518, %v2686
    %2688 = vmatmul.bf16.gmra.mxu0 %v1922
    %v2689 = vpop.f32.mrf.mxu0
    %v2690 = vadd.f32 %v2521, %v2689
    %v2691 = vpop.f32.mrf.mxu0
    %v2692 = vadd.f32 %v2523, %v2691
    %2693 = vmatmul.bf16.gmra.mxu0 %v1925
    %v2694 = vpop.f32.mrf.mxu0
    %v2695 = vadd.f32 %v2526, %v2694
    %v2696 = vpop.f32.mrf.mxu0
    %v2697 = vadd.f32 %v2528, %v2696
    %2698 = vmatmul.bf16.gmra.mxu0 %v1928
    %v2699 = vpop.f32.mrf.mxu0
    %v2700 = vadd.f32 %v2531, %v2699
    %v2701 = vpop.f32.mrf.mxu0
    %v2702 = vadd.f32 %v2533, %v2701
    %2703 = vmatmul.bf16.gmra.mxu0 %v1931
    %v2704 = vpop.f32.mrf.mxu0
    %v2705 = vadd.f32 %v2536, %v2704
    %v2706 = vpop.f32.mrf.mxu0
    %v2707 = vadd.f32 %v2538, %v2706
    %2708 = vmatmul.bf16.gmra.mxu0 %v1934
    %v2709 = vpop.f32.mrf.mxu0
    %v2710 = vadd.f32 %v2541, %v2709
    %v2711 = vpop.f32.mrf.mxu0
    %v2712 = vadd.f32 %v2543, %v2711
    %2713 = vmatmul.bf16.gmra.mxu0 %v1937
    %v2714 = vpop.f32.mrf.mxu0
    %v2715 = vadd.f32 %v2546, %v2714
    %v2716 = vpop.f32.mrf.mxu0
    %v2717 = vadd.f32 %v2548, %v2716
    %2718 = vmatmul.bf16.gmra.mxu0 %v1940
    %v2719 = vpop.f32.mrf.mxu0
    %v2720 = vadd.f32 %v2551, %v2719
    %v2721 = vpop.f32.mrf.mxu0
    %v2722 = vadd.f32 %v2553, %v2721
    %2723 = vmatmul.bf16.gmra.mxu0 %v1943
    %v2724 = vpop.f32.mrf.mxu0
    %v2725 = vadd.f32 %v2556, %v2724
    %v2726 = vpop.f32.mrf.mxu0
    %v2727 = vadd.f32 %v2558, %v2726
    %2728 = vmatmul.bf16.gmra.mxu0 %v1946
    %v2729 = vpop.f32.mrf.mxu0
    %v2730 = vadd.f32 %v2561, %v2729
    %v2731 = vpop.f32.mrf.mxu0
    %v2732 = vadd.f32 %v2563, %v2731
    %2733 = vmatmul.bf16.gmra.mxu0 %v1949
    %v2734 = vpop.f32.mrf.mxu0
    %v2735 = vadd.f32 %v2566, %v2734
    %v2736 = vpop.f32.mrf.mxu0
    %v2737 = vadd.f32 %v2568, %v2736
    %2738 = vmatmul.bf16.gmra.mxu0 %v1952
    %v2739 = vpop.f32.mrf.mxu0
    %v2740 = vadd.f32 %v2571, %v2739
    %v2741 = vpop.f32.mrf.mxu0
    %v2742 = vadd.f32 %v2573, %v2741
    %2743 = vmatmul.bf16.gmra.mxu0 %v1955
    %v2744 = vpop.f32.mrf.mxu0
    %v2745 = vadd.f32 %v2576, %v2744
    %v2746 = vpop.f32.mrf.mxu0
    %v2747 = vadd.f32 %v2578, %v2746
    %2748 = vmatmul.bf16.gmra.mxu0 %v1958
    %v2749 = vpop.f32.mrf.mxu0
    %v2750 = vadd.f32 %v2581, %v2749
    %v2751 = vpop.f32.mrf.mxu0
    %v2752 = vadd.f32 %v2583, %v2751
    %2753 = vmatmul.bf16.gmra.mxu0 %v2133
    %v2754 = vpop.f32.mrf.mxu0
    %v2755 = vadd.f32 %v2586, %v2754
    %v2756 = vpop.f32.mrf.mxu0
    %v2757 = vadd.f32 %v2588, %v2756
    %2758 = vmatmul.bf16.gmra.mxu0 %v1964
    %v2759 = vpop.f32.mrf.mxu0
    %v2760 = vadd.f32 %v2591, %v2759
    %v2761 = vpop.f32.mrf.mxu0
    %v2762 = vadd.f32 %v2593, %v2761
    %2763 = vmatmul.bf16.gmra.mxu0 %v1967
    %v2764 = vpop.f32.mrf.mxu0
    %v2765 = vadd.f32 %v2596, %v2764
    %v2766 = vpop.f32.mrf.mxu0
    %v2767 = vadd.f32 %v2598, %v2766
    %2768 = vmatmul.bf16.gmra.mxu0 %v1970
    %v2769 = vpop.f32.mrf.mxu0
    %v2770 = vadd.f32 %v2601, %v2769
    %v2771 = vpop.f32.mrf.mxu0
    %v2772 = vadd.f32 %v2603, %v2771
    %2773 = vmatmul.bf16.gmra.mxu0 %v1973
    %v2774 = vpop.f32.mrf.mxu0
    %v2775 = vadd.f32 %v2606, %v2774
    %v2776 = vpop.f32.mrf.mxu0
    %v2777 = vadd.f32 %v2608, %v2776
    %2778 = vmatmul.bf16.gmra.mxu0 %v1976
    %v2779 = vpop.f32.mrf.mxu0
    %v2780 = vadd.f32 %v2611, %v2779
    %v2781 = vpop.f32.mrf.mxu0
    %v2782 = vadd.f32 %v2613, %v2781
    %2783 = vmatmul.bf16.gmra.mxu0 %v1979
    %v2784 = vpop.f32.mrf.mxu0
    %v2785 = vadd.f32 %v2616, %v2784
    %v2786 = vpop.f32.mrf.mxu0
    %v2787 = vadd.f32 %v2618, %v2786
    %2788 = vmatmul.bf16.gmra.mxu0 %v1982
    %v2789 = vpop.f32.mrf.mxu0
    %v2790 = vadd.f32 %v2621, %v2789
    %v2791 = vpop.f32.mrf.mxu0
    %v2792 = vadd.f32 %v2623, %v2791
    %2793 = vmatmul.bf16.gmra.mxu0 %v1985
    %v2794 = vpop.f32.mrf.mxu0
    %v2795 = vadd.f32 %v2626, %v2794
    %v2796 = vpop.f32.mrf.mxu0
    %v2797 = vadd.f32 %v2628, %v2796
    %2798 = vmatmul.bf16.gmra.mxu0 %v1988
    %v2799 = vpop.f32.mrf.mxu0
    %v2800 = vadd.f32 %v2631, %v2799
    %v2801 = vpop.f32.mrf.mxu0
    %v2802 = vadd.f32 %v2633, %v2801
    %2803 = vmatmul.bf16.gmra.mxu0 %v1991
    %v2804 = vpop.f32.mrf.mxu0
    %v2805 = vadd.f32 %v2636, %v2804
    %v2806 = vpop.f32.mrf.mxu0
    %v2807 = vadd.f32 %v2638, %v2806
    %2808 = vmatmul.bf16.gmra.mxu0 %v1994
    %v2809 = vpop.f32.mrf.mxu0
    %v2810 = vadd.f32 %v2641, %v2809
    %v2811 = vpop.f32.mrf.mxu0
    %v2812 = vadd.f32 %v2643, %v2811
    %2813 = vmatmul.bf16.gmra.mxu0 %v1997
    %v2814 = vpop.f32.mrf.mxu0
    %v2815 = vadd.f32 %v2646, %v2814
    %v2816 = vpop.f32.mrf.mxu0
    %v2817 = vadd.f32 %v2648, %v2816
    %2818 = vmatmul.bf16.gmra.mxu0 %v2000
    %v2819 = vpop.f32.mrf.mxu0
    %v2820 = vadd.f32 %v2651, %v2819
    %v2821 = vpop.f32.mrf.mxu0
    %v2822 = vadd.f32 %v2653, %v2821
    %2823 = vmatmul.bf16.gmra.mxu0 %v2003
    %v2824 = vpop.f32.mrf.mxu0
    %v2825 = vadd.f32 %v2656, %v2824
    %v2826 = vpop.f32.mrf.mxu0
    %v2827 = vadd.f32 %v2658, %v2826
    %2828 = vmatmul.bf16.gmra.mxu0 %v2006
    %v2829 = vpop.f32.mrf.mxu0
    %v2830 = vadd.f32 %v2661, %v2829
    %v2831 = vpop.f32.mrf.mxu0
    %v2832 = vadd.f32 %v2663, %v2831
    %2833 = vmatmul.bf16.gmra.mxu0 %v2136
    %v2834 = vpop.f32.mrf.mxu0
    %v2835 = vadd.f32 %v2666, %v2834
    %v2836 = vpop.f32.mrf.mxu0
    %v2837 = vadd.f32 %v2668, %v2836
    %2838 = vdwg.mxu0
    %v2887 = vunpack.c.l.b16 %v2039
    %v2888 = vunpack.c.l.b16 %v2040
    %v2889 = vunpack.c.l.b16 %v2041
    %v2890 = vunpack.c.l.b16 %v2042
    %v2891 = vunpack.c.l.b16 %v2043
    %v2892 = vunpack.c.l.b16 %v2044
    %v2893 = vunpack.c.l.b16 %v2045
    %v2894 = vunpack.c.l.b16 %v2046
    %v2895 = vunpack.c.l.b16 %v2047
    %v2896 = vunpack.c.l.b16 %v2048
    %v2897 = vunpack.c.l.b16 %v2049
    %v2898 = vunpack.c.l.b16 %v2050
    %v2899 = vunpack.c.l.b16 %v2051
    %v2900 = vunpack.c.l.b16 %v2052
    %v2901 = vunpack.c.l.b16 %v2053
    %v2902 = vunpack.c.l.b16 %v2054
    %v2903 = vunpack.c.l.b16 %v2055
    %v2904 = vunpack.c.l.b16 %v2056
    %v2905 = vunpack.c.l.b16 %v2057
    %v2906 = vunpack.c.l.b16 %v2058
    %v2907 = vunpack.c.l.b16 %v2059
    %v2908 = vunpack.c.l.b16 %v2060
    %v2909 = vunpack.c.l.b16 %v2061
    %v2910 = vunpack.c.l.b16 %v2062
    %v2911 = vunpack.c.l.b16 %v2063
    %v2912 = vunpack.c.l.b16 %v2064
    %v2913 = vunpack.c.l.b16 %v2065
    %v2914 = vunpack.c.l.b16 %v2066
    %v2915 = vunpack.c.l.b16 %v2067
    %v2916 = vunpack.c.l.b16 %v2068
    %v2917 = vunpack.c.l.b16 %v2069
    %v2918 = vunpack.c.l.b16 %v2070
    %v2919 = vunpack.c.l.b16 %v2071
    %v2920 = vunpack.c.l.b16 %v2072
    %v2921 = vunpack.c.l.b16 %v2073
    %v2922 = vunpack.c.l.b16 %v2074
    %v2923 = vunpack.c.l.b16 %v2075
    %v2924 = vunpack.c.l.b16 %v2076
    %v2925 = vunpack.c.l.b16 %v2077
    %v2926 = vunpack.c.l.b16 %v2078
    %v2927 = vunpack.c.l.b16 %v2079
    %v2928 = vunpack.c.l.b16 %v2080
    %v2929 = vunpack.c.l.b16 %v2081
    %v2930 = vunpack.c.l.b16 %v2082
    %v2931 = vunpack.c.l.b16 %v2083
    %v2932 = vunpack.c.l.b16 %v2084
    %v2933 = vunpack.c.l.b16 %v2085
    %v2934 = vunpack.c.l.b16 %v2086
    %v2935 = vpack.c.b16 %v2888, %v2887
    %v2936 = vpack.c.b16 %v2890, %v2889
    %v2937 = vpack.c.b16 %v2892, %v2891
    %v2938 = vpack.c.b16 %v2894, %v2893
    %v2939 = vpack.c.b16 %v2896, %v2895
    %v2940 = vpack.c.b16 %v2898, %v2897
    %v2941 = vpack.c.b16 %v2900, %v2899
    %v2942 = vpack.c.b16 %v2902, %v2901
    %v2943 = vpack.c.b16 %v2904, %v2903
    %v2944 = vpack.c.b16 %v2906, %v2905
    %v2945 = vpack.c.b16 %v2908, %v2907
    %v2946 = vpack.c.b16 %v2910, %v2909
    %v2947 = vpack.c.b16 %v2912, %v2911
    %v2948 = vpack.c.b16 %v2914, %v2913
    %v2949 = vpack.c.b16 %v2916, %v2915
    %v2950 = vpack.c.b16 %v2918, %v2917
    %v2951 = vpack.c.b16 %v2920, %v2919
    %v2952 = vpack.c.b16 %v2922, %v2921
    %v2953 = vpack.c.b16 %v2924, %v2923
    %v2954 = vpack.c.b16 %v2926, %v2925
    %v2955 = vpack.c.b16 %v2928, %v2927
    %v2956 = vpack.c.b16 %v2930, %v2929
    %v2957 = vpack.c.b16 %v2932, %v2931
    %v2958 = vpack.c.b16 %v2934, %v2933
    %2983 = vmatpush.bf16.msra.mxu0 %v2942
    %2984 = vmatpush.bf16.msra.mxu0 %v2941
    %2985 = vmatpush.bf16.msra.mxu0 %v2940
    %2986 = vmatpush.bf16.msra.mxu0 %v2939
    %2987 = vmatpush.bf16.msra.mxu0 %v2938
    %2988 = vmatpush.bf16.msra.mxu0 %v2937
    %2989 = vmatpush.bf16.msra.mxu0 %v2936
    %2990 = vmatpush.bf16.msra.mxu0 %v2935
    %2991 = vmatmul.bf16.gmra.mxu0 %v1333
    %v2992 = vpop.f32.mrf.mxu0
    %v2993 = vadd.f32 %v2680, %v2992
    %v2994 = vpop.f32.mrf.mxu0
    %v2995 = vadd.f32 %v2682, %v2994
    %2996 = vmatmul.bf16.gmra.mxu0 %v1334
    %v2997 = vpop.f32.mrf.mxu0
    %v2998 = vadd.f32 %v2685, %v2997
    %v2999 = vpop.f32.mrf.mxu0
    %v3000 = vadd.f32 %v2687, %v2999
    %3001 = vmatmul.bf16.gmra.mxu0 %v1335
    %v3002 = vpop.f32.mrf.mxu0
    %v3003 = vadd.f32 %v2690, %v3002
    %v3004 = vpop.f32.mrf.mxu0
    %v3005 = vadd.f32 %v2692, %v3004
    %3006 = vmatmul.bf16.gmra.mxu0 %v1336
    %v3007 = vpop.f32.mrf.mxu0
    %v3008 = vadd.f32 %v2695, %v3007
    %v3009 = vpop.f32.mrf.mxu0
    %v3010 = vadd.f32 %v2697, %v3009
    %3011 = vmatmul.bf16.gmra.mxu0 %v1337
    %v3012 = vpop.f32.mrf.mxu0
    %v3013 = vadd.f32 %v2700, %v3012
    %v3014 = vpop.f32.mrf.mxu0
    %v3015 = vadd.f32 %v2702, %v3014
    %3016 = vmatmul.bf16.gmra.mxu0 %v1338
    %v3017 = vpop.f32.mrf.mxu0
    %v3018 = vadd.f32 %v2705, %v3017
    %v3019 = vpop.f32.mrf.mxu0
    %v3020 = vadd.f32 %v2707, %v3019
    %3021 = vmatmul.bf16.gmra.mxu0 %v1339
    %v3022 = vpop.f32.mrf.mxu0
    %v3023 = vadd.f32 %v2710, %v3022
    %v3024 = vpop.f32.mrf.mxu0
    %v3025 = vadd.f32 %v2712, %v3024
    %3026 = vmatmul.bf16.gmra.mxu0 %v1340
    %v3027 = vpop.f32.mrf.mxu0
    %v3028 = vadd.f32 %v2715, %v3027
    %v3029 = vpop.f32.mrf.mxu0
    %v3030 = vadd.f32 %v2717, %v3029
    %3031 = vmatmul.bf16.gmra.mxu0 %v1341
    %v3032 = vpop.f32.mrf.mxu0
    %v3033 = vadd.f32 %v2720, %v3032
    %v3034 = vpop.f32.mrf.mxu0
    %v3035 = vadd.f32 %v2722, %v3034
    %3036 = vmatmul.bf16.gmra.mxu0 %v1342
    %v3037 = vpop.f32.mrf.mxu0
    %v3038 = vadd.f32 %v2725, %v3037
    %v3039 = vpop.f32.mrf.mxu0
    %v3040 = vadd.f32 %v2727, %v3039
    %3041 = vmatmul.bf16.gmra.mxu0 %v1343
    %v3042 = vpop.f32.mrf.mxu0
    %v3043 = vadd.f32 %v2730, %v3042
    %v3044 = vpop.f32.mrf.mxu0
    %v3045 = vadd.f32 %v2732, %v3044
    %3046 = vmatmul.bf16.gmra.mxu0 %v1344
    %v3047 = vpop.f32.mrf.mxu0
    %v3048 = vadd.f32 %v2735, %v3047
    %v3049 = vpop.f32.mrf.mxu0
    %v3050 = vadd.f32 %v2737, %v3049
    %3051 = vmatmul.bf16.gmra.mxu0 %v1345
    %v3052 = vpop.f32.mrf.mxu0
    %v3053 = vadd.f32 %v2740, %v3052
    %v3054 = vpop.f32.mrf.mxu0
    %v3055 = vadd.f32 %v2742, %v3054
    %3056 = vmatmul.bf16.gmra.mxu0 %v1346
    %v3057 = vpop.f32.mrf.mxu0
    %v3058 = vadd.f32 %v2745, %v3057
    %v3059 = vpop.f32.mrf.mxu0
    %v3060 = vadd.f32 %v2747, %v3059
    %3061 = vmatmul.bf16.gmra.mxu0 %v1347
    %v3062 = vpop.f32.mrf.mxu0
    %v3063 = vadd.f32 %v2750, %v3062
    %v3064 = vpop.f32.mrf.mxu0
    %v3065 = vadd.f32 %v2752, %v3064
    %3066 = vmatmul.bf16.gmra.mxu0 %v1348
    %v3067 = vpop.f32.mrf.mxu0
    %v3068 = vadd.f32 %v2755, %v3067
    %v3069 = vpop.f32.mrf.mxu0
    %v3070 = vadd.f32 %v2757, %v3069
    %3071 = vmatmul.bf16.gmra.mxu0 %v1349
    %v3072 = vpop.f32.mrf.mxu0
    %v3073 = vadd.f32 %v2760, %v3072
    %v3074 = vpop.f32.mrf.mxu0
    %v3075 = vadd.f32 %v2762, %v3074
    %3076 = vmatmul.bf16.gmra.mxu0 %v1350
    %v3077 = vpop.f32.mrf.mxu0
    %v3078 = vadd.f32 %v2765, %v3077
    %v3079 = vpop.f32.mrf.mxu0
    %v3080 = vadd.f32 %v2767, %v3079
    %3081 = vmatmul.bf16.gmra.mxu0 %v1351
    %v3082 = vpop.f32.mrf.mxu0
    %v3083 = vadd.f32 %v2770, %v3082
    %v3084 = vpop.f32.mrf.mxu0
    %v3085 = vadd.f32 %v2772, %v3084
    %3086 = vmatmul.bf16.gmra.mxu0 %v1352
    %v3087 = vpop.f32.mrf.mxu0
    %v3088 = vadd.f32 %v2775, %v3087
    %v3089 = vpop.f32.mrf.mxu0
    %v3090 = vadd.f32 %v2777, %v3089
    %3091 = vmatmul.bf16.gmra.mxu0 %v1353
    %v3092 = vpop.f32.mrf.mxu0
    %v3093 = vadd.f32 %v2780, %v3092
    %v3094 = vpop.f32.mrf.mxu0
    %v3095 = vadd.f32 %v2782, %v3094
    %3096 = vmatmul.bf16.gmra.mxu0 %v1354
    %v3097 = vpop.f32.mrf.mxu0
    %v3098 = vadd.f32 %v2785, %v3097
    %v3099 = vpop.f32.mrf.mxu0
    %v3100 = vadd.f32 %v2787, %v3099
    %3101 = vmatmul.bf16.gmra.mxu0 %v1355
    %v3102 = vpop.f32.mrf.mxu0
    %v3103 = vadd.f32 %v2790, %v3102
    %v3104 = vpop.f32.mrf.mxu0
    %v3105 = vadd.f32 %v2792, %v3104
    %3106 = vmatmul.bf16.gmra.mxu0 %v1356
    %v3107 = vpop.f32.mrf.mxu0
    %v3108 = vadd.f32 %v2795, %v3107
    %v3109 = vpop.f32.mrf.mxu0
    %v3110 = vadd.f32 %v2797, %v3109
    %3111 = vmatmul.bf16.gmra.mxu0 %v1357
    %v3112 = vpop.f32.mrf.mxu0
    %v3113 = vadd.f32 %v2800, %v3112
    %v3114 = vpop.f32.mrf.mxu0
    %v3115 = vadd.f32 %v2802, %v3114
    %3116 = vmatmul.bf16.gmra.mxu0 %v1358
    %v3117 = vpop.f32.mrf.mxu0
    %v3118 = vadd.f32 %v2805, %v3117
    %v3119 = vpop.f32.mrf.mxu0
    %v3120 = vadd.f32 %v2807, %v3119
    %3121 = vmatmul.bf16.gmra.mxu0 %v1359
    %v3122 = vpop.f32.mrf.mxu0
    %v3123 = vadd.f32 %v2810, %v3122
    %v3124 = vpop.f32.mrf.mxu0
    %v3125 = vadd.f32 %v2812, %v3124
    %3126 = vmatmul.bf16.gmra.mxu0 %v1360
    %v3127 = vpop.f32.mrf.mxu0
    %v3128 = vadd.f32 %v2815, %v3127
    %v3129 = vpop.f32.mrf.mxu0
    %v3130 = vadd.f32 %v2817, %v3129
    %3131 = vmatmul.bf16.gmra.mxu0 %v1361
    %v3132 = vpop.f32.mrf.mxu0
    %v3133 = vadd.f32 %v2820, %v3132
    %v3134 = vpop.f32.mrf.mxu0
    %v3135 = vadd.f32 %v2822, %v3134
    %3136 = vmatmul.bf16.gmra.mxu0 %v1362
    %v3137 = vpop.f32.mrf.mxu0
    %v3138 = vadd.f32 %v2825, %v3137
    %v3139 = vpop.f32.mrf.mxu0
    %v3140 = vadd.f32 %v2827, %v3139
    %3141 = vmatmul.bf16.gmra.mxu0 %v1363
    %v3142 = vpop.f32.mrf.mxu0
    %v3143 = vadd.f32 %v2830, %v3142
    %v3144 = vpop.f32.mrf.mxu0
    %v3145 = vadd.f32 %v2832, %v3144
    %3146 = vmatmul.bf16.gmra.mxu0 %v1364
    %v3147 = vpop.f32.mrf.mxu0
    %v3148 = vadd.f32 %v2835, %v3147
    %v3149 = vpop.f32.mrf.mxu0
    %v3150 = vadd.f32 %v2837, %v3149
    %3151 = vdwg.mxu0
    %3152 = vmatpush.bf16.msra.mxu0 %v2950
    %3153 = vmatpush.bf16.msra.mxu0 %v2949
    %3154 = vmatpush.bf16.msra.mxu0 %v2948
    %3155 = vmatpush.bf16.msra.mxu0 %v2947
    %3156 = vmatpush.bf16.msra.mxu0 %v2946
    %3157 = vmatpush.bf16.msra.mxu0 %v2945
    %3158 = vmatpush.bf16.msra.mxu0 %v2944
    %3159 = vmatpush.bf16.msra.mxu0 %v2943
    %3160 = vmatmul.bf16.gmra.mxu0 %v1505
    %v3161 = vpop.f32.mrf.mxu0
    %v3162 = vadd.f32 %v2993, %v3161
    %v3163 = vpop.f32.mrf.mxu0
    %v3164 = vadd.f32 %v2995, %v3163
    %3165 = vmatmul.bf16.gmra.mxu0 %v1517
    %v3166 = vpop.f32.mrf.mxu0
    %v3167 = vadd.f32 %v2998, %v3166
    %v3168 = vpop.f32.mrf.mxu0
    %v3169 = vadd.f32 %v3000, %v3168
    %3170 = vmatmul.bf16.gmra.mxu0 %v1529
    %v3171 = vpop.f32.mrf.mxu0
    %v3172 = vadd.f32 %v3003, %v3171
    %v3173 = vpop.f32.mrf.mxu0
    %v3174 = vadd.f32 %v3005, %v3173
    %3175 = vmatmul.bf16.gmra.mxu0 %v1541
    %v3176 = vpop.f32.mrf.mxu0
    %v3177 = vadd.f32 %v3008, %v3176
    %v3178 = vpop.f32.mrf.mxu0
    %v3179 = vadd.f32 %v3010, %v3178
    %3180 = vmatmul.bf16.gmra.mxu0 %v1553
    %v3181 = vpop.f32.mrf.mxu0
    %v3182 = vadd.f32 %v3013, %v3181
    %v3183 = vpop.f32.mrf.mxu0
    %v3184 = vadd.f32 %v3015, %v3183
    %3185 = vmatmul.bf16.gmra.mxu0 %v1565
    %v3186 = vpop.f32.mrf.mxu0
    %v3187 = vadd.f32 %v3018, %v3186
    %v3188 = vpop.f32.mrf.mxu0
    %v3189 = vadd.f32 %v3020, %v3188
    %3190 = vmatmul.bf16.gmra.mxu0 %v1577
    %v3191 = vpop.f32.mrf.mxu0
    %v3192 = vadd.f32 %v3023, %v3191
    %v3193 = vpop.f32.mrf.mxu0
    %v3194 = vadd.f32 %v3025, %v3193
    %3195 = vmatmul.bf16.gmra.mxu0 %v1589
    %v3196 = vpop.f32.mrf.mxu0
    %v3197 = vadd.f32 %v3028, %v3196
    %v3198 = vpop.f32.mrf.mxu0
    %v3199 = vadd.f32 %v3030, %v3198
    %3200 = vmatmul.bf16.gmra.mxu0 %v1601
    %v3201 = vpop.f32.mrf.mxu0
    %v3202 = vadd.f32 %v3033, %v3201
    %v3203 = vpop.f32.mrf.mxu0
    %v3204 = vadd.f32 %v3035, %v3203
    %3205 = vmatmul.bf16.gmra.mxu0 %v1613
    %v3206 = vpop.f32.mrf.mxu0
    %v3207 = vadd.f32 %v3038, %v3206
    %v3208 = vpop.f32.mrf.mxu0
    %v3209 = vadd.f32 %v3040, %v3208
    %3210 = vmatmul.bf16.gmra.mxu0 %v1625
    %v3211 = vpop.f32.mrf.mxu0
    %v3212 = vadd.f32 %v3043, %v3211
    %v3213 = vpop.f32.mrf.mxu0
    %v3214 = vadd.f32 %v3045, %v3213
    %3215 = vmatmul.bf16.gmra.mxu0 %v1637
    %v3216 = vpop.f32.mrf.mxu0
    %v3217 = vadd.f32 %v3048, %v3216
    %v3218 = vpop.f32.mrf.mxu0
    %v3219 = vadd.f32 %v3050, %v3218
    %3220 = vmatmul.bf16.gmra.mxu0 %v1649
    %v3221 = vpop.f32.mrf.mxu0
    %v3222 = vadd.f32 %v3053, %v3221
    %v3223 = vpop.f32.mrf.mxu0
    %v3224 = vadd.f32 %v3055, %v3223
    %3225 = vmatmul.bf16.gmra.mxu0 %v1661
    %v3226 = vpop.f32.mrf.mxu0
    %v3227 = vadd.f32 %v3058, %v3226
    %v3228 = vpop.f32.mrf.mxu0
    %v3229 = vadd.f32 %v3060, %v3228
    %3230 = vmatmul.bf16.gmra.mxu0 %v1673
    %v3231 = vpop.f32.mrf.mxu0
    %v3232 = vadd.f32 %v3063, %v3231
    %v3233 = vpop.f32.mrf.mxu0
    %v3234 = vadd.f32 %v3065, %v3233
    %3235 = vmatmul.bf16.gmra.mxu0 %v1685
    %v3236 = vpop.f32.mrf.mxu0
    %v3237 = vadd.f32 %v3068, %v3236
    %v3238 = vpop.f32.mrf.mxu0
    %v3239 = vadd.f32 %v3070, %v3238
    %3240 = vmatmul.bf16.gmra.mxu0 %v1697
    %v3241 = vpop.f32.mrf.mxu0
    %v3242 = vadd.f32 %v3073, %v3241
    %v3243 = vpop.f32.mrf.mxu0
    %v3244 = vadd.f32 %v3075, %v3243
    %3245 = vmatmul.bf16.gmra.mxu0 %v1709
    %v3246 = vpop.f32.mrf.mxu0
    %v3247 = vadd.f32 %v3078, %v3246
    %v3248 = vpop.f32.mrf.mxu0
    %v3249 = vadd.f32 %v3080, %v3248
    %3250 = vmatmul.bf16.gmra.mxu0 %v1721
    %v3251 = vpop.f32.mrf.mxu0
    %v3252 = vadd.f32 %v3083, %v3251
    %v3253 = vpop.f32.mrf.mxu0
    %v3254 = vadd.f32 %v3085, %v3253
    %3255 = vmatmul.bf16.gmra.mxu0 %v1733
    %v3256 = vpop.f32.mrf.mxu0
    %v3257 = vadd.f32 %v3088, %v3256
    %v3258 = vpop.f32.mrf.mxu0
    %v3259 = vadd.f32 %v3090, %v3258
    %3260 = vmatmul.bf16.gmra.mxu0 %v1745
    %v3261 = vpop.f32.mrf.mxu0
    %v3262 = vadd.f32 %v3093, %v3261
    %v3263 = vpop.f32.mrf.mxu0
    %v3264 = vadd.f32 %v3095, %v3263
    %3265 = vmatmul.bf16.gmra.mxu0 %v1757
    %v3266 = vpop.f32.mrf.mxu0
    %v3267 = vadd.f32 %v3098, %v3266
    %v3268 = vpop.f32.mrf.mxu0
    %v3269 = vadd.f32 %v3100, %v3268
    %3270 = vmatmul.bf16.gmra.mxu0 %v1769
    %v3271 = vpop.f32.mrf.mxu0
    %v3272 = vadd.f32 %v3103, %v3271
    %v3273 = vpop.f32.mrf.mxu0
    %v3274 = vadd.f32 %v3105, %v3273
    %3275 = vmatmul.bf16.gmra.mxu0 %v1781
    %v3276 = vpop.f32.mrf.mxu0
    %v3277 = vadd.f32 %v3108, %v3276
    %v3278 = vpop.f32.mrf.mxu0
    %v3279 = vadd.f32 %v3110, %v3278
    %3280 = vmatmul.bf16.gmra.mxu0 %v1793
    %v3281 = vpop.f32.mrf.mxu0
    %v3282 = vadd.f32 %v3113, %v3281
    %v3283 = vpop.f32.mrf.mxu0
    %v3284 = vadd.f32 %v3115, %v3283
    %3285 = vmatmul.bf16.gmra.mxu0 %v1805
    %v3286 = vpop.f32.mrf.mxu0
    %v3287 = vadd.f32 %v3118, %v3286
    %v3288 = vpop.f32.mrf.mxu0
    %v3289 = vadd.f32 %v3120, %v3288
    %3290 = vmatmul.bf16.gmra.mxu0 %v1817
    %v3291 = vpop.f32.mrf.mxu0
    %v3292 = vadd.f32 %v3123, %v3291
    %v3293 = vpop.f32.mrf.mxu0
    %v3294 = vadd.f32 %v3125, %v3293
    %3295 = vmatmul.bf16.gmra.mxu0 %v1829
    %v3296 = vpop.f32.mrf.mxu0
    %v3297 = vadd.f32 %v3128, %v3296
    %v3298 = vpop.f32.mrf.mxu0
    %v3299 = vadd.f32 %v3130, %v3298
    %3300 = vmatmul.bf16.gmra.mxu0 %v1841
    %v3301 = vpop.f32.mrf.mxu0
    %v3302 = vadd.f32 %v3133, %v3301
    %v3303 = vpop.f32.mrf.mxu0
    %v3304 = vadd.f32 %v3135, %v3303
    %3305 = vmatmul.bf16.gmra.mxu0 %v1853
    %v3306 = vpop.f32.mrf.mxu0
    %v3307 = vadd.f32 %v3138, %v3306
    %v3308 = vpop.f32.mrf.mxu0
    %v3309 = vadd.f32 %v3140, %v3308
    %3310 = vmatmul.bf16.gmra.mxu0 %v1865
    %v3311 = vpop.f32.mrf.mxu0
    %v3312 = vadd.f32 %v3143, %v3311
    %v3313 = vpop.f32.mrf.mxu0
    %v3314 = vadd.f32 %v3145, %v3313
    %3315 = vmatmul.bf16.gmra.mxu0 %v1877
    %v3316 = vpop.f32.mrf.mxu0
    %v3317 = vadd.f32 %v3148, %v3316
    %v3318 = vpop.f32.mrf.mxu0
    %v3319 = vadd.f32 %v3150, %v3318
    %3320 = vdwg.mxu0
    %3321 = vmatpush.bf16.msra.mxu0 %v2958
    %3322 = vmatpush.bf16.msra.mxu0 %v2957
    %3323 = vmatpush.bf16.msra.mxu0 %v2956
    %3324 = vmatpush.bf16.msra.mxu0 %v2955
    %3325 = vmatpush.bf16.msra.mxu0 %v2954
    %3326 = vmatpush.bf16.msra.mxu0 %v2953
    %3327 = vmatpush.bf16.msra.mxu0 %v2952
    %3328 = vmatpush.bf16.msra.mxu0 %v2951
    %3329 = vmatmul.bf16.gmra.mxu0 %v1913
    %v3330 = vpop.f32.mrf.mxu0
    %v3331 = vadd.f32 %v3162, %v3330
    %v3332 = vpop.f32.mrf.mxu0
    %v3333 = vadd.f32 %v3164, %v3332
    %3334 = vmatmul.bf16.gmra.mxu0 %v1916
    %v3335 = vpop.f32.mrf.mxu0
    %v3336 = vadd.f32 %v3167, %v3335
    %v3337 = vpop.f32.mrf.mxu0
    %v3338 = vadd.f32 %v3169, %v3337
    %3339 = vmatmul.bf16.gmra.mxu0 %v1919
    %v3340 = vpop.f32.mrf.mxu0
    %v3341 = vadd.f32 %v3172, %v3340
    %v3342 = vpop.f32.mrf.mxu0
    %v3343 = vadd.f32 %v3174, %v3342
    %3344 = vmatmul.bf16.gmra.mxu0 %v1922
    %v3345 = vpop.f32.mrf.mxu0
    %v3346 = vadd.f32 %v3177, %v3345
    %v3347 = vpop.f32.mrf.mxu0
    %v3348 = vadd.f32 %v3179, %v3347
    %3349 = vmatmul.bf16.gmra.mxu0 %v1925
    %v3350 = vpop.f32.mrf.mxu0
    %v3351 = vadd.f32 %v3182, %v3350
    %v3352 = vpop.f32.mrf.mxu0
    %v3353 = vadd.f32 %v3184, %v3352
    %3354 = vmatmul.bf16.gmra.mxu0 %v1928
    %v3355 = vpop.f32.mrf.mxu0
    %v3356 = vadd.f32 %v3187, %v3355
    %v3357 = vpop.f32.mrf.mxu0
    %v3358 = vadd.f32 %v3189, %v3357
    %3359 = vmatmul.bf16.gmra.mxu0 %v1931
    %v3360 = vpop.f32.mrf.mxu0
    %v3361 = vadd.f32 %v3192, %v3360
    %v3362 = vpop.f32.mrf.mxu0
    %v3363 = vadd.f32 %v3194, %v3362
    %3364 = vmatmul.bf16.gmra.mxu0 %v1934
    %v3365 = vpop.f32.mrf.mxu0
    %v3366 = vadd.f32 %v3197, %v3365
    %v3367 = vpop.f32.mrf.mxu0
    %v3368 = vadd.f32 %v3199, %v3367
    %3369 = vmatmul.bf16.gmra.mxu0 %v1937
    %v3370 = vpop.f32.mrf.mxu0
    %v3371 = vadd.f32 %v3202, %v3370
    %v3372 = vpop.f32.mrf.mxu0
    %v3373 = vadd.f32 %v3204, %v3372
    %3374 = vmatmul.bf16.gmra.mxu0 %v1940
    %v3375 = vpop.f32.mrf.mxu0
    %v3376 = vadd.f32 %v3207, %v3375
    %v3377 = vpop.f32.mrf.mxu0
    %v3378 = vadd.f32 %v3209, %v3377
    %3379 = vmatmul.bf16.gmra.mxu0 %v1943
    %v3380 = vpop.f32.mrf.mxu0
    %v3381 = vadd.f32 %v3212, %v3380
    %v3382 = vpop.f32.mrf.mxu0
    %v3383 = vadd.f32 %v3214, %v3382
    %3384 = vmatmul.bf16.gmra.mxu0 %v1946
    %v3385 = vpop.f32.mrf.mxu0
    %v3386 = vadd.f32 %v3217, %v3385
    %v3387 = vpop.f32.mrf.mxu0
    %v3388 = vadd.f32 %v3219, %v3387
    %3389 = vmatmul.bf16.gmra.mxu0 %v1949
    %v3390 = vpop.f32.mrf.mxu0
    %v3391 = vadd.f32 %v3222, %v3390
    %v3392 = vpop.f32.mrf.mxu0
    %v3393 = vadd.f32 %v3224, %v3392
    %3394 = vmatmul.bf16.gmra.mxu0 %v1952
    %v3395 = vpop.f32.mrf.mxu0
    %v3396 = vadd.f32 %v3227, %v3395
    %v3397 = vpop.f32.mrf.mxu0
    %v3398 = vadd.f32 %v3229, %v3397
    %3399 = vmatmul.bf16.gmra.mxu0 %v1955
    %v3400 = vpop.f32.mrf.mxu0
    %v3401 = vadd.f32 %v3232, %v3400
    %v3402 = vpop.f32.mrf.mxu0
    %v3403 = vadd.f32 %v3234, %v3402
    %3404 = vmatmul.bf16.gmra.mxu0 %v1958
    %v3405 = vpop.f32.mrf.mxu0
    %v3406 = vadd.f32 %v3237, %v3405
    %v3407 = vpop.f32.mrf.mxu0
    %v3408 = vadd.f32 %v3239, %v3407
    %3409 = vmatmul.bf16.gmra.mxu0 %v1961
    %v3410 = vpop.f32.mrf.mxu0
    %v3411 = vadd.f32 %v3242, %v3410
    %v3412 = vpop.f32.mrf.mxu0
    %v3413 = vadd.f32 %v3244, %v3412
    %3414 = vmatmul.bf16.gmra.mxu0 %v1964
    %v3415 = vpop.f32.mrf.mxu0
    %v3416 = vadd.f32 %v3247, %v3415
    %v3417 = vpop.f32.mrf.mxu0
    %v3418 = vadd.f32 %v3249, %v3417
    %3419 = vmatmul.bf16.gmra.mxu0 %v1967
    %v3420 = vpop.f32.mrf.mxu0
    %v3421 = vadd.f32 %v3252, %v3420
    %v3422 = vpop.f32.mrf.mxu0
    %v3423 = vadd.f32 %v3254, %v3422
    %3424 = vmatmul.bf16.gmra.mxu0 %v1970
    %v3425 = vpop.f32.mrf.mxu0
    %v3426 = vadd.f32 %v3257, %v3425
    %v3427 = vpop.f32.mrf.mxu0
    %v3428 = vadd.f32 %v3259, %v3427
    %3429 = vmatmul.bf16.gmra.mxu0 %v1973
    %v3430 = vpop.f32.mrf.mxu0
    %v3431 = vadd.f32 %v3262, %v3430
    %v3432 = vpop.f32.mrf.mxu0
    %v3433 = vadd.f32 %v3264, %v3432
    %3434 = vmatmul.bf16.gmra.mxu0 %v1976
    %v3435 = vpop.f32.mrf.mxu0
    %v3436 = vadd.f32 %v3267, %v3435
    %v3437 = vpop.f32.mrf.mxu0
    %v3438 = vadd.f32 %v3269, %v3437
    %3439 = vmatmul.bf16.gmra.mxu0 %v1979
    %v3440 = vpop.f32.mrf.mxu0
    %v3441 = vadd.f32 %v3272, %v3440
    %v3442 = vpop.f32.mrf.mxu0
    %v3443 = vadd.f32 %v3274, %v3442
    %3444 = vmatmul.bf16.gmra.mxu0 %v1982
    %v3445 = vpop.f32.mrf.mxu0
    %v3446 = vadd.f32 %v3277, %v3445
    %v3447 = vpop.f32.mrf.mxu0
    %v3448 = vadd.f32 %v3279, %v3447
    %3449 = vmatmul.bf16.gmra.mxu0 %v1985
    %v3450 = vpop.f32.mrf.mxu0
    %v3451 = vadd.f32 %v3282, %v3450
    %v3452 = vpop.f32.mrf.mxu0
    %v3453 = vadd.f32 %v3284, %v3452
    %3454 = vmatmul.bf16.gmra.mxu0 %v1988
    %v3455 = vpop.f32.mrf.mxu0
    %v3456 = vadd.f32 %v3287, %v3455
    %v3457 = vpop.f32.mrf.mxu0
    %v3458 = vadd.f32 %v3289, %v3457
    %3459 = vmatmul.bf16.gmra.mxu0 %v1991
    %v3460 = vpop.f32.mrf.mxu0
    %v3461 = vadd.f32 %v3292, %v3460
    %v3462 = vpop.f32.mrf.mxu0
    %v3463 = vadd.f32 %v3294, %v3462
    %3464 = vmatmul.bf16.gmra.mxu0 %v1994
    %v3465 = vpop.f32.mrf.mxu0
    %v3466 = vadd.f32 %v3297, %v3465
    %v3467 = vpop.f32.mrf.mxu0
    %v3468 = vadd.f32 %v3299, %v3467
    %3469 = vmatmul.bf16.gmra.mxu0 %v1997
    %v3470 = vpop.f32.mrf.mxu0
    %v3471 = vadd.f32 %v3302, %v3470
    %v3472 = vpop.f32.mrf.mxu0
    %v3473 = vadd.f32 %v3304, %v3472
    %3474 = vmatmul.bf16.gmra.mxu0 %v2000
    %v3475 = vpop.f32.mrf.mxu0
    %v3476 = vadd.f32 %v3307, %v3475
    %v3477 = vpop.f32.mrf.mxu0
    %v3478 = vadd.f32 %v3309, %v3477
    %3479 = vmatmul.bf16.gmra.mxu0 %v2003
    %v3480 = vpop.f32.mrf.mxu0
    %v3481 = vadd.f32 %v3312, %v3480
    %v3482 = vpop.f32.mrf.mxu0
    %v3483 = vadd.f32 %v3314, %v3482
    %3484 = vmatmul.bf16.gmra.mxu0 %v2006
    %v3485 = vpop.f32.mrf.mxu0
    %v3486 = vadd.f32 %v3317, %v3485
    %v3487 = vpop.f32.mrf.mxu0
    %v3488 = vadd.f32 %v3319, %v3487
    %3489 = vdwg.mxu0
    %v3494 = vunpack.c.l.b16 %v1148
    %v3495 = vunpack.c.l.b16 %v1149
    %v3496 = vunpack.c.l.b16 %v1202
    %v3497 = vunpack.c.l.b16 %v1203
    %v3498 = vpack.c.b16 %v3495, %v3494
    %v3499 = vpack.c.b16 %v3497, %v3496
    %v3504 = vunpack.c.l.b16 %v1150
    %v3505 = vunpack.c.l.b16 %v1204
    %v3506 = vpack.c.b16 %v3504, %v3504
    %v3507 = vpack.c.b16 %v3505, %v3505
    %v3509 = vshrl.u32 %v3498, 16
    %v3511 = vshll.u32 %v3498, 16
    %v3513 = vrot.slane %v3511, 1
    %v3514 = vor.u32 %v3509, %v3513
    %v3516 = vshll.u32 %v3506, 16
    %v3518 = vrot.slane %v3516, 1
    %v3519 = vsel %vm1493, %v3514, %v3518
    %v3521 = vshrl.u32 %v3499, 16
    %v3523 = vshll.u32 %v3499, 16
    %v3525 = vrot.slane %v3523, 1
    %v3526 = vor.u32 %v3521, %v3525
    %v3528 = vshll.u32 %v3507, 16
    %v3530 = vrot.slane %v3528, 1
    %v3531 = vsel %vm1493, %v3526, %v3530
    %v3534 = vrot.slane %v3498, 1
    %v3535 = vrot.slane %v3506, 1
    %v3536 = vsel %vm1910, %v3534, %v3535
    %v3537 = vrot.slane %v3499, 1
    %v3538 = vrot.slane %v3507, 1
    %v3539 = vsel %vm1910, %v3537, %v3538
    %s3542 = scalar_lea.vmem [#allocation6], 384
    %v3543 = vld [vmem:[%s3542] sm:$0xf]
    %v3544 = vld [vmem:[%s3542 + $0x4] sm:$0xf]
    %v3545 = vld [vmem:[%s3542 + $0x8] sm:$0xf]
    %v3546 = vld [vmem:[%s3542 + $0xc] sm:$0xf]
    %v3547 = vld [vmem:[%s3542 + $0x10] sm:$0xf]
    %v3548 = vld [vmem:[%s3542 + $0x14] sm:$0xf]
    %v3549 = vld [vmem:[%s3542 + $0x18] sm:$0xf]
    %v3550 = vld [vmem:[%s3542 + $0x1c] sm:$0xf]
    %v3551 = vld [vmem:[%s3542 + $0x20] sm:$0xf]
    %v3552 = vld [vmem:[%s3542 + $0x24] sm:$0xf]
    %v3553 = vld [vmem:[%s3542 + $0x28] sm:$0xf]
    %v3554 = vld [vmem:[%s3542 + $0x2c] sm:$0xf]
    %v3555 = vld [vmem:[%s3542 + $0x30] sm:$0xf]
    %v3556 = vld [vmem:[%s3542 + $0x34] sm:$0xf]
    %v3557 = vld [vmem:[%s3542 + $0x38] sm:$0xf]
    %v3558 = vld [vmem:[%s3542 + $0x3c] sm:$0xf]
    %v3559 = vld [vmem:[%s3542 + $0x40] sm:$0xf]
    %v3560 = vld [vmem:[%s3542 + $0x44] sm:$0xf]
    %v3561 = vld [vmem:[%s3542 + $0x48] sm:$0xf]
    %v3562 = vld [vmem:[%s3542 + $0x4c] sm:$0xf]
    %v3563 = vld [vmem:[%s3542 + $0x50] sm:$0xf]
    %v3564 = vld [vmem:[%s3542 + $0x54] sm:$0xf]
    %v3565 = vld [vmem:[%s3542 + $0x58] sm:$0xf]
    %v3566 = vld [vmem:[%s3542 + $0x5c] sm:$0xf]
    %v3567 = vld [vmem:[%s3542 + $0x60] sm:$0xf]
    %v3568 = vld [vmem:[%s3542 + $0x64] sm:$0xf]
    %v3569 = vld [vmem:[%s3542 + $0x68] sm:$0xf]
    %v3570 = vld [vmem:[%s3542 + $0x6c] sm:$0xf]
    %v3571 = vld [vmem:[%s3542 + $0x70] sm:$0xf]
    %v3572 = vld [vmem:[%s3542 + $0x74] sm:$0xf]
    %v3573 = vld [vmem:[%s3542 + $0x78] sm:$0xf]
    %v3574 = vld [vmem:[%s3542 + $0x7c] sm:$0xf]
    %v3575 = vld [vmem:[%s3542 + $0x80] sm:$0xf]
    %v3576 = vld [vmem:[%s3542 + $0x84] sm:$0xf]
    %v3577 = vld [vmem:[%s3542 + $0x88] sm:$0xf]
    %v3578 = vld [vmem:[%s3542 + $0x8c] sm:$0xf]
    %v3579 = vld [vmem:[%s3542 + $0x90] sm:$0xf]
    %v3580 = vld [vmem:[%s3542 + $0x94] sm:$0xf]
    %v3581 = vld [vmem:[%s3542 + $0x98] sm:$0xf]
    %v3582 = vld [vmem:[%s3542 + $0x9c] sm:$0xf]
    %v3583 = vld [vmem:[%s3542 + $0xa0] sm:$0xf]
    %v3584 = vld [vmem:[%s3542 + $0xa4] sm:$0xf]
    %v3585 = vld [vmem:[%s3542 + $0xa8] sm:$0xf]
    %v3586 = vld [vmem:[%s3542 + $0xac] sm:$0xf]
    %v3587 = vld [vmem:[%s3542 + $0xb0] sm:$0xf]
    %v3588 = vld [vmem:[%s3542 + $0xb4] sm:$0xf]
    %v3589 = vld [vmem:[%s3542 + $0xb8] sm:$0xf]
    %v3590 = vld [vmem:[%s3542 + $0xbc] sm:$0xf]
    %v3639 = vunpack.c.l.b16 %v3543
    %v3640 = vunpack.c.l.b16 %v3544
    %v3641 = vunpack.c.l.b16 %v3545
    %v3642 = vunpack.c.l.b16 %v3546
    %v3643 = vunpack.c.l.b16 %v3547
    %v3644 = vunpack.c.l.b16 %v3548
    %v3645 = vunpack.c.l.b16 %v3549
    %v3646 = vunpack.c.l.b16 %v3550
    %v3647 = vunpack.c.l.b16 %v3551
    %v3648 = vunpack.c.l.b16 %v3552
    %v3649 = vunpack.c.l.b16 %v3553
    %v3650 = vunpack.c.l.b16 %v3554
    %v3651 = vunpack.c.l.b16 %v3555
    %v3652 = vunpack.c.l.b16 %v3556
    %v3653 = vunpack.c.l.b16 %v3557
    %v3654 = vunpack.c.l.b16 %v3558
    %v3655 = vunpack.c.l.b16 %v3559
    %v3656 = vunpack.c.l.b16 %v3560
    %v3657 = vunpack.c.l.b16 %v3561
    %v3658 = vunpack.c.l.b16 %v3562
    %v3659 = vunpack.c.l.b16 %v3563
    %v3660 = vunpack.c.l.b16 %v3564
    %v3661 = vunpack.c.l.b16 %v3565
    %v3662 = vunpack.c.l.b16 %v3566
    %v3663 = vunpack.c.l.b16 %v3567
    %v3664 = vunpack.c.l.b16 %v3568
    %v3665 = vunpack.c.l.b16 %v3569
    %v3666 = vunpack.c.l.b16 %v3570
    %v3667 = vunpack.c.l.b16 %v3571
    %v3668 = vunpack.c.l.b16 %v3572
    %v3669 = vunpack.c.l.b16 %v3573
    %v3670 = vunpack.c.l.b16 %v3574
    %v3671 = vunpack.c.l.b16 %v3575
    %v3672 = vunpack.c.l.b16 %v3576
    %v3673 = vunpack.c.l.b16 %v3577
    %v3674 = vunpack.c.l.b16 %v3578
    %v3675 = vunpack.c.l.b16 %v3579
    %v3676 = vunpack.c.l.b16 %v3580
    %v3677 = vunpack.c.l.b16 %v3581
    %v3678 = vunpack.c.l.b16 %v3582
    %v3679 = vunpack.c.l.b16 %v3583
    %v3680 = vunpack.c.l.b16 %v3584
    %v3681 = vunpack.c.l.b16 %v3585
    %v3682 = vunpack.c.l.b16 %v3586
    %v3683 = vunpack.c.l.b16 %v3587
    %v3684 = vunpack.c.l.b16 %v3588
    %v3685 = vunpack.c.l.b16 %v3589
    %v3686 = vunpack.c.l.b16 %v3590
    %v3687 = vpack.c.b16 %v3640, %v3639
    %v3688 = vpack.c.b16 %v3642, %v3641
    %v3689 = vpack.c.b16 %v3644, %v3643
    %v3690 = vpack.c.b16 %v3646, %v3645
    %v3691 = vpack.c.b16 %v3648, %v3647
    %v3692 = vpack.c.b16 %v3650, %v3649
    %v3693 = vpack.c.b16 %v3652, %v3651
    %v3694 = vpack.c.b16 %v3654, %v3653
    %v3695 = vpack.c.b16 %v3656, %v3655
    %v3696 = vpack.c.b16 %v3658, %v3657
    %v3697 = vpack.c.b16 %v3660, %v3659
    %v3698 = vpack.c.b16 %v3662, %v3661
    %v3699 = vpack.c.b16 %v3664, %v3663
    %v3700 = vpack.c.b16 %v3666, %v3665
    %v3701 = vpack.c.b16 %v3668, %v3667
    %v3702 = vpack.c.b16 %v3670, %v3669
    %v3703 = vpack.c.b16 %v3672, %v3671
    %v3704 = vpack.c.b16 %v3674, %v3673
    %v3705 = vpack.c.b16 %v3676, %v3675
    %v3706 = vpack.c.b16 %v3678, %v3677
    %v3707 = vpack.c.b16 %v3680, %v3679
    %v3708 = vpack.c.b16 %v3682, %v3681
    %v3709 = vpack.c.b16 %v3684, %v3683
    %v3710 = vpack.c.b16 %v3686, %v3685
    %3735 = vmatpush.bf16.msra.mxu0 %v3694
    %3736 = vmatpush.bf16.msra.mxu0 %v3693
    %3737 = vmatpush.bf16.msra.mxu0 %v3692
    %3738 = vmatpush.bf16.msra.mxu0 %v3691
    %3739 = vmatpush.bf16.msra.mxu0 %v3690
    %3740 = vmatpush.bf16.msra.mxu0 %v3689
    %3741 = vmatpush.bf16.msra.mxu0 %v3688
    %3742 = vmatpush.bf16.msra.mxu0 %v3687
    %3743 = vmatmul.bf16.gmra.mxu0 %v1335
    %v3744 = vpop.f32.mrf.mxu0
    %v3745 = vadd.f32 0.0, %v3744
    %v3746 = vpop.f32.mrf.mxu0
    %v3747 = vadd.f32 0.0, %v3746
    %3748 = vmatmul.bf16.gmra.mxu0 %v1336
    %v3749 = vpop.f32.mrf.mxu0
    %v3750 = vadd.f32 0.0, %v3749
    %v3751 = vpop.f32.mrf.mxu0
    %v3752 = vadd.f32 0.0, %v3751
    %3753 = vmatmul.bf16.gmra.mxu0 %v1337
    %v3754 = vpop.f32.mrf.mxu0
    %v3755 = vadd.f32 0.0, %v3754
    %v3756 = vpop.f32.mrf.mxu0
    %v3757 = vadd.f32 0.0, %v3756
    %3758 = vmatmul.bf16.gmra.mxu0 %v1338
    %v3759 = vpop.f32.mrf.mxu0
    %v3760 = vadd.f32 0.0, %v3759
    %v3761 = vpop.f32.mrf.mxu0
    %v3762 = vadd.f32 0.0, %v3761
    %3763 = vmatmul.bf16.gmra.mxu0 %v1339
    %v3764 = vpop.f32.mrf.mxu0
    %v3765 = vadd.f32 0.0, %v3764
    %v3766 = vpop.f32.mrf.mxu0
    %v3767 = vadd.f32 0.0, %v3766
    %3768 = vmatmul.bf16.gmra.mxu0 %v1340
    %v3769 = vpop.f32.mrf.mxu0
    %v3770 = vadd.f32 0.0, %v3769
    %v3771 = vpop.f32.mrf.mxu0
    %v3772 = vadd.f32 0.0, %v3771
    %3773 = vmatmul.bf16.gmra.mxu0 %v1341
    %v3774 = vpop.f32.mrf.mxu0
    %v3775 = vadd.f32 0.0, %v3774
    %v3776 = vpop.f32.mrf.mxu0
    %v3777 = vadd.f32 0.0, %v3776
    %3778 = vmatmul.bf16.gmra.mxu0 %v1342
    %v3779 = vpop.f32.mrf.mxu0
    %v3780 = vadd.f32 0.0, %v3779
    %v3781 = vpop.f32.mrf.mxu0
    %v3782 = vadd.f32 0.0, %v3781
    %3783 = vmatmul.bf16.gmra.mxu0 %v1343
    %v3784 = vpop.f32.mrf.mxu0
    %v3785 = vadd.f32 0.0, %v3784
    %v3786 = vpop.f32.mrf.mxu0
    %v3787 = vadd.f32 0.0, %v3786
    %3788 = vmatmul.bf16.gmra.mxu0 %v1344
    %v3789 = vpop.f32.mrf.mxu0
    %v3790 = vadd.f32 0.0, %v3789
    %v3791 = vpop.f32.mrf.mxu0
    %v3792 = vadd.f32 0.0, %v3791
    %3793 = vmatmul.bf16.gmra.mxu0 %v1345
    %v3794 = vpop.f32.mrf.mxu0
    %v3795 = vadd.f32 0.0, %v3794
    %v3796 = vpop.f32.mrf.mxu0
    %v3797 = vadd.f32 0.0, %v3796
    %3798 = vmatmul.bf16.gmra.mxu0 %v1346
    %v3799 = vpop.f32.mrf.mxu0
    %v3800 = vadd.f32 0.0, %v3799
    %v3801 = vpop.f32.mrf.mxu0
    %v3802 = vadd.f32 0.0, %v3801
    %3803 = vmatmul.bf16.gmra.mxu0 %v1347
    %v3804 = vpop.f32.mrf.mxu0
    %v3805 = vadd.f32 0.0, %v3804
    %v3806 = vpop.f32.mrf.mxu0
    %v3807 = vadd.f32 0.0, %v3806
    %3808 = vmatmul.bf16.gmra.mxu0 %v1348
    %v3809 = vpop.f32.mrf.mxu0
    %v3810 = vadd.f32 0.0, %v3809
    %v3811 = vpop.f32.mrf.mxu0
    %v3812 = vadd.f32 0.0, %v3811
    %3813 = vmatmul.bf16.gmra.mxu0 %v2095
    %v3814 = vpop.f32.mrf.mxu0
    %v3815 = vadd.f32 0.0, %v3814
    %v3816 = vpop.f32.mrf.mxu0
    %v3817 = vadd.f32 0.0, %v3816
    %3818 = vmatmul.bf16.gmra.mxu0 %v3498
    %v3819 = vpop.f32.mrf.mxu0
    %v3820 = vadd.f32 0.0, %v3819
    %v3821 = vpop.f32.mrf.mxu0
    %v3822 = vadd.f32 0.0, %v3821
    %3823 = vmatmul.bf16.gmra.mxu0 %v1351
    %v3824 = vpop.f32.mrf.mxu0
    %v3825 = vadd.f32 0.0, %v3824
    %v3826 = vpop.f32.mrf.mxu0
    %v3827 = vadd.f32 0.0, %v3826
    %3828 = vmatmul.bf16.gmra.mxu0 %v1352
    %v3829 = vpop.f32.mrf.mxu0
    %v3830 = vadd.f32 0.0, %v3829
    %v3831 = vpop.f32.mrf.mxu0
    %v3832 = vadd.f32 0.0, %v3831
    %3833 = vmatmul.bf16.gmra.mxu0 %v1353
    %v3834 = vpop.f32.mrf.mxu0
    %v3835 = vadd.f32 0.0, %v3834
    %v3836 = vpop.f32.mrf.mxu0
    %v3837 = vadd.f32 0.0, %v3836
    %3838 = vmatmul.bf16.gmra.mxu0 %v1354
    %v3839 = vpop.f32.mrf.mxu0
    %v3840 = vadd.f32 0.0, %v3839
    %v3841 = vpop.f32.mrf.mxu0
    %v3842 = vadd.f32 0.0, %v3841
    %3843 = vmatmul.bf16.gmra.mxu0 %v1355
    %v3844 = vpop.f32.mrf.mxu0
    %v3845 = vadd.f32 0.0, %v3844
    %v3846 = vpop.f32.mrf.mxu0
    %v3847 = vadd.f32 0.0, %v3846
    %3848 = vmatmul.bf16.gmra.mxu0 %v1356
    %v3849 = vpop.f32.mrf.mxu0
    %v3850 = vadd.f32 0.0, %v3849
    %v3851 = vpop.f32.mrf.mxu0
    %v3852 = vadd.f32 0.0, %v3851
    %3853 = vmatmul.bf16.gmra.mxu0 %v1357
    %v3854 = vpop.f32.mrf.mxu0
    %v3855 = vadd.f32 0.0, %v3854
    %v3856 = vpop.f32.mrf.mxu0
    %v3857 = vadd.f32 0.0, %v3856
    %3858 = vmatmul.bf16.gmra.mxu0 %v1358
    %v3859 = vpop.f32.mrf.mxu0
    %v3860 = vadd.f32 0.0, %v3859
    %v3861 = vpop.f32.mrf.mxu0
    %v3862 = vadd.f32 0.0, %v3861
    %3863 = vmatmul.bf16.gmra.mxu0 %v1359
    %v3864 = vpop.f32.mrf.mxu0
    %v3865 = vadd.f32 0.0, %v3864
    %v3866 = vpop.f32.mrf.mxu0
    %v3867 = vadd.f32 0.0, %v3866
    %3868 = vmatmul.bf16.gmra.mxu0 %v1360
    %v3869 = vpop.f32.mrf.mxu0
    %v3870 = vadd.f32 0.0, %v3869
    %v3871 = vpop.f32.mrf.mxu0
    %v3872 = vadd.f32 0.0, %v3871
    %3873 = vmatmul.bf16.gmra.mxu0 %v1361
    %v3874 = vpop.f32.mrf.mxu0
    %v3875 = vadd.f32 0.0, %v3874
    %v3876 = vpop.f32.mrf.mxu0
    %v3877 = vadd.f32 0.0, %v3876
    %3878 = vmatmul.bf16.gmra.mxu0 %v1362
    %v3879 = vpop.f32.mrf.mxu0
    %v3880 = vadd.f32 0.0, %v3879
    %v3881 = vpop.f32.mrf.mxu0
    %v3882 = vadd.f32 0.0, %v3881
    %3883 = vmatmul.bf16.gmra.mxu0 %v1363
    %v3884 = vpop.f32.mrf.mxu0
    %v3885 = vadd.f32 0.0, %v3884
    %v3886 = vpop.f32.mrf.mxu0
    %v3887 = vadd.f32 0.0, %v3886
    %3888 = vmatmul.bf16.gmra.mxu0 %v1364
    %v3889 = vpop.f32.mrf.mxu0
    %v3890 = vadd.f32 0.0, %v3889
    %v3891 = vpop.f32.mrf.mxu0
    %v3892 = vadd.f32 0.0, %v3891
    %3893 = vmatmul.bf16.gmra.mxu0 %v2096
    %v3894 = vpop.f32.mrf.mxu0
    %v3895 = vadd.f32 0.0, %v3894
    %v3896 = vpop.f32.mrf.mxu0
    %v3897 = vadd.f32 0.0, %v3896
    %3898 = vmatmul.bf16.gmra.mxu0 %v3499
    %v3899 = vpop.f32.mrf.mxu0
    %v3900 = vadd.f32 0.0, %v3899
    %v3901 = vpop.f32.mrf.mxu0
    %v3902 = vadd.f32 0.0, %v3901
    %3903 = vdwg.mxu0
    %3904 = vmatpush.bf16.msra.mxu0 %v3702
    %3905 = vmatpush.bf16.msra.mxu0 %v3701
    %3906 = vmatpush.bf16.msra.mxu0 %v3700
    %3907 = vmatpush.bf16.msra.mxu0 %v3699
    %3908 = vmatpush.bf16.msra.mxu0 %v3698
    %3909 = vmatpush.bf16.msra.mxu0 %v3697
    %3910 = vmatpush.bf16.msra.mxu0 %v3696
    %3911 = vmatpush.bf16.msra.mxu0 %v3695
    %3912 = vmatmul.bf16.gmra.mxu0 %v1529
    %v3913 = vpop.f32.mrf.mxu0
    %v3914 = vadd.f32 %v3745, %v3913
    %v3915 = vpop.f32.mrf.mxu0
    %v3916 = vadd.f32 %v3747, %v3915
    %3917 = vmatmul.bf16.gmra.mxu0 %v1541
    %v3918 = vpop.f32.mrf.mxu0
    %v3919 = vadd.f32 %v3750, %v3918
    %v3920 = vpop.f32.mrf.mxu0
    %v3921 = vadd.f32 %v3752, %v3920
    %3922 = vmatmul.bf16.gmra.mxu0 %v1553
    %v3923 = vpop.f32.mrf.mxu0
    %v3924 = vadd.f32 %v3755, %v3923
    %v3925 = vpop.f32.mrf.mxu0
    %v3926 = vadd.f32 %v3757, %v3925
    %3927 = vmatmul.bf16.gmra.mxu0 %v1565
    %v3928 = vpop.f32.mrf.mxu0
    %v3929 = vadd.f32 %v3760, %v3928
    %v3930 = vpop.f32.mrf.mxu0
    %v3931 = vadd.f32 %v3762, %v3930
    %3932 = vmatmul.bf16.gmra.mxu0 %v1577
    %v3933 = vpop.f32.mrf.mxu0
    %v3934 = vadd.f32 %v3765, %v3933
    %v3935 = vpop.f32.mrf.mxu0
    %v3936 = vadd.f32 %v3767, %v3935
    %3937 = vmatmul.bf16.gmra.mxu0 %v1589
    %v3938 = vpop.f32.mrf.mxu0
    %v3939 = vadd.f32 %v3770, %v3938
    %v3940 = vpop.f32.mrf.mxu0
    %v3941 = vadd.f32 %v3772, %v3940
    %3942 = vmatmul.bf16.gmra.mxu0 %v1601
    %v3943 = vpop.f32.mrf.mxu0
    %v3944 = vadd.f32 %v3775, %v3943
    %v3945 = vpop.f32.mrf.mxu0
    %v3946 = vadd.f32 %v3777, %v3945
    %3947 = vmatmul.bf16.gmra.mxu0 %v1613
    %v3948 = vpop.f32.mrf.mxu0
    %v3949 = vadd.f32 %v3780, %v3948
    %v3950 = vpop.f32.mrf.mxu0
    %v3951 = vadd.f32 %v3782, %v3950
    %3952 = vmatmul.bf16.gmra.mxu0 %v1625
    %v3953 = vpop.f32.mrf.mxu0
    %v3954 = vadd.f32 %v3785, %v3953
    %v3955 = vpop.f32.mrf.mxu0
    %v3956 = vadd.f32 %v3787, %v3955
    %3957 = vmatmul.bf16.gmra.mxu0 %v1637
    %v3958 = vpop.f32.mrf.mxu0
    %v3959 = vadd.f32 %v3790, %v3958
    %v3960 = vpop.f32.mrf.mxu0
    %v3961 = vadd.f32 %v3792, %v3960
    %3962 = vmatmul.bf16.gmra.mxu0 %v1649
    %v3963 = vpop.f32.mrf.mxu0
    %v3964 = vadd.f32 %v3795, %v3963
    %v3965 = vpop.f32.mrf.mxu0
    %v3966 = vadd.f32 %v3797, %v3965
    %3967 = vmatmul.bf16.gmra.mxu0 %v1661
    %v3968 = vpop.f32.mrf.mxu0
    %v3969 = vadd.f32 %v3800, %v3968
    %v3970 = vpop.f32.mrf.mxu0
    %v3971 = vadd.f32 %v3802, %v3970
    %3972 = vmatmul.bf16.gmra.mxu0 %v1673
    %v3973 = vpop.f32.mrf.mxu0
    %v3974 = vadd.f32 %v3805, %v3973
    %v3975 = vpop.f32.mrf.mxu0
    %v3976 = vadd.f32 %v3807, %v3975
    %3977 = vmatmul.bf16.gmra.mxu0 %v1685
    %v3978 = vpop.f32.mrf.mxu0
    %v3979 = vadd.f32 %v3810, %v3978
    %v3980 = vpop.f32.mrf.mxu0
    %v3981 = vadd.f32 %v3812, %v3980
    %3982 = vmatmul.bf16.gmra.mxu0 %v2116
    %v3983 = vpop.f32.mrf.mxu0
    %v3984 = vadd.f32 %v3815, %v3983
    %v3985 = vpop.f32.mrf.mxu0
    %v3986 = vadd.f32 %v3817, %v3985
    %3987 = vmatmul.bf16.gmra.mxu0 %v3519
    %v3988 = vpop.f32.mrf.mxu0
    %v3989 = vadd.f32 %v3820, %v3988
    %v3990 = vpop.f32.mrf.mxu0
    %v3991 = vadd.f32 %v3822, %v3990
    %3992 = vmatmul.bf16.gmra.mxu0 %v1721
    %v3993 = vpop.f32.mrf.mxu0
    %v3994 = vadd.f32 %v3825, %v3993
    %v3995 = vpop.f32.mrf.mxu0
    %v3996 = vadd.f32 %v3827, %v3995
    %3997 = vmatmul.bf16.gmra.mxu0 %v1733
    %v3998 = vpop.f32.mrf.mxu0
    %v3999 = vadd.f32 %v3830, %v3998
    %v4000 = vpop.f32.mrf.mxu0
    %v4001 = vadd.f32 %v3832, %v4000
    %4002 = vmatmul.bf16.gmra.mxu0 %v1745
    %v4003 = vpop.f32.mrf.mxu0
    %v4004 = vadd.f32 %v3835, %v4003
    %v4005 = vpop.f32.mrf.mxu0
    %v4006 = vadd.f32 %v3837, %v4005
    %4007 = vmatmul.bf16.gmra.mxu0 %v1757
    %v4008 = vpop.f32.mrf.mxu0
    %v4009 = vadd.f32 %v3840, %v4008
    %v4010 = vpop.f32.mrf.mxu0
    %v4011 = vadd.f32 %v3842, %v4010
    %4012 = vmatmul.bf16.gmra.mxu0 %v1769
    %v4013 = vpop.f32.mrf.mxu0
    %v4014 = vadd.f32 %v3845, %v4013
    %v4015 = vpop.f32.mrf.mxu0
    %v4016 = vadd.f32 %v3847, %v4015
    %4017 = vmatmul.bf16.gmra.mxu0 %v1781
    %v4018 = vpop.f32.mrf.mxu0
    %v4019 = vadd.f32 %v3850, %v4018
    %v4020 = vpop.f32.mrf.mxu0
    %v4021 = vadd.f32 %v3852, %v4020
    %4022 = vmatmul.bf16.gmra.mxu0 %v1793
    %v4023 = vpop.f32.mrf.mxu0
    %v4024 = vadd.f32 %v3855, %v4023
    %v4025 = vpop.f32.mrf.mxu0
    %v4026 = vadd.f32 %v3857, %v4025
    %4027 = vmatmul.bf16.gmra.mxu0 %v1805
    %v4028 = vpop.f32.mrf.mxu0
    %v4029 = vadd.f32 %v3860, %v4028
    %v4030 = vpop.f32.mrf.mxu0
    %v4031 = vadd.f32 %v3862, %v4030
    %4032 = vmatmul.bf16.gmra.mxu0 %v1817
    %v4033 = vpop.f32.mrf.mxu0
    %v4034 = vadd.f32 %v3865, %v4033
    %v4035 = vpop.f32.mrf.mxu0
    %v4036 = vadd.f32 %v3867, %v4035
    %4037 = vmatmul.bf16.gmra.mxu0 %v1829
    %v4038 = vpop.f32.mrf.mxu0
    %v4039 = vadd.f32 %v3870, %v4038
    %v4040 = vpop.f32.mrf.mxu0
    %v4041 = vadd.f32 %v3872, %v4040
    %4042 = vmatmul.bf16.gmra.mxu0 %v1841
    %v4043 = vpop.f32.mrf.mxu0
    %v4044 = vadd.f32 %v3875, %v4043
    %v4045 = vpop.f32.mrf.mxu0
    %v4046 = vadd.f32 %v3877, %v4045
    %4047 = vmatmul.bf16.gmra.mxu0 %v1853
    %v4048 = vpop.f32.mrf.mxu0
    %v4049 = vadd.f32 %v3880, %v4048
    %v4050 = vpop.f32.mrf.mxu0
    %v4051 = vadd.f32 %v3882, %v4050
    %4052 = vmatmul.bf16.gmra.mxu0 %v1865
    %v4053 = vpop.f32.mrf.mxu0
    %v4054 = vadd.f32 %v3885, %v4053
    %v4055 = vpop.f32.mrf.mxu0
    %v4056 = vadd.f32 %v3887, %v4055
    %4057 = vmatmul.bf16.gmra.mxu0 %v1877
    %v4058 = vpop.f32.mrf.mxu0
    %v4059 = vadd.f32 %v3890, %v4058
    %v4060 = vpop.f32.mrf.mxu0
    %v4061 = vadd.f32 %v3892, %v4060
    %4062 = vmatmul.bf16.gmra.mxu0 %v2128
    %v4063 = vpop.f32.mrf.mxu0
    %v4064 = vadd.f32 %v3895, %v4063
    %v4065 = vpop.f32.mrf.mxu0
    %v4066 = vadd.f32 %v3897, %v4065
    %4067 = vmatmul.bf16.gmra.mxu0 %v3531
    %v4068 = vpop.f32.mrf.mxu0
    %v4069 = vadd.f32 %v3900, %v4068
    %v4070 = vpop.f32.mrf.mxu0
    %v4071 = vadd.f32 %v3902, %v4070
    %4072 = vdwg.mxu0
    %4073 = vmatpush.bf16.msra.mxu0 %v3710
    %4074 = vmatpush.bf16.msra.mxu0 %v3709
    %4075 = vmatpush.bf16.msra.mxu0 %v3708
    %4076 = vmatpush.bf16.msra.mxu0 %v3707
    %4077 = vmatpush.bf16.msra.mxu0 %v3706
    %4078 = vmatpush.bf16.msra.mxu0 %v3705
    %4079 = vmatpush.bf16.msra.mxu0 %v3704
    %4080 = vmatpush.bf16.msra.mxu0 %v3703
    %4081 = vmatmul.bf16.gmra.mxu0 %v1919
    %v4082 = vpop.f32.mrf.mxu0
    %v4083 = vadd.f32 %v3914, %v4082
    %v4084 = vpop.f32.mrf.mxu0
    %v4085 = vadd.f32 %v3916, %v4084
    %4086 = vmatmul.bf16.gmra.mxu0 %v1922
    %v4087 = vpop.f32.mrf.mxu0
    %v4088 = vadd.f32 %v3919, %v4087
    %v4089 = vpop.f32.mrf.mxu0
    %v4090 = vadd.f32 %v3921, %v4089
    %4091 = vmatmul.bf16.gmra.mxu0 %v1925
    %v4092 = vpop.f32.mrf.mxu0
    %v4093 = vadd.f32 %v3924, %v4092
    %v4094 = vpop.f32.mrf.mxu0
    %v4095 = vadd.f32 %v3926, %v4094
    %4096 = vmatmul.bf16.gmra.mxu0 %v1928
    %v4097 = vpop.f32.mrf.mxu0
    %v4098 = vadd.f32 %v3929, %v4097
    %v4099 = vpop.f32.mrf.mxu0
    %v4100 = vadd.f32 %v3931, %v4099
    %4101 = vmatmul.bf16.gmra.mxu0 %v1931
    %v4102 = vpop.f32.mrf.mxu0
    %v4103 = vadd.f32 %v3934, %v4102
    %v4104 = vpop.f32.mrf.mxu0
    %v4105 = vadd.f32 %v3936, %v4104
    %4106 = vmatmul.bf16.gmra.mxu0 %v1934
    %v4107 = vpop.f32.mrf.mxu0
    %v4108 = vadd.f32 %v3939, %v4107
    %v4109 = vpop.f32.mrf.mxu0
    %v4110 = vadd.f32 %v3941, %v4109
    %4111 = vmatmul.bf16.gmra.mxu0 %v1937
    %v4112 = vpop.f32.mrf.mxu0
    %v4113 = vadd.f32 %v3944, %v4112
    %v4114 = vpop.f32.mrf.mxu0
    %v4115 = vadd.f32 %v3946, %v4114
    %4116 = vmatmul.bf16.gmra.mxu0 %v1940
    %v4117 = vpop.f32.mrf.mxu0
    %v4118 = vadd.f32 %v3949, %v4117
    %v4119 = vpop.f32.mrf.mxu0
    %v4120 = vadd.f32 %v3951, %v4119
    %4121 = vmatmul.bf16.gmra.mxu0 %v1943
    %v4122 = vpop.f32.mrf.mxu0
    %v4123 = vadd.f32 %v3954, %v4122
    %v4124 = vpop.f32.mrf.mxu0
    %v4125 = vadd.f32 %v3956, %v4124
    %4126 = vmatmul.bf16.gmra.mxu0 %v1946
    %v4127 = vpop.f32.mrf.mxu0
    %v4128 = vadd.f32 %v3959, %v4127
    %v4129 = vpop.f32.mrf.mxu0
    %v4130 = vadd.f32 %v3961, %v4129
    %4131 = vmatmul.bf16.gmra.mxu0 %v1949
    %v4132 = vpop.f32.mrf.mxu0
    %v4133 = vadd.f32 %v3964, %v4132
    %v4134 = vpop.f32.mrf.mxu0
    %v4135 = vadd.f32 %v3966, %v4134
    %4136 = vmatmul.bf16.gmra.mxu0 %v1952
    %v4137 = vpop.f32.mrf.mxu0
    %v4138 = vadd.f32 %v3969, %v4137
    %v4139 = vpop.f32.mrf.mxu0
    %v4140 = vadd.f32 %v3971, %v4139
    %4141 = vmatmul.bf16.gmra.mxu0 %v1955
    %v4142 = vpop.f32.mrf.mxu0
    %v4143 = vadd.f32 %v3974, %v4142
    %v4144 = vpop.f32.mrf.mxu0
    %v4145 = vadd.f32 %v3976, %v4144
    %4146 = vmatmul.bf16.gmra.mxu0 %v1958
    %v4147 = vpop.f32.mrf.mxu0
    %v4148 = vadd.f32 %v3979, %v4147
    %v4149 = vpop.f32.mrf.mxu0
    %v4150 = vadd.f32 %v3981, %v4149
    %4151 = vmatmul.bf16.gmra.mxu0 %v2133
    %v4152 = vpop.f32.mrf.mxu0
    %v4153 = vadd.f32 %v3984, %v4152
    %v4154 = vpop.f32.mrf.mxu0
    %v4155 = vadd.f32 %v3986, %v4154
    %4156 = vmatmul.bf16.gmra.mxu0 %v3536
    %v4157 = vpop.f32.mrf.mxu0
    %v4158 = vadd.f32 %v3989, %v4157
    %v4159 = vpop.f32.mrf.mxu0
    %v4160 = vadd.f32 %v3991, %v4159
    %4161 = vmatmul.bf16.gmra.mxu0 %v1967
    %v4162 = vpop.f32.mrf.mxu0
    %v4163 = vadd.f32 %v3994, %v4162
    %v4164 = vpop.f32.mrf.mxu0
    %v4165 = vadd.f32 %v3996, %v4164
    %4166 = vmatmul.bf16.gmra.mxu0 %v1970
    %v4167 = vpop.f32.mrf.mxu0
    %v4168 = vadd.f32 %v3999, %v4167
    %v4169 = vpop.f32.mrf.mxu0
    %v4170 = vadd.f32 %v4001, %v4169
    %4171 = vmatmul.bf16.gmra.mxu0 %v1973
    %v4172 = vpop.f32.mrf.mxu0
    %v4173 = vadd.f32 %v4004, %v4172
    %v4174 = vpop.f32.mrf.mxu0
    %v4175 = vadd.f32 %v4006, %v4174
    %4176 = vmatmul.bf16.gmra.mxu0 %v1976
    %v4177 = vpop.f32.mrf.mxu0
    %v4178 = vadd.f32 %v4009, %v4177
    %v4179 = vpop.f32.mrf.mxu0
    %v4180 = vadd.f32 %v4011, %v4179
    %4181 = vmatmul.bf16.gmra.mxu0 %v1979
    %v4182 = vpop.f32.mrf.mxu0
    %v4183 = vadd.f32 %v4014, %v4182
    %v4184 = vpop.f32.mrf.mxu0
    %v4185 = vadd.f32 %v4016, %v4184
    %4186 = vmatmul.bf16.gmra.mxu0 %v1982
    %v4187 = vpop.f32.mrf.mxu0
    %v4188 = vadd.f32 %v4019, %v4187
    %v4189 = vpop.f32.mrf.mxu0
    %v4190 = vadd.f32 %v4021, %v4189
    %4191 = vmatmul.bf16.gmra.mxu0 %v1985
    %v4192 = vpop.f32.mrf.mxu0
    %v4193 = vadd.f32 %v4024, %v4192
    %v4194 = vpop.f32.mrf.mxu0
    %v4195 = vadd.f32 %v4026, %v4194
    %4196 = vmatmul.bf16.gmra.mxu0 %v1988
    %v4197 = vpop.f32.mrf.mxu0
    %v4198 = vadd.f32 %v4029, %v4197
    %v4199 = vpop.f32.mrf.mxu0
    %v4200 = vadd.f32 %v4031, %v4199
    %4201 = vmatmul.bf16.gmra.mxu0 %v1991
    %v4202 = vpop.f32.mrf.mxu0
    %v4203 = vadd.f32 %v4034, %v4202
    %v4204 = vpop.f32.mrf.mxu0
    %v4205 = vadd.f32 %v4036, %v4204
    %4206 = vmatmul.bf16.gmra.mxu0 %v1994
    %v4207 = vpop.f32.mrf.mxu0
    %v4208 = vadd.f32 %v4039, %v4207
    %v4209 = vpop.f32.mrf.mxu0
    %v4210 = vadd.f32 %v4041, %v4209
    %4211 = vmatmul.bf16.gmra.mxu0 %v1997
    %v4212 = vpop.f32.mrf.mxu0
    %v4213 = vadd.f32 %v4044, %v4212
    %v4214 = vpop.f32.mrf.mxu0
    %v4215 = vadd.f32 %v4046, %v4214
    %4216 = vmatmul.bf16.gmra.mxu0 %v2000
    %v4217 = vpop.f32.mrf.mxu0
    %v4218 = vadd.f32 %v4049, %v4217
    %v4219 = vpop.f32.mrf.mxu0
    %v4220 = vadd.f32 %v4051, %v4219
    %4221 = vmatmul.bf16.gmra.mxu0 %v2003
    %v4222 = vpop.f32.mrf.mxu0
    %v4223 = vadd.f32 %v4054, %v4222
    %v4224 = vpop.f32.mrf.mxu0
    %v4225 = vadd.f32 %v4056, %v4224
    %4226 = vmatmul.bf16.gmra.mxu0 %v2006
    %v4227 = vpop.f32.mrf.mxu0
    %v4228 = vadd.f32 %v4059, %v4227
    %v4229 = vpop.f32.mrf.mxu0
    %v4230 = vadd.f32 %v4061, %v4229
    %4231 = vmatmul.bf16.gmra.mxu0 %v2136
    %v4232 = vpop.f32.mrf.mxu0
    %v4233 = vadd.f32 %v4064, %v4232
    %v4234 = vpop.f32.mrf.mxu0
    %v4235 = vadd.f32 %v4066, %v4234
    %4236 = vmatmul.bf16.gmra.mxu0 %v3539
    %v4237 = vpop.f32.mrf.mxu0
    %v4238 = vadd.f32 %v4069, %v4237
    %v4239 = vpop.f32.mrf.mxu0
    %v4240 = vadd.f32 %v4071, %v4239
    %4241 = vdwg.mxu0
    %v4242 = vadd.f32 %v3331, %v4083
    %v4243 = vadd.f32 %v3333, %v4085
    %v4244 = vadd.f32 %v3336, %v4088
    %v4245 = vadd.f32 %v3338, %v4090
    %v4246 = vadd.f32 %v3341, %v4093
    %v4247 = vadd.f32 %v3343, %v4095
    %v4248 = vadd.f32 %v3346, %v4098
    %v4249 = vadd.f32 %v3348, %v4100
    %v4250 = vadd.f32 %v3351, %v4103
    %v4251 = vadd.f32 %v3353, %v4105
    %v4252 = vadd.f32 %v3356, %v4108
    %v4253 = vadd.f32 %v3358, %v4110
    %v4254 = vadd.f32 %v3361, %v4113
    %v4255 = vadd.f32 %v3363, %v4115
    %v4256 = vadd.f32 %v3366, %v4118
    %v4257 = vadd.f32 %v3368, %v4120
    %v4258 = vadd.f32 %v3371, %v4123
    %v4259 = vadd.f32 %v3373, %v4125
    %v4260 = vadd.f32 %v3376, %v4128
    %v4261 = vadd.f32 %v3378, %v4130
    %v4262 = vadd.f32 %v3381, %v4133
    %v4263 = vadd.f32 %v3383, %v4135
    %v4264 = vadd.f32 %v3386, %v4138
    %v4265 = vadd.f32 %v3388, %v4140
    %v4266 = vadd.f32 %v3391, %v4143
    %v4267 = vadd.f32 %v3393, %v4145
    %v4268 = vadd.f32 %v3396, %v4148
    %v4269 = vadd.f32 %v3398, %v4150
    %v4270 = vadd.f32 %v3401, %v4153
    %v4271 = vadd.f32 %v3403, %v4155
    %v4272 = vadd.f32 %v3406, %v4158
    %v4273 = vadd.f32 %v3408, %v4160
    %v4274 = vadd.f32 %v3411, %v4163
    %v4275 = vadd.f32 %v3413, %v4165
    %v4276 = vadd.f32 %v3416, %v4168
    %v4277 = vadd.f32 %v3418, %v4170
    %v4278 = vadd.f32 %v3421, %v4173
    %v4279 = vadd.f32 %v3423, %v4175
    %v4280 = vadd.f32 %v3426, %v4178
    %v4281 = vadd.f32 %v3428, %v4180
    %v4282 = vadd.f32 %v3431, %v4183
    %v4283 = vadd.f32 %v3433, %v4185
    %v4284 = vadd.f32 %v3436, %v4188
    %v4285 = vadd.f32 %v3438, %v4190
    %v4286 = vadd.f32 %v3441, %v4193
    %v4287 = vadd.f32 %v3443, %v4195
    %v4288 = vadd.f32 %v3446, %v4198
    %v4289 = vadd.f32 %v3448, %v4200
    %v4290 = vadd.f32 %v3451, %v4203
    %v4291 = vadd.f32 %v3453, %v4205
    %v4292 = vadd.f32 %v3456, %v4208
    %v4293 = vadd.f32 %v3458, %v4210
    %v4294 = vadd.f32 %v3461, %v4213
    %v4295 = vadd.f32 %v3463, %v4215
    %v4296 = vadd.f32 %v3466, %v4218
    %v4297 = vadd.f32 %v3468, %v4220
    %v4298 = vadd.f32 %v3471, %v4223
    %v4299 = vadd.f32 %v3473, %v4225
    %v4300 = vadd.f32 %v3476, %v4228
    %v4301 = vadd.f32 %v3478, %v4230
    %v4302 = vadd.f32 %v3481, %v4233
    %v4303 = vadd.f32 %v3483, %v4235
    %v4304 = vadd.f32 %v3486, %v4238
    %v4305 = vadd.f32 %v3488, %v4240
    %v4306 = vpack.c.bf16 %v4242, %v4242
    %v4307 = vpack.c.bf16 %v4243, %v4243
    %v4308 = vpack.c.bf16 %v4244, %v4244
    %v4309 = vpack.c.bf16 %v4245, %v4245
    %v4310 = vpack.c.bf16 %v4246, %v4246
    %v4311 = vpack.c.bf16 %v4247, %v4247
    %v4312 = vpack.c.bf16 %v4248, %v4248
    %v4313 = vpack.c.bf16 %v4249, %v4249
    %v4314 = vpack.c.bf16 %v4250, %v4250
    %v4315 = vpack.c.bf16 %v4251, %v4251
    %v4316 = vpack.c.bf16 %v4252, %v4252
    %v4317 = vpack.c.bf16 %v4253, %v4253
    %v4318 = vpack.c.bf16 %v4254, %v4254
    %v4319 = vpack.c.bf16 %v4255, %v4255
    %v4320 = vpack.c.bf16 %v4256, %v4256
    %v4321 = vpack.c.bf16 %v4257, %v4257
    %v4322 = vpack.c.bf16 %v4258, %v4258
    %v4323 = vpack.c.bf16 %v4259, %v4259
    %v4324 = vpack.c.bf16 %v4260, %v4260
    %v4325 = vpack.c.bf16 %v4261, %v4261
    %v4326 = vpack.c.bf16 %v4262, %v4262
    %v4327 = vpack.c.bf16 %v4263, %v4263
    %v4328 = vpack.c.bf16 %v4264, %v4264
    %v4329 = vpack.c.bf16 %v4265, %v4265
    %v4330 = vpack.c.bf16 %v4266, %v4266
    %v4331 = vpack.c.bf16 %v4267, %v4267
    %v4332 = vpack.c.bf16 %v4268, %v4268
    %v4333 = vpack.c.bf16 %v4269, %v4269
    %v4334 = vpack.c.bf16 %v4270, %v4270
    %v4335 = vpack.c.bf16 %v4271, %v4271
    %v4336 = vpack.c.bf16 %v4272, %v4272
    %v4337 = vpack.c.bf16 %v4273, %v4273
    %v4338 = vpack.c.bf16 %v4274, %v4274
    %v4339 = vpack.c.bf16 %v4275, %v4275
    %v4340 = vpack.c.bf16 %v4276, %v4276
    %v4341 = vpack.c.bf16 %v4277, %v4277
    %v4342 = vpack.c.bf16 %v4278, %v4278
    %v4343 = vpack.c.bf16 %v4279, %v4279
    %v4344 = vpack.c.bf16 %v4280, %v4280
    %v4345 = vpack.c.bf16 %v4281, %v4281
    %v4346 = vpack.c.bf16 %v4282, %v4282
    %v4347 = vpack.c.bf16 %v4283, %v4283
    %v4348 = vpack.c.bf16 %v4284, %v4284
    %v4349 = vpack.c.bf16 %v4285, %v4285
    %v4350 = vpack.c.bf16 %v4286, %v4286
    %v4351 = vpack.c.bf16 %v4287, %v4287
    %v4352 = vpack.c.bf16 %v4288, %v4288
    %v4353 = vpack.c.bf16 %v4289, %v4289
    %v4354 = vpack.c.bf16 %v4290, %v4290
    %v4355 = vpack.c.bf16 %v4291, %v4291
    %v4356 = vpack.c.bf16 %v4292, %v4292
    %v4357 = vpack.c.bf16 %v4293, %v4293
    %v4358 = vpack.c.bf16 %v4294, %v4294
    %v4359 = vpack.c.bf16 %v4295, %v4295
    %v4360 = vpack.c.bf16 %v4296, %v4296
    %v4361 = vpack.c.bf16 %v4297, %v4297
    %v4362 = vpack.c.bf16 %v4298, %v4298
    %v4363 = vpack.c.bf16 %v4299, %v4299
    %v4364 = vpack.c.bf16 %v4300, %v4300
    %v4365 = vpack.c.bf16 %v4301, %v4301
    %v4366 = vpack.c.bf16 %v4302, %v4302
    %v4367 = vpack.c.bf16 %v4303, %v4303
    %v4368 = vpack.c.bf16 %v4304, %v4304
    %v4369 = vpack.c.bf16 %v4305, %v4305
    %4370 = vst [vmem:[#allocation8] sm:$0xf] %v4306
    %4371 = vst [vmem:[#allocation8 + $0x4] sm:$0xf] %v4307
    %4372 = vst [vmem:[#allocation8 + $0x8] sm:$0xf] %v4308
    %4373 = vst [vmem:[#allocation8 + $0xc] sm:$0xf] %v4309
    %4374 = vst [vmem:[#allocation8 + $0x10] sm:$0xf] %v4310
    %4375 = vst [vmem:[#allocation8 + $0x14] sm:$0xf] %v4311
    %4376 = vst [vmem:[#allocation8 + $0x18] sm:$0xf] %v4312
    %4377 = vst [vmem:[#allocation8 + $0x1c] sm:$0xf] %v4313
    %4378 = vst [vmem:[#allocation8 + $0x20] sm:$0xf] %v4314
    %4379 = vst [vmem:[#allocation8 + $0x24] sm:$0xf] %v4315
    %4380 = vst [vmem:[#allocation8 + $0x28] sm:$0xf] %v4316
    %4381 = vst [vmem:[#allocation8 + $0x2c] sm:$0xf] %v4317
    %4382 = vst [vmem:[#allocation8 + $0x30] sm:$0xf] %v4318
    %4383 = vst [vmem:[#allocation8 + $0x34] sm:$0xf] %v4319
    %4384 = vst [vmem:[#allocation8 + $0x38] sm:$0xf] %v4320
    %4385 = vst [vmem:[#allocation8 + $0x3c] sm:$0xf] %v4321
    %4386 = vst [vmem:[#allocation8 + $0x40] sm:$0xf] %v4322
    %4387 = vst [vmem:[#allocation8 + $0x44] sm:$0xf] %v4323
    %4388 = vst [vmem:[#allocation8 + $0x48] sm:$0xf] %v4324
    %4389 = vst [vmem:[#allocation8 + $0x4c] sm:$0xf] %v4325
    %4390 = vst [vmem:[#allocation8 + $0x50] sm:$0xf] %v4326
    %4391 = vst [vmem:[#allocation8 + $0x54] sm:$0xf] %v4327
    %4392 = vst [vmem:[#allocation8 + $0x58] sm:$0xf] %v4328
    %4393 = vst [vmem:[#allocation8 + $0x5c] sm:$0xf] %v4329
    %4394 = vst [vmem:[#allocation8 + $0x60] sm:$0xf] %v4330
    %4395 = vst [vmem:[#allocation8 + $0x64] sm:$0xf] %v4331
    %4396 = vst [vmem:[#allocation8 + $0x68] sm:$0xf] %v4332
    %4397 = vst [vmem:[#allocation8 + $0x6c] sm:$0xf] %v4333
    %4398 = vst [vmem:[#allocation8 + $0x70] sm:$0xf] %v4334
    %4399 = vst [vmem:[#allocation8 + $0x74] sm:$0xf] %v4335
    %4400 = vst [vmem:[#allocation8 + $0x78] sm:$0xf] %v4336
    %4401 = vst [vmem:[#allocation8 + $0x7c] sm:$0xf] %v4337
    %4402 = vst [vmem:[#allocation8 + $0x80] sm:$0xf] %v4338
    %4403 = vst [vmem:[#allocation8 + $0x84] sm:$0xf] %v4339
    %4404 = vst [vmem:[#allocation8 + $0x88] sm:$0xf] %v4340
    %4405 = vst [vmem:[#allocation8 + $0x8c] sm:$0xf] %v4341
    %4406 = vst [vmem:[#allocation8 + $0x90] sm:$0xf] %v4342
    %4407 = vst [vmem:[#allocation8 + $0x94] sm:$0xf] %v4343
    %4408 = vst [vmem:[#allocation8 + $0x98] sm:$0xf] %v4344
    %4409 = vst [vmem:[#allocation8 + $0x9c] sm:$0xf] %v4345
    %4410 = vst [vmem:[#allocation8 + $0xa0] sm:$0xf] %v4346
    %4411 = vst [vmem:[#allocation8 + $0xa4] sm:$0xf] %v4347
    %4412 = vst [vmem:[#allocation8 + $0xa8] sm:$0xf] %v4348
    %4413 = vst [vmem:[#allocation8 + $0xac] sm:$0xf] %v4349
    %4414 = vst [vmem:[#allocation8 + $0xb0] sm:$0xf] %v4350
    %4415 = vst [vmem:[#allocation8 + $0xb4] sm:$0xf] %v4351
    %4416 = vst [vmem:[#allocation8 + $0xb8] sm:$0xf] %v4352
    %4417 = vst [vmem:[#allocation8 + $0xbc] sm:$0xf] %v4353
    %4418 = vst [vmem:[#allocation8 + $0xc0] sm:$0xf] %v4354
    %4419 = vst [vmem:[#allocation8 + $0xc4] sm:$0xf] %v4355
    %4420 = vst [vmem:[#allocation8 + $0xc8] sm:$0xf] %v4356
    %4421 = vst [vmem:[#allocation8 + $0xcc] sm:$0xf] %v4357
    %4422 = vst [vmem:[#allocation8 + $0xd0] sm:$0xf] %v4358
    %4423 = vst [vmem:[#allocation8 + $0xd4] sm:$0xf] %v4359
    %4424 = vst [vmem:[#allocation8 + $0xd8] sm:$0xf] %v4360
    %4425 = vst [vmem:[#allocation8 + $0xdc] sm:$0xf] %v4361
    %4426 = vst [vmem:[#allocation8 + $0xe0] sm:$0xf] %v4362
    %4427 = vst [vmem:[#allocation8 + $0xe4] sm:$0xf] %v4363
    %4428 = vst [vmem:[#allocation8 + $0xe8] sm:$0xf] %v4364
    %4429 = vst [vmem:[#allocation8 + $0xec] sm:$0xf] %v4365
    %4430 = vst [vmem:[#allocation8 + $0xf0] sm:$0xf] %v4366
    %4431 = vst [vmem:[#allocation8 + $0xf4] sm:$0xf] %v4367
    %4432 = vst [vmem:[#allocation8 + $0xf8] sm:$0xf] %v4368
    %4433 = vst [vmem:[#allocation8 + $0xfc] sm:$0xf] %v4369
    %v4434 = vadd.f32 %v4242, %v4243
    %v4435 = vadd.f32 %v4434, %v4244
    %v4436 = vadd.f32 %v4435, %v4245
    %v4437 = vadd.f32 %v4436, %v4246
    %v4438 = vadd.f32 %v4437, %v4247
    %v4439 = vadd.f32 %v4438, %v4248
    %v4440 = vadd.f32 %v4439, %v4249
    %v4441 = vadd.f32 %v4440, %v4250
    %v4442 = vadd.f32 %v4441, %v4251
    %v4443 = vadd.f32 %v4442, %v4252
    %v4444 = vadd.f32 %v4443, %v4253
    %v4445 = vadd.f32 %v4444, %v4254
    %v4446 = vadd.f32 %v4445, %v4255
    %v4447 = vadd.f32 %v4446, %v4256
    %v4448 = vadd.f32 %v4447, %v4257
    %v4449 = vadd.f32 %v4448, %v4258
    %v4450 = vadd.f32 %v4449, %v4259
    %v4451 = vadd.f32 %v4450, %v4260
    %v4452 = vadd.f32 %v4451, %v4261
    %v4453 = vadd.f32 %v4452, %v4262
    %v4454 = vadd.f32 %v4453, %v4263
    %v4455 = vadd.f32 %v4454, %v4264
    %v4456 = vadd.f32 %v4455, %v4265
    %v4457 = vadd.f32 %v4456, %v4266
    %v4458 = vadd.f32 %v4457, %v4267
    %v4459 = vadd.f32 %v4458, %v4268
    %v4460 = vadd.f32 %v4459, %v4269
    %v4461 = vadd.f32 %v4460, %v4270
    %v4462 = vadd.f32 %v4461, %v4271
    %v4463 = vadd.f32 %v4462, %v4272
    %v4464 = vadd.f32 %v4463, %v4273
    %v4465 = vadd.f32 %v4464, %v4274
    %v4466 = vadd.f32 %v4465, %v4275
    %v4467 = vadd.f32 %v4466, %v4276
    %v4468 = vadd.f32 %v4467, %v4277
    %v4469 = vadd.f32 %v4468, %v4278
    %v4470 = vadd.f32 %v4469, %v4279
    %v4471 = vadd.f32 %v4470, %v4280
    %v4472 = vadd.f32 %v4471, %v4281
    %v4473 = vadd.f32 %v4472, %v4282
    %v4474 = vadd.f32 %v4473, %v4283
    %v4475 = vadd.f32 %v4474, %v4284
    %v4476 = vadd.f32 %v4475, %v4285
    %v4477 = vadd.f32 %v4476, %v4286
    %v4478 = vadd.f32 %v4477, %v4287
    %v4479 = vadd.f32 %v4478, %v4288
    %v4480 = vadd.f32 %v4479, %v4289
    %v4481 = vadd.f32 %v4480, %v4290
    %v4482 = vadd.f32 %v4481, %v4291
    %v4483 = vadd.f32 %v4482, %v4292
    %v4484 = vadd.f32 %v4483, %v4293
    %v4485 = vadd.f32 %v4484, %v4294
    %v4486 = vadd.f32 %v4485, %v4295
    %v4487 = vadd.f32 %v4486, %v4296
    %v4488 = vadd.f32 %v4487, %v4297
    %v4489 = vadd.f32 %v4488, %v4298
    %v4490 = vadd.f32 %v4489, %v4299
    %v4491 = vadd.f32 %v4490, %v4300
    %v4492 = vadd.f32 %v4491, %v4301
    %v4493 = vadd.f32 %v4492, %v4302
    %v4494 = vadd.f32 %v4493, %v4303
    %v4495 = vadd.f32 %v4494, %v4304
    %v4496 = vadd.f32 %v4495, %v4305
    %v4497 = vrot.slane %v4496, 4
    %v4498 = vadd.f32 %v4496, %v4497
    %v4499 = vrot.slane %v4498, 2
    %v4500 = vadd.f32 %v4498, %v4499
    %v4501 = vrot.slane %v4500, 1
    %v4502 = vadd.f32 %v4500, %v4501
    %v4503 = vmul.f32 %v4242, %v4242
    %v4504 = vmul.f32 %v4243, %v4243
    %v4505 = vmul.f32 %v4244, %v4244
    %v4506 = vmul.f32 %v4245, %v4245
    %v4507 = vmul.f32 %v4246, %v4246
    %v4508 = vmul.f32 %v4247, %v4247
    %v4509 = vmul.f32 %v4248, %v4248
    %v4510 = vmul.f32 %v4249, %v4249
    %v4511 = vmul.f32 %v4250, %v4250
    %v4512 = vmul.f32 %v4251, %v4251
    %v4513 = vmul.f32 %v4252, %v4252
    %v4514 = vmul.f32 %v4253, %v4253
    %v4515 = vmul.f32 %v4254, %v4254
    %v4516 = vmul.f32 %v4255, %v4255
    %v4517 = vmul.f32 %v4256, %v4256
    %v4518 = vmul.f32 %v4257, %v4257
    %v4519 = vmul.f32 %v4258, %v4258
    %v4520 = vmul.f32 %v4259, %v4259
    %v4521 = vmul.f32 %v4260, %v4260
    %v4522 = vmul.f32 %v4261, %v4261
    %v4523 = vmul.f32 %v4262, %v4262
    %v4524 = vmul.f32 %v4263, %v4263
    %v4525 = vmul.f32 %v4264, %v4264
    %v4526 = vmul.f32 %v4265, %v4265
    %v4527 = vmul.f32 %v4266, %v4266
    %v4528 = vmul.f32 %v4267, %v4267
    %v4529 = vmul.f32 %v4268, %v4268
    %v4530 = vmul.f32 %v4269, %v4269
    %v4531 = vmul.f32 %v4270, %v4270
    %v4532 = vmul.f32 %v4271, %v4271
    %v4533 = vmul.f32 %v4272, %v4272
    %v4534 = vmul.f32 %v4273, %v4273
    %v4535 = vmul.f32 %v4274, %v4274
    %v4536 = vmul.f32 %v4275, %v4275
    %v4537 = vmul.f32 %v4276, %v4276
    %v4538 = vmul.f32 %v4277, %v4277
    %v4539 = vmul.f32 %v4278, %v4278
    %v4540 = vmul.f32 %v4279, %v4279
    %v4541 = vmul.f32 %v4280, %v4280
    %v4542 = vmul.f32 %v4281, %v4281
    %v4543 = vmul.f32 %v4282, %v4282
    %v4544 = vmul.f32 %v4283, %v4283
    %v4545 = vmul.f32 %v4284, %v4284
    %v4546 = vmul.f32 %v4285, %v4285
    %v4547 = vmul.f32 %v4286, %v4286
    %v4548 = vmul.f32 %v4287, %v4287
    %v4549 = vmul.f32 %v4288, %v4288
    %v4550 = vmul.f32 %v4289, %v4289
    %v4551 = vmul.f32 %v4290, %v4290
    %v4552 = vmul.f32 %v4291, %v4291
    %v4553 = vmul.f32 %v4292, %v4292
    %v4554 = vmul.f32 %v4293, %v4293
    %v4555 = vmul.f32 %v4294, %v4294
    %v4556 = vmul.f32 %v4295, %v4295
    %v4557 = vmul.f32 %v4296, %v4296
    %v4558 = vmul.f32 %v4297, %v4297
    %v4559 = vmul.f32 %v4298, %v4298
    %v4560 = vmul.f32 %v4299, %v4299
    %v4561 = vmul.f32 %v4300, %v4300
    %v4562 = vmul.f32 %v4301, %v4301
    %v4563 = vmul.f32 %v4302, %v4302
    %v4564 = vmul.f32 %v4303, %v4303
    %v4565 = vmul.f32 %v4304, %v4304
    %v4566 = vmul.f32 %v4305, %v4305
    %v4567 = vadd.f32 %v4503, %v4504
    %v4568 = vadd.f32 %v4567, %v4505
    %v4569 = vadd.f32 %v4568, %v4506
    %v4570 = vadd.f32 %v4569, %v4507
    %v4571 = vadd.f32 %v4570, %v4508
    %v4572 = vadd.f32 %v4571, %v4509
    %v4573 = vadd.f32 %v4572, %v4510
    %v4574 = vadd.f32 %v4573, %v4511
    %v4575 = vadd.f32 %v4574, %v4512
    %v4576 = vadd.f32 %v4575, %v4513
    %v4577 = vadd.f32 %v4576, %v4514
    %v4578 = vadd.f32 %v4577, %v4515
    %v4579 = vadd.f32 %v4578, %v4516
    %v4580 = vadd.f32 %v4579, %v4517
    %v4581 = vadd.f32 %v4580, %v4518
    %v4582 = vadd.f32 %v4581, %v4519
    %v4583 = vadd.f32 %v4582, %v4520
    %v4584 = vadd.f32 %v4583, %v4521
    %v4585 = vadd.f32 %v4584, %v4522
    %v4586 = vadd.f32 %v4585, %v4523
    %v4587 = vadd.f32 %v4586, %v4524
    %v4588 = vadd.f32 %v4587, %v4525
    %v4589 = vadd.f32 %v4588, %v4526
    %v4590 = vadd.f32 %v4589, %v4527
    %v4591 = vadd.f32 %v4590, %v4528
    %v4592 = vadd.f32 %v4591, %v4529
    %v4593 = vadd.f32 %v4592, %v4530
    %v4594 = vadd.f32 %v4593, %v4531
    %v4595 = vadd.f32 %v4594, %v4532
    %v4596 = vadd.f32 %v4595, %v4533
    %v4597 = vadd.f32 %v4596, %v4534
    %v4598 = vadd.f32 %v4597, %v4535
    %v4599 = vadd.f32 %v4598, %v4536
    %v4600 = vadd.f32 %v4599, %v4537
    %v4601 = vadd.f32 %v4600, %v4538
    %v4602 = vadd.f32 %v4601, %v4539
    %v4603 = vadd.f32 %v4602, %v4540
    %v4604 = vadd.f32 %v4603, %v4541
    %v4605 = vadd.f32 %v4604, %v4542
    %v4606 = vadd.f32 %v4605, %v4543
    %v4607 = vadd.f32 %v4606, %v4544
    %v4608 = vadd.f32 %v4607, %v4545
    %v4609 = vadd.f32 %v4608, %v4546
    %v4610 = vadd.f32 %v4609, %v4547
    %v4611 = vadd.f32 %v4610, %v4548
    %v4612 = vadd.f32 %v4611, %v4549
    %v4613 = vadd.f32 %v4612, %v4550
    %v4614 = vadd.f32 %v4613, %v4551
    %v4615 = vadd.f32 %v4614, %v4552
    %v4616 = vadd.f32 %v4615, %v4553
    %v4617 = vadd.f32 %v4616, %v4554
    %v4618 = vadd.f32 %v4617, %v4555
    %v4619 = vadd.f32 %v4618, %v4556
    %v4620 = vadd.f32 %v4619, %v4557
    %v4621 = vadd.f32 %v4620, %v4558
    %v4622 = vadd.f32 %v4621, %v4559
    %v4623 = vadd.f32 %v4622, %v4560
    %v4624 = vadd.f32 %v4623, %v4561
    %v4625 = vadd.f32 %v4624, %v4562
    %v4626 = vadd.f32 %v4625, %v4563
    %v4627 = vadd.f32 %v4626, %v4564
    %v4628 = vadd.f32 %v4627, %v4565
    %v4629 = vadd.f32 %v4628, %v4566
    %v4630 = vrot.slane %v4629, 4
    %v4631 = vadd.f32 %v4629, %v4630
    %v4632 = vrot.slane %v4631, 2
    %v4633 = vadd.f32 %v4631, %v4632
    %v4634 = vrot.slane %v4633, 1
    %v4635 = vadd.f32 %v4633, %v4634
    %vm4636 = vcmask 1040384
    %v4637 = vsel %vm4636, %v4502, %v4635
    %4638 = vst [vmem:[#allocation9] sm:$0x3] %v4637
    // Predicated region
    $region18: #{tpu_custom_call.1} parent=1 // pred_check
      _
    $region19: #{tpu_custom_call.1} parent=1 // pred_check_branch
      %4640 = sbr.rel (0) target = $region21
    $region20: #{tpu_custom_call.1} parent=1 // pred_region
      %4642 = vsyncadd [#allocation5], 0
      %s4643 = sshll.u32 [#allocation8], 4
      %s4644 = int_to_ptr.vmem [resolvable:$true] %s4643
      %s4645 = sshll.u32 %s2, 4
      %s4646 = int_to_ptr.hbm [resolvable:$true] %s4645
      %4651 = dma.vmem_to_hbm [thread:$0]  %s4644, 4096, %s4646, [#allocation5], 64, 64, 4
    $region21: #{tpu_custom_call.1} parent=1 // pred_fallthru
      _
    // Predicated region
    $region22: #{tpu_custom_call.1} parent=1 // pred_check
      _
    $region23: #{tpu_custom_call.1} parent=1 // pred_check_branch
      %4653 = sbr.rel (0) target = $region25
    $region24: #{tpu_custom_call.1} parent=1 // pred_region
      %4655 = vsyncadd [#allocation10], 0
      %s4657 = sshll.u32 [#allocation9], 4
      %s4658 = int_to_ptr.vmem [resolvable:$true] %s4657
      %s4659 = sshll.u32 %s3, 4
      %s4660 = int_to_ptr.hbm [resolvable:$true] %s4659
      %4662 = dma.vmem_to_hbm [thread:$0]  %s4658, 32, %s4660, [#allocation10]
    $region25: #{tpu_custom_call.1} parent=1 // pred_fallthru
      _
    // Predicated region
    $region26: #{tpu_custom_call.1} parent=1 // pred_check
      _
    $region27: #{tpu_custom_call.1} parent=1 // pred_check_branch
      %4664 = sbr.rel (0) target = $region29
    $region28: #{tpu_custom_call.1} parent=1 // pred_region
      %4666 = dma.done [#allocation5], 4096
    $region29: #{tpu_custom_call.1} parent=1 // pred_fallthru
      _
    // Predicated region
    $region30: #{tpu_custom_call.1} parent=1 // pred_check
      _
    $region31: #{tpu_custom_call.1} parent=1 // pred_check_branch
      %4668 = sbr.rel (0) target = $region33
    $region32: #{tpu_custom_call.1} parent=1 // pred_region
      %4670 = dma.done [#allocation10], 32
    $region33: #{tpu_custom_call.1} parent=1 // pred_fallthru
      _
    %4671 = vsyncpa [#allocation4], 1
    %4672 = vsyncpa [#allocation7], 1
    %4673 = vsyncpa [#allocation5], 1
    %4674 = vsyncpa [#allocation10], 1

</llo_original>
